<compile_context>
chip_gen: v5e
topology: v5e:2x2
jax: 0.10.0
libtpu: 0.0.40
codegen_flags: <defaults>
</compile_context>

<pallas_src>
import functools

import jax
import jax.numpy as jnp
from jax.experimental import pallas as pl
from jax.experimental.pallas import tpu as pltpu

BN_EPS = 1e-5
PAD = 2  # zero lane-padding carried on each side of L inside the fused kernel


# ----------------------------- Pallas kernels -----------------------------


def _features_kernel(sx_ref, c1w_ref, c1b_ref,
                     w1_2, b1_2, w2a_2, b2a_2, w2b_2, b2b_2,
                     w3a_2, b3a_2, w3b_2, b3b_2, w4_2, b4_2,
                     w1_3, b1_3, w2a_3, b2a_3, w2b_3, b2b_3,
                     w3a_3, b3a_3, w3b_3, b3b_3, w4_3, b4_3,
                     o_ref, h1_ref, h2_ref, t_ref, *, L):
    """conv1 + inception2 + inception3 fused, one batch element per grid step.

    sx_ref : (1, 7, L) VMEM   sx[b, k, l] = x_pad[b, 0, 3*l + k]  (stride-3 taps)
    c1w    : (8, 7)           conv1 weight / std
    c1b    : (8, 1)           conv1 bias - (mean/std)*sum(w)
    w*/b*  : BN-folded inception weights (C_out, ...) / biases (C_out, 1)
    o_ref  : (1, 16, L)       inception3 output (unpadded, lane-dense)
    h1/h2/t: VMEM scratch, zero-padded by PAD on each side of L
    """

    def conv1x1(w_ref, b_ref, src):
        # src: (cin, L);  w_ref: (4, cin);  b_ref: (4, 1)  ->  (4, L)
        acc = jnp.zeros((4, L), jnp.float32) + b_ref[...]
        for c in range(src.shape[0]):
            acc = acc + w_ref[:, c:c + 1] * src[c:c + 1, :]
        return acc

    def convk(w_ref, b_ref, srcp, k, off):
        # srcp: (4, L + 2*PAD) zero-padded;  w_ref: (4, 4*k)  ->  (4, L)
        acc = jnp.zeros((4, L), jnp.float32) + b_ref[...]
        for c in range(4):
            for t in range(k):
                acc = acc + (w_ref[:, c * k + t:c * k + t + 1]
                             * srcp[c:c + 1, off + t:off + t + L])
        return acc

    def inception(xp, params, write):
        (w1, b1, w2a, b2a, w2b, b2b, w3a, b3a, w3b, b3b, w4, b4) = params
        xc = xp[:, PAD:PAD + L]
        # branch1: 1x1 ConvBlock                        -> channels [0, 4)
        write(0, jnp.maximum(conv1x1(w1, b1, xc), 0.0))
        # branch2: 1x1 -> k=3 (pad=1) ConvBlocks        -> channels [4, 8)
        t_ref[:, PAD:PAD + L] = jnp.maximum(conv1x1(w2a, b2a, xc), 0.0)
        write(4, jnp.maximum(convk(w2b, b2b, t_ref[...], 3, PAD - 1), 0.0))
        # branch3: 1x1 -> k=5 (pad=2) ConvBlocks        -> channels [8, 12)
        t_ref[:, PAD:PAD + L] = jnp.maximum(conv1x1(w3a, b3a, xc), 0.0)
        write(8, jnp.maximum(convk(w3b, b3b, t_ref[...], 5, PAD - 2), 0.0))
        # branch4: AvgPool(3,p=1)+1x1 (divisor folded into w4) -> [12, 16)
        pooled = (xp[:, PAD - 1:PAD - 1 + L] + xp[:, PAD:PAD + L]
                  + xp[:, PAD + 1:PAD + 1 + L])
        write(12, jnp.maximum(conv1x1(w4, b4, pooled), 0.0))

    # establish zero lane-pads (interiors are overwritten below)
    h1_ref[...] = jnp.zeros_like(h1_ref)
    h2_ref[...] = jnp.zeros_like(h2_ref)
    t_ref[...] = jnp.zeros_like(t_ref)

    # --- conv1 (stride-3 taps pre-gathered) + ReLU, normalize folded --------
    sx = sx_ref[0]                                        # (7, L)
    acc = jnp.zeros((8, L), jnp.float32) + c1b_ref[...]
    for k in range(7):
        acc = acc + c1w_ref[:, k:k + 1] * sx[k:k + 1, :]
    h1_ref[:, PAD:PAD + L] = jnp.maximum(acc, 0.0)

    # --- inception2: 8 -> 16 channels, zero-padded into h2 ------------------
    def write2(o, val):
        h2_ref[o:o + 4, PAD:PAD + L] = val

    inception(h1_ref[...], (w1_2, b1_2, w2a_2, b2a_2, w2b_2, b2b_2,
                            w3a_2, b3a_2, w3b_2, b3b_2, w4_2, b4_2), write2)

    # --- inception3: 16 -> 16 channels, unpadded for the flatten ------------
    def write3(o, val):
        o_ref[0, o:o + 4, :] = val

    inception(h2_ref[...], (w1_3, b1_3, w2a_3, b2a_3, w2b_3, b2b_3,
                            w3a_3, b3a_3, w3b_3, b3b_3, w4_3, b4_3), write3)


def _fc_kernel(x_ref, w1_ref, b1_ref, w2_ref, b2_ref, o_ref):
    """fc1 (MXU, bf16 operands / f32 acc) + ReLU + fc2 epilogue, fused."""
    h = jnp.dot(x_ref[...], w1_ref[...], preferred_element_type=jnp.float32)
    h = jnp.maximum(h + b1_ref[...], 0.0)
    # dropout: identity in eval mode.
    o_ref[...] = (jnp.dot(h, w2_ref[...], preferred_element_type=jnp.float32)
                  + b2_ref[...])


# ----------------------------- call wrappers -------------------------------


def features_call(strided, weights):
    """Fused conv1 + inception2 + inception3.  strided: (B, 7, L) f32."""
    B, _, L = strided.shape
    Lp = L + 2 * PAD

    def fixed(a):
        nd = a.ndim
        return pl.BlockSpec(a.shape, lambda i, _nd=nd: (0,) * _nd)

    in_specs = [pl.BlockSpec((1, 7, L), lambda i: (i, 0, 0))]
    in_specs += [fixed(w) for w in weights]

    return pl.pallas_call(
        functools.partial(_features_kernel, L=L),
        grid=(B,),
        in_specs=in_specs,
        out_specs=pl.BlockSpec((1, 16, L), lambda i: (i, 0, 0)),
        out_shape=jax.ShapeDtypeStruct((B, 16, L), jnp.float32),
        scratch_shapes=[pltpu.VMEM((8, Lp), jnp.float32),
                        pltpu.VMEM((16, Lp), jnp.float32),
                        pltpu.VMEM((4, Lp), jnp.float32)],
        compiler_params=pltpu.CompilerParams(dimension_semantics=("parallel",)),
    )(strided, *weights)


def fc_call(x_flat, fc1_w, fc1_b, fc2_w, fc2_b):
    B = x_flat.shape[0]
    H = fc1_w.shape[0]
    O = fc2_w.shape[0]
    return pl.pallas_call(
        _fc_kernel,
        out_shape=jax.ShapeDtypeStruct((B, O), jnp.float32),
    )(x_flat.astype(jnp.bfloat16),
      fc1_w.T.astype(jnp.bfloat16),                  # (D, H) bf16: MXU-native
      fc1_b.reshape(1, H).astype(jnp.float32),
      fc2_w.T.astype(jnp.float32),                   # (H, O)
      fc2_b.reshape(1, O).astype(jnp.float32))


# ------------------------------- JAX glue ----------------------------------


def _fold_bn(p):
    """Fold eval-mode BatchNorm1d into the (bias-free) conv weight/bias."""
    scale = p["gamma"] / jnp.sqrt(p["rv"] + BN_EPS)
    return p["w"] * scale[:, None, None], p["beta"] - p["rm"] * scale


def _prep_inception(p):
    w1, b1 = _fold_bn(p["b1"])
    w2a, b2a = _fold_bn(p["b2a"])
    w2b, b2b = _fold_bn(p["b2b"])
    w3a, b3a = _fold_bn(p["b3a"])
    w3b, b3b = _fold_bn(p["b3b"])
    w4, b4 = _fold_bn(p["b4"])
    col = lambda b: b.reshape(-1, 1)
    return (w1[:, :, 0], col(b1),
            w2a[:, :, 0], col(b2a), w2b.reshape(4, -1), col(b2b),
            w3a[:, :, 0], col(b3a), w3b.reshape(4, -1), col(b3b),
            w4[:, :, 0] / 3.0, col(b4))   # /3 folds the AvgPool(k=3) divisor


def deepspectra_forward(params, x, *, mean, std):
    """x: (B, 1, input_dim) -> (B, out_dims). Eval-mode forward."""
    B, _, L_in = x.shape
    k, stride, pad = 7, 3, 3
    L = (L_in + 2 * pad - k) // stride + 1

    # Fold normalize into conv1: pad raw x with `mean` (so padded taps are 0
    # after (x-mean)/std), scale weights by 1/std and correct the bias.
    w1 = params["conv1_w"][:, 0, :] / std                                # (8, 7)
    b1 = (params["conv1_b"]
          - (mean / std) * jnp.sum(params["conv1_w"], axis=(1, 2)))      # (8,)
    xp = jnp.pad(x, ((0, 0), (0, 0), (pad, pad)), constant_values=mean)
    # stride-3 tap views: strided[b, t, l] = xp[b, 0, 3*l + t]  (tiny glue op)
    strided = jnp.stack([xp[:, 0, t:t + stride * L:stride] for t in range(k)],
                        axis=1)                                          # (B,7,L)

    weights = (w1, b1.reshape(-1, 1),
               *_prep_inception(params["inc2"]),
               *_prep_inception(params["inc3"]))
    feats = features_call(strided, weights)                              # (B,16,L)
    flat = feats.reshape(B, -1)                                          # C-major flatten
    return fc_call(flat, params["fc1_w"], params["fc1_b"],
                   params["fc2_w"], params["fc2_b"])


# --------------------------- pure-JAX reference -----------------------------


def reference_forward(params, x, *, mean, std):
    """Plain XLA reference mirroring the PyTorch module in eval mode."""
    P = jax.lax.Precision.HIGHEST

    def conv1d(h, w, b, stride, padding):
        y = jax.lax.conv_general_dilated(
            h, w, window_strides=(stride,), padding=[(padding, padding)],
            dimension_numbers=("NCH", "OIH", "NCH"), precision=P)
        return y if b is None else y + b[None, :, None]

    def conv_block(h, p, padding):
        y = conv1d(h, p["w"], None, 1, padding)
        s = p["gamma"] / jnp.sqrt(p["rv"] + BN_EPS)
        y = y * s[None, :, None] + (p["beta"] - p["rm"] * s)[None, :, None]
        return jnp.maximum(y, 0.0)

    def avgpool3(h):
        L = h.shape[-1]
        hp = jnp.pad(h, ((0, 0), (0, 0), (1, 1)))
        return (hp[:, :, 0:L] + hp[:, :, 1:L + 1] + hp[:, :, 2:L + 2]) / 3.0

    def inception(h, p):
        o1 = conv_block(h, p["b1"], 0)
        o2 = conv_block(conv_block(h, p["b2a"], 0), p["b2b"], 1)
        o3 = conv_block(conv_block(h, p["b3a"], 0), p["b3b"], 2)
        o4 = conv_block(avgpool3(h), p["b4"], 0)
        return jnp.concatenate([o1, o2, o3, o4], axis=1)

    h = (x - mean) / std
    h = jnp.maximum(conv1d(h, params["conv1_w"], params["conv1_b"], 3, 3), 0.0)
    h = inception(h, params["inc2"])
    h = inception(h, params["inc3"])
    flat = h.reshape(h.shape[0], -1)
    hh = jnp.dot(flat.astype(jnp.bfloat16), params["fc1_w"].T.astype(jnp.bfloat16),
                 preferred_element_type=jnp.float32) + params["fc1_b"]
    hh = jnp.maximum(hh, 0.0)
    return jnp.dot(hh, params["fc2_w"].T, precision=P) + params["fc2_b"]


# ---------------------------- parameter init --------------------------------


def init_params(key, input_dim, out_dims=1):
    kernel_size, stride, padding = 7, 3, 3
    flat_dim = (input_dim + 2 * padding - kernel_size) // stride + 1
    keys = iter(jax.random.split(key, 128))

    def nrm(shape, scale=0.1):
        return scale * jax.random.normal(next(keys), shape, jnp.float32)

    def conv_block_params(in_c, out_c, k):
        return {
            "w": nrm((out_c, in_c, k)),
            # non-trivial BN stats so the BN fold is actually exercised
            "gamma": 1.0 + nrm((out_c,)),
            "beta": nrm((out_c,)),
            "rm": nrm((out_c,)),
            "rv": 0.5 + jax.random.uniform(next(keys), (out_c,), jnp.float32),
        }

    def inception_params(in_c, out_c=4):
        return {
            "b1": conv_block_params(in_c, out_c, 1),
            "b2a": conv_block_params(in_c, out_c, 1),
            "b2b": conv_block_params(out_c, out_c, 3),
            "b3a": conv_block_params(in_c, out_c, 1),
            "b3b": conv_block_params(out_c, out_c, 5),
            "b4": conv_block_params(in_c, out_c, 1),
        }

    return {
        "conv1_w": nrm((8, 1, 7)),
        "conv1_b": nrm((8,)),
        "inc2": inception_params(8),
        "inc3": inception_params(16),
        "fc1_w": nrm((64, 16 * flat_dim)),
        "fc1_b": nrm((64,)),
        "fc2_w": nrm((out_dims, 64)),
        "fc2_b": nrm((out_dims,)),
    }


# --------------------------------- main -------------------------------------

if __name__ == "__main__":
    key = jax.random.PRNGKey(0)
    kp, kx = jax.random.split(key)

    input_dim = 382          # -> flat_dim = 128: lane-dense L axis
    batch = 2
    mean, std = 0.5, 2.0     # scalar mean/std as in the module __init__
    out_dims = 1

    params = init_params(kp, input_dim, out_dims=out_dims)
    x = jax.random.normal(kx, (batch, 1, input_dim), jnp.float32)

    fwd = jax.jit(functools.partial(deepspectra_forward, mean=mean, std=std))
    out = fwd(params, x)
    jax.block_until_ready(out)
    assert out.shape == (batch, out_dims)

    ref = jax.jit(functools.partial(reference_forward, mean=mean, std=std))(params, x)
    jax.block_until_ready(ref)
    max_diff = float(jnp.max(jnp.abs(out - ref)))
    assert jnp.allclose(out, ref, rtol=1e-2, atol=1e-3), (max_diff, out, ref)

    print("KERNEL_OK")
</pallas_src>

<mosaic_0001>
module attributes {stable_mosaic.version = 11 : i64} {
  func.func @_features_kernel(%arg0: i32, %arg1: memref<1x7x128xf32, #tpu.memory_space<vmem>>, %arg2: memref<8x7xf32, #tpu.memory_space<vmem>>, %arg3: memref<8x1xf32, #tpu.memory_space<vmem>>, %arg4: memref<4x8xf32, #tpu.memory_space<vmem>>, %arg5: memref<4x1xf32, #tpu.memory_space<vmem>>, %arg6: memref<4x8xf32, #tpu.memory_space<vmem>>, %arg7: memref<4x1xf32, #tpu.memory_space<vmem>>, %arg8: memref<4x12xf32, #tpu.memory_space<vmem>>, %arg9: memref<4x1xf32, #tpu.memory_space<vmem>>, %arg10: memref<4x8xf32, #tpu.memory_space<vmem>>, %arg11: memref<4x1xf32, #tpu.memory_space<vmem>>, %arg12: memref<4x20xf32, #tpu.memory_space<vmem>>, %arg13: memref<4x1xf32, #tpu.memory_space<vmem>>, %arg14: memref<4x8xf32, #tpu.memory_space<vmem>>, %arg15: memref<4x1xf32, #tpu.memory_space<vmem>>, %arg16: memref<4x16xf32, #tpu.memory_space<vmem>>, %arg17: memref<4x1xf32, #tpu.memory_space<vmem>>, %arg18: memref<4x16xf32, #tpu.memory_space<vmem>>, %arg19: memref<4x1xf32, #tpu.memory_space<vmem>>, %arg20: memref<4x12xf32, #tpu.memory_space<vmem>>, %arg21: memref<4x1xf32, #tpu.memory_space<vmem>>, %arg22: memref<4x16xf32, #tpu.memory_space<vmem>>, %arg23: memref<4x1xf32, #tpu.memory_space<vmem>>, %arg24: memref<4x20xf32, #tpu.memory_space<vmem>>, %arg25: memref<4x1xf32, #tpu.memory_space<vmem>>, %arg26: memref<4x16xf32, #tpu.memory_space<vmem>>, %arg27: memref<4x1xf32, #tpu.memory_space<vmem>>, %arg28: memref<1x16x128xf32, #tpu.memory_space<vmem>>, %arg29: memref<8x132xf32, #tpu.memory_space<vmem>>, %arg30: memref<16x132xf32, #tpu.memory_space<vmem>>, %arg31: memref<4x132xf32, #tpu.memory_space<vmem>>) attributes {dimension_semantics = [#tpu.dimension_semantics<parallel>], iteration_bounds = array<i64: 2>, scalar_prefetch = 0 : i64, scratch_operands = 3 : i64, tpu.core_type = #tpu.core_type<tc>, window_params = [{transform_indices = @transform_0, window_bounds = array<i64: 1, 7, 128>}, {pipeline_mode = #tpu.pipeline_mode<synchronous>, transform_indices = @transform_1, window_bounds = array<i64: 8, 7>}, {pipeline_mode = #tpu.pipeline_mode<synchronous>, transform_indices = @transform_2, window_bounds = array<i64: 8, 1>}, {pipeline_mode = #tpu.pipeline_mode<synchronous>, transform_indices = @transform_3, window_bounds = array<i64: 4, 8>}, {pipeline_mode = #tpu.pipeline_mode<synchronous>, transform_indices = @transform_4, window_bounds = array<i64: 4, 1>}, {pipeline_mode = #tpu.pipeline_mode<synchronous>, transform_indices = @transform_5, window_bounds = array<i64: 4, 8>}, {pipeline_mode = #tpu.pipeline_mode<synchronous>, transform_indices = @transform_6, window_bounds = array<i64: 4, 1>}, {pipeline_mode = #tpu.pipeline_mode<synchronous>, transform_indices = @transform_7, window_bounds = array<i64: 4, 12>}, {pipeline_mode = #tpu.pipeline_mode<synchronous>, transform_indices = @transform_8, window_bounds = array<i64: 4, 1>}, {pipeline_mode = #tpu.pipeline_mode<synchronous>, transform_indices = @transform_9, window_bounds = array<i64: 4, 8>}, {pipeline_mode = #tpu.pipeline_mode<synchronous>, transform_indices = @transform_10, window_bounds = array<i64: 4, 1>}, {pipeline_mode = #tpu.pipeline_mode<synchronous>, transform_indices = @transform_11, window_bounds = array<i64: 4, 20>}, {pipeline_mode = #tpu.pipeline_mode<synchronous>, transform_indices = @transform_12, window_bounds = array<i64: 4, 1>}, {pipeline_mode = #tpu.pipeline_mode<synchronous>, transform_indices = @transform_13, window_bounds = array<i64: 4, 8>}, {pipeline_mode = #tpu.pipeline_mode<synchronous>, transform_indices = @transform_14, window_bounds = array<i64: 4, 1>}, {pipeline_mode = #tpu.pipeline_mode<synchronous>, transform_indices = @transform_15, window_bounds = array<i64: 4, 16>}, {pipeline_mode = #tpu.pipeline_mode<synchronous>, transform_indices = @transform_16, window_bounds = array<i64: 4, 1>}, {pipeline_mode = #tpu.pipeline_mode<synchronous>, transform_indices = @transform_17, window_bounds = array<i64: 4, 16>}, {pipeline_mode = #tpu.pipeline_mode<synchronous>, transform_indices = @transform_18, window_bounds = array<i64: 4, 1>}, {pipeline_mode = #tpu.pipeline_mode<synchronous>, transform_indices = @transform_19, window_bounds = array<i64: 4, 12>}, {pipeline_mode = #tpu.pipeline_mode<synchronous>, transform_indices = @transform_20, window_bounds = array<i64: 4, 1>}, {pipeline_mode = #tpu.pipeline_mode<synchronous>, transform_indices = @transform_21, window_bounds = array<i64: 4, 16>}, {pipeline_mode = #tpu.pipeline_mode<synchronous>, transform_indices = @transform_22, window_bounds = array<i64: 4, 1>}, {pipeline_mode = #tpu.pipeline_mode<synchronous>, transform_indices = @transform_23, window_bounds = array<i64: 4, 20>}, {pipeline_mode = #tpu.pipeline_mode<synchronous>, transform_indices = @transform_24, window_bounds = array<i64: 4, 1>}, {pipeline_mode = #tpu.pipeline_mode<synchronous>, transform_indices = @transform_25, window_bounds = array<i64: 4, 16>}, {pipeline_mode = #tpu.pipeline_mode<synchronous>, transform_indices = @transform_26, window_bounds = array<i64: 4, 1>}, {transform_indices = @transform_27, window_bounds = array<i64: 1, 16, 128>}]} {
    %cst = arith.constant 0.000000e+00 : f32
    %0 = vector.broadcast %cst : f32 to vector<8x132xf32>
    %c0 = arith.constant 0 : index
    %c0_0 = arith.constant 0 : index
    %1 = vector.load %arg29[%c0, %c0_0] : memref<8x132xf32, #tpu.memory_space<vmem>>, vector<8x132xf32>
    tpu.vector_store %arg29[%c0, %c0_0], %0 {strides = array<i32>} : memref<8x132xf32, #tpu.memory_space<vmem>>, vector<8x132xf32>,
    %cst_1 = arith.constant 0.000000e+00 : f32
    %2 = vector.broadcast %cst_1 : f32 to vector<16x132xf32>
    %c0_2 = arith.constant 0 : index
    %c0_3 = arith.constant 0 : index
    %3 = vector.load %arg30[%c0_2, %c0_3] : memref<16x132xf32, #tpu.memory_space<vmem>>, vector<16x132xf32>
    tpu.vector_store %arg30[%c0_2, %c0_3], %2 {strides = array<i32>} : memref<16x132xf32, #tpu.memory_space<vmem>>, vector<16x132xf32>,
    %cst_4 = arith.constant 0.000000e+00 : f32
    %4 = vector.broadcast %cst_4 : f32 to vector<4x132xf32>
    %c0_5 = arith.constant 0 : index
    %c0_6 = arith.constant 0 : index
    %5 = vector.load %arg31[%c0_5, %c0_6] : memref<4x132xf32, #tpu.memory_space<vmem>>, vector<4x132xf32>
    tpu.vector_store %arg31[%c0_5, %c0_6], %4 {strides = array<i32>} : memref<4x132xf32, #tpu.memory_space<vmem>>, vector<4x132xf32>,
    %c0_7 = arith.constant 0 : index
    %c0_8 = arith.constant 0 : index
    %c0_9 = arith.constant 0 : index
    %6 = vector.load %arg1[%c0_7, %c0_8, %c0_9] : memref<1x7x128xf32, #tpu.memory_space<vmem>>, vector<1x7x128xf32>
    %7 = vector.shape_cast %6 : vector<1x7x128xf32> to vector<7x128xf32>
    %cst_10 = arith.constant 0.000000e+00 : f32
    %8 = vector.broadcast %cst_10 : f32 to vector<8x128xf32>
    %c0_11 = arith.constant 0 : index
    %c0_12 = arith.constant 0 : index
    %9 = vector.load %arg3[%c0_11, %c0_12] : memref<8x1xf32, #tpu.memory_space<vmem>>, vector<8x1xf32>
    %10 = vector.broadcast %9 : vector<8x1xf32> to vector<8x128xf32>
    %11 = arith.addf %8, %10 : vector<8x128xf32>
    %c0_13 = arith.constant 0 : index
    %c0_14 = arith.constant 0 : index
    %12 = vector.load %arg2[%c0_13, %c0_14] : memref<8x7xf32, #tpu.memory_space<vmem>>, vector<8x1xf32>
    %13 = vector.extract_strided_slice %7 {offsets = [0, 0], sizes = [1, 128], strides = [1, 1]} : vector<7x128xf32> to vector<1x128xf32>
    %14 = vector.broadcast %12 : vector<8x1xf32> to vector<8x128xf32>
    %15 = vector.broadcast %13 : vector<1x128xf32> to vector<8x128xf32>
    %16 = arith.mulf %14, %15 : vector<8x128xf32>
    %17 = arith.addf %11, %16 : vector<8x128xf32>
    %c0_15 = arith.constant 0 : index
    %c1 = arith.constant 1 : index
    %18 = vector.load %arg2[%c0_15, %c1] : memref<8x7xf32, #tpu.memory_space<vmem>>, vector<8x1xf32>
    %19 = vector.extract_strided_slice %7 {offsets = [1, 0], sizes = [1, 128], strides = [1, 1]} : vector<7x128xf32> to vector<1x128xf32>
    %20 = vector.broadcast %18 : vector<8x1xf32> to vector<8x128xf32>
    %21 = vector.broadcast %19 : vector<1x128xf32> to vector<8x128xf32>
    %22 = arith.mulf %20, %21 : vector<8x128xf32>
    %23 = arith.addf %17, %22 : vector<8x128xf32>
    %c0_16 = arith.constant 0 : index
    %c2 = arith.constant 2 : index
    %24 = vector.load %arg2[%c0_16, %c2] : memref<8x7xf32, #tpu.memory_space<vmem>>, vector<8x1xf32>
    %25 = vector.extract_strided_slice %7 {offsets = [2, 0], sizes = [1, 128], strides = [1, 1]} : vector<7x128xf32> to vector<1x128xf32>
    %26 = vector.broadcast %24 : vector<8x1xf32> to vector<8x128xf32>
    %27 = vector.broadcast %25 : vector<1x128xf32> to vector<8x128xf32>
    %28 = arith.mulf %26, %27 : vector<8x128xf32>
    %29 = arith.addf %23, %28 : vector<8x128xf32>
    %c0_17 = arith.constant 0 : index
    %c3 = arith.constant 3 : index
    %30 = vector.load %arg2[%c0_17, %c3] : memref<8x7xf32, #tpu.memory_space<vmem>>, vector<8x1xf32>
    %31 = vector.extract_strided_slice %7 {offsets = [3, 0], sizes = [1, 128], strides = [1, 1]} : vector<7x128xf32> to vector<1x128xf32>
    %32 = vector.broadcast %30 : vector<8x1xf32> to vector<8x128xf32>
    %33 = vector.broadcast %31 : vector<1x128xf32> to vector<8x128xf32>
    %34 = arith.mulf %32, %33 : vector<8x128xf32>
    %35 = arith.addf %29, %34 : vector<8x128xf32>
    %c0_18 = arith.constant 0 : index
    %c4 = arith.constant 4 : index
    %36 = vector.load %arg2[%c0_18, %c4] : memref<8x7xf32, #tpu.memory_space<vmem>>, vector<8x1xf32>
    %37 = vector.extract_strided_slice %7 {offsets = [4, 0], sizes = [1, 128], strides = [1, 1]} : vector<7x128xf32> to vector<1x128xf32>
    %38 = vector.broadcast %36 : vector<8x1xf32> to vector<8x128xf32>
    %39 = vector.broadcast %37 : vector<1x128xf32> to vector<8x128xf32>
    %40 = arith.mulf %38, %39 : vector<8x128xf32>
    %41 = arith.addf %35, %40 : vector<8x128xf32>
    %c0_19 = arith.constant 0 : index
    %c5 = arith.constant 5 : index
    %42 = vector.load %arg2[%c0_19, %c5] : memref<8x7xf32, #tpu.memory_space<vmem>>, vector<8x1xf32>
    %43 = vector.extract_strided_slice %7 {offsets = [5, 0], sizes = [1, 128], strides = [1, 1]} : vector<7x128xf32> to vector<1x128xf32>
    %44 = vector.broadcast %42 : vector<8x1xf32> to vector<8x128xf32>
    %45 = vector.broadcast %43 : vector<1x128xf32> to vector<8x128xf32>
    %46 = arith.mulf %44, %45 : vector<8x128xf32>
    %47 = arith.addf %41, %46 : vector<8x128xf32>
    %c0_20 = arith.constant 0 : index
    %c6 = arith.constant 6 : index
    %48 = vector.load %arg2[%c0_20, %c6] : memref<8x7xf32, #tpu.memory_space<vmem>>, vector<8x1xf32>
    %49 = vector.extract_strided_slice %7 {offsets = [6, 0], sizes = [1, 128], strides = [1, 1]} : vector<7x128xf32> to vector<1x128xf32>
    %50 = vector.broadcast %48 : vector<8x1xf32> to vector<8x128xf32>
    %51 = vector.broadcast %49 : vector<1x128xf32> to vector<8x128xf32>
    %52 = arith.mulf %50, %51 : vector<8x128xf32>
    %53 = arith.addf %47, %52 : vector<8x128xf32>
    %cst_21 = arith.constant 0.000000e+00 : f32
    %54 = vector.broadcast %cst_21 : f32 to vector<8x128xf32>
    %55 = arith.maximumf %53, %54 : vector<8x128xf32>
    %c0_22 = arith.constant 0 : index
    %c2_23 = arith.constant 2 : index
    %56 = vector.load %arg29[%c0_22, %c2_23] : memref<8x132xf32, #tpu.memory_space<vmem>>, vector<8x128xf32>
    tpu.vector_store %arg29[%c0_22, %c2_23], %55 {strides = array<i32>} : memref<8x132xf32, #tpu.memory_space<vmem>>, vector<8x128xf32>,
    %c0_24 = arith.constant 0 : index
    %c0_25 = arith.constant 0 : index
    %57 = vector.load %arg29[%c0_24, %c0_25] : memref<8x132xf32, #tpu.memory_space<vmem>>, vector<8x132xf32>
    %58 = vector.extract_strided_slice %57 {offsets = [0, 2], sizes = [8, 128], strides = [1, 1]} : vector<8x132xf32> to vector<8x128xf32>
    %cst_26 = arith.constant 0.000000e+00 : f32
    %59 = vector.broadcast %cst_26 : f32 to vector<4x128xf32>
    %c0_27 = arith.constant 0 : index
    %c0_28 = arith.constant 0 : index
    %60 = vector.load %arg5[%c0_27, %c0_28] : memref<4x1xf32, #tpu.memory_space<vmem>>, vector<4x1xf32>
    %61 = vector.broadcast %60 : vector<4x1xf32> to vector<4x128xf32>
    %62 = arith.addf %59, %61 : vector<4x128xf32>
    %c0_29 = arith.constant 0 : index
    %c0_30 = arith.constant 0 : index
    %63 = vector.load %arg4[%c0_29, %c0_30] : memref<4x8xf32, #tpu.memory_space<vmem>>, vector<4x1xf32>
    %64 = vector.extract_strided_slice %58 {offsets = [0, 0], sizes = [1, 128], strides = [1, 1]} : vector<8x128xf32> to vector<1x128xf32>
    %65 = vector.broadcast %63 : vector<4x1xf32> to vector<4x128xf32>
    %66 = vector.broadcast %64 : vector<1x128xf32> to vector<4x128xf32>
    %67 = arith.mulf %65, %66 : vector<4x128xf32>
    %68 = arith.addf %62, %67 : vector<4x128xf32>
    %c0_31 = arith.constant 0 : index
    %c1_32 = arith.constant 1 : index
    %69 = vector.load %arg4[%c0_31, %c1_32] : memref<4x8xf32, #tpu.memory_space<vmem>>, vector<4x1xf32>
    %70 = vector.extract_strided_slice %58 {offsets = [1, 0], sizes = [1, 128], strides = [1, 1]} : vector<8x128xf32> to vector<1x128xf32>
    %71 = vector.broadcast %69 : vector<4x1xf32> to vector<4x128xf32>
    %72 = vector.broadcast %70 : vector<1x128xf32> to vector<4x128xf32>
    %73 = arith.mulf %71, %72 : vector<4x128xf32>
    %74 = arith.addf %68, %73 : vector<4x128xf32>
    %c0_33 = arith.constant 0 : index
    %c2_34 = arith.constant 2 : index
    %75 = vector.load %arg4[%c0_33, %c2_34] : memref<4x8xf32, #tpu.memory_space<vmem>>, vector<4x1xf32>
    %76 = vector.extract_strided_slice %58 {offsets = [2, 0], sizes = [1, 128], strides = [1, 1]} : vector<8x128xf32> to vector<1x128xf32>
    %77 = vector.broadcast %75 : vector<4x1xf32> to vector<4x128xf32>
    %78 = vector.broadcast %76 : vector<1x128xf32> to vector<4x128xf32>
    %79 = arith.mulf %77, %78 : vector<4x128xf32>
    %80 = arith.addf %74, %79 : vector<4x128xf32>
    %c0_35 = arith.constant 0 : index
    %c3_36 = arith.constant 3 : index
    %81 = vector.load %arg4[%c0_35, %c3_36] : memref<4x8xf32, #tpu.memory_space<vmem>>, vector<4x1xf32>
    %82 = vector.extract_strided_slice %58 {offsets = [3, 0], sizes = [1, 128], strides = [1, 1]} : vector<8x128xf32> to vector<1x128xf32>
    %83 = vector.broadcast %81 : vector<4x1xf32> to vector<4x128xf32>
    %84 = vector.broadcast %82 : vector<1x128xf32> to vector<4x128xf32>
    %85 = arith.mulf %83, %84 : vector<4x128xf32>
    %86 = arith.addf %80, %85 : vector<4x128xf32>
    %c0_37 = arith.constant 0 : index
    %c4_38 = arith.constant 4 : index
    %87 = vector.load %arg4[%c0_37, %c4_38] : memref<4x8xf32, #tpu.memory_space<vmem>>, vector<4x1xf32>
    %88 = vector.extract_strided_slice %58 {offsets = [4, 0], sizes = [1, 128], strides = [1, 1]} : vector<8x128xf32> to vector<1x128xf32>
    %89 = vector.broadcast %87 : vector<4x1xf32> to vector<4x128xf32>
    %90 = vector.broadcast %88 : vector<1x128xf32> to vector<4x128xf32>
    %91 = arith.mulf %89, %90 : vector<4x128xf32>
    %92 = arith.addf %86, %91 : vector<4x128xf32>
    %c0_39 = arith.constant 0 : index
    %c5_40 = arith.constant 5 : index
    %93 = vector.load %arg4[%c0_39, %c5_40] : memref<4x8xf32, #tpu.memory_space<vmem>>, vector<4x1xf32>
    %94 = vector.extract_strided_slice %58 {offsets = [5, 0], sizes = [1, 128], strides = [1, 1]} : vector<8x128xf32> to vector<1x128xf32>
    %95 = vector.broadcast %93 : vector<4x1xf32> to vector<4x128xf32>
    %96 = vector.broadcast %94 : vector<1x128xf32> to vector<4x128xf32>
    %97 = arith.mulf %95, %96 : vector<4x128xf32>
    %98 = arith.addf %92, %97 : vector<4x128xf32>
    %c0_41 = arith.constant 0 : index
    %c6_42 = arith.constant 6 : index
    %99 = vector.load %arg4[%c0_41, %c6_42] : memref<4x8xf32, #tpu.memory_space<vmem>>, vector<4x1xf32>
    %100 = vector.extract_strided_slice %58 {offsets = [6, 0], sizes = [1, 128], strides = [1, 1]} : vector<8x128xf32> to vector<1x128xf32>
    %101 = vector.broadcast %99 : vector<4x1xf32> to vector<4x128xf32>
    %102 = vector.broadcast %100 : vector<1x128xf32> to vector<4x128xf32>
    %103 = arith.mulf %101, %102 : vector<4x128xf32>
    %104 = arith.addf %98, %103 : vector<4x128xf32>
    %c0_43 = arith.constant 0 : index
    %c7 = arith.constant 7 : index
    %105 = vector.load %arg4[%c0_43, %c7] : memref<4x8xf32, #tpu.memory_space<vmem>>, vector<4x1xf32>
    %106 = vector.extract_strided_slice %58 {offsets = [7, 0], sizes = [1, 128], strides = [1, 1]} : vector<8x128xf32> to vector<1x128xf32>
    %107 = vector.broadcast %105 : vector<4x1xf32> to vector<4x128xf32>
    %108 = vector.broadcast %106 : vector<1x128xf32> to vector<4x128xf32>
    %109 = arith.mulf %107, %108 : vector<4x128xf32>
    %110 = arith.addf %104, %109 : vector<4x128xf32>
    %cst_44 = arith.constant 0.000000e+00 : f32
    %111 = vector.broadcast %cst_44 : f32 to vector<4x128xf32>
    %112 = arith.maximumf %110, %111 : vector<4x128xf32>
    %c0_45 = arith.constant 0 : index
    %c2_46 = arith.constant 2 : index
    %113 = vector.load %arg30[%c0_45, %c2_46] : memref<16x132xf32, #tpu.memory_space<vmem>>, vector<4x128xf32>
    tpu.vector_store %arg30[%c0_45, %c2_46], %112 {strides = array<i32>} : memref<16x132xf32, #tpu.memory_space<vmem>>, vector<4x128xf32>,
    %cst_47 = arith.constant 0.000000e+00 : f32
    %114 = vector.broadcast %cst_47 : f32 to vector<4x128xf32>
    %c0_48 = arith.constant 0 : index
    %c0_49 = arith.constant 0 : index
    %115 = vector.load %arg7[%c0_48, %c0_49] : memref<4x1xf32, #tpu.memory_space<vmem>>, vector<4x1xf32>
    %116 = vector.broadcast %115 : vector<4x1xf32> to vector<4x128xf32>
    %117 = arith.addf %114, %116 : vector<4x128xf32>
    %c0_50 = arith.constant 0 : index
    %c0_51 = arith.constant 0 : index
    %118 = vector.load %arg6[%c0_50, %c0_51] : memref<4x8xf32, #tpu.memory_space<vmem>>, vector<4x1xf32>
    %119 = vector.extract_strided_slice %58 {offsets = [0, 0], sizes = [1, 128], strides = [1, 1]} : vector<8x128xf32> to vector<1x128xf32>
    %120 = vector.broadcast %118 : vector<4x1xf32> to vector<4x128xf32>
    %121 = vector.broadcast %119 : vector<1x128xf32> to vector<4x128xf32>
    %122 = arith.mulf %120, %121 : vector<4x128xf32>
    %123 = arith.addf %117, %122 : vector<4x128xf32>
    %c0_52 = arith.constant 0 : index
    %c1_53 = arith.constant 1 : index
    %124 = vector.load %arg6[%c0_52, %c1_53] : memref<4x8xf32, #tpu.memory_space<vmem>>, vector<4x1xf32>
    %125 = vector.extract_strided_slice %58 {offsets = [1, 0], sizes = [1, 128], strides = [1, 1]} : vector<8x128xf32> to vector<1x128xf32>
    %126 = vector.broadcast %124 : vector<4x1xf32> to vector<4x128xf32>
    %127 = vector.broadcast %125 : vector<1x128xf32> to vector<4x128xf32>
    %128 = arith.mulf %126, %127 : vector<4x128xf32>
    %129 = arith.addf %123, %128 : vector<4x128xf32>
    %c0_54 = arith.constant 0 : index
    %c2_55 = arith.constant 2 : index
    %130 = vector.load %arg6[%c0_54, %c2_55] : memref<4x8xf32, #tpu.memory_space<vmem>>, vector<4x1xf32>
    %131 = vector.extract_strided_slice %58 {offsets = [2, 0], sizes = [1, 128], strides = [1, 1]} : vector<8x128xf32> to vector<1x128xf32>
    %132 = vector.broadcast %130 : vector<4x1xf32> to vector<4x128xf32>
    %133 = vector.broadcast %131 : vector<1x128xf32> to vector<4x128xf32>
    %134 = arith.mulf %132, %133 : vector<4x128xf32>
    %135 = arith.addf %129, %134 : vector<4x128xf32>
    %c0_56 = arith.constant 0 : index
    %c3_57 = arith.constant 3 : index
    %136 = vector.load %arg6[%c0_56, %c3_57] : memref<4x8xf32, #tpu.memory_space<vmem>>, vector<4x1xf32>
    %137 = vector.extract_strided_slice %58 {offsets = [3, 0], sizes = [1, 128], strides = [1, 1]} : vector<8x128xf32> to vector<1x128xf32>
    %138 = vector.broadcast %136 : vector<4x1xf32> to vector<4x128xf32>
    %139 = vector.broadcast %137 : vector<1x128xf32> to vector<4x128xf32>
    %140 = arith.mulf %138, %139 : vector<4x128xf32>
    %141 = arith.addf %135, %140 : vector<4x128xf32>
    %c0_58 = arith.constant 0 : index
    %c4_59 = arith.constant 4 : index
    %142 = vector.load %arg6[%c0_58, %c4_59] : memref<4x8xf32, #tpu.memory_space<vmem>>, vector<4x1xf32>
    %143 = vector.extract_strided_slice %58 {offsets = [4, 0], sizes = [1, 128], strides = [1, 1]} : vector<8x128xf32> to vector<1x128xf32>
    %144 = vector.broadcast %142 : vector<4x1xf32> to vector<4x128xf32>
    %145 = vector.broadcast %143 : vector<1x128xf32> to vector<4x128xf32>
    %146 = arith.mulf %144, %145 : vector<4x128xf32>
    %147 = arith.addf %141, %146 : vector<4x128xf32>
    %c0_60 = arith.constant 0 : index
    %c5_61 = arith.constant 5 : index
    %148 = vector.load %arg6[%c0_60, %c5_61] : memref<4x8xf32, #tpu.memory_space<vmem>>, vector<4x1xf32>
    %149 = vector.extract_strided_slice %58 {offsets = [5, 0], sizes = [1, 128], strides = [1, 1]} : vector<8x128xf32> to vector<1x128xf32>
    %150 = vector.broadcast %148 : vector<4x1xf32> to vector<4x128xf32>
    %151 = vector.broadcast %149 : vector<1x128xf32> to vector<4x128xf32>
    %152 = arith.mulf %150, %151 : vector<4x128xf32>
    %153 = arith.addf %147, %152 : vector<4x128xf32>
    %c0_62 = arith.constant 0 : index
    %c6_63 = arith.constant 6 : index
    %154 = vector.load %arg6[%c0_62, %c6_63] : memref<4x8xf32, #tpu.memory_space<vmem>>, vector<4x1xf32>
    %155 = vector.extract_strided_slice %58 {offsets = [6, 0], sizes = [1, 128], strides = [1, 1]} : vector<8x128xf32> to vector<1x128xf32>
    %156 = vector.broadcast %154 : vector<4x1xf32> to vector<4x128xf32>
    %157 = vector.broadcast %155 : vector<1x128xf32> to vector<4x128xf32>
    %158 = arith.mulf %156, %157 : vector<4x128xf32>
    %159 = arith.addf %153, %158 : vector<4x128xf32>
    %c0_64 = arith.constant 0 : index
    %c7_65 = arith.constant 7 : index
    %160 = vector.load %arg6[%c0_64, %c7_65] : memref<4x8xf32, #tpu.memory_space<vmem>>, vector<4x1xf32>
    %161 = vector.extract_strided_slice %58 {offsets = [7, 0], sizes = [1, 128], strides = [1, 1]} : vector<8x128xf32> to vector<1x128xf32>
    %162 = vector.broadcast %160 : vector<4x1xf32> to vector<4x128xf32>
    %163 = vector.broadcast %161 : vector<1x128xf32> to vector<4x128xf32>
    %164 = arith.mulf %162, %163 : vector<4x128xf32>
    %165 = arith.addf %159, %164 : vector<4x128xf32>
    %cst_66 = arith.constant 0.000000e+00 : f32
    %166 = vector.broadcast %cst_66 : f32 to vector<4x128xf32>
    %167 = arith.maximumf %165, %166 : vector<4x128xf32>
    %c0_67 = arith.constant 0 : index
    %c2_68 = arith.constant 2 : index
    %168 = vector.load %arg31[%c0_67, %c2_68] : memref<4x132xf32, #tpu.memory_space<vmem>>, vector<4x128xf32>
    tpu.vector_store %arg31[%c0_67, %c2_68], %167 {strides = array<i32>} : memref<4x132xf32, #tpu.memory_space<vmem>>, vector<4x128xf32>,
    %c0_69 = arith.constant 0 : index
    %c0_70 = arith.constant 0 : index
    %169 = vector.load %arg31[%c0_69, %c0_70] : memref<4x132xf32, #tpu.memory_space<vmem>>, vector<4x132xf32>
    %cst_71 = arith.constant 0.000000e+00 : f32
    %170 = vector.broadcast %cst_71 : f32 to vector<4x128xf32>
    %c0_72 = arith.constant 0 : index
    %c0_73 = arith.constant 0 : index
    %171 = vector.load %arg9[%c0_72, %c0_73] : memref<4x1xf32, #tpu.memory_space<vmem>>, vector<4x1xf32>
    %172 = vector.broadcast %171 : vector<4x1xf32> to vector<4x128xf32>
    %173 = arith.addf %170, %172 : vector<4x128xf32>
    %c0_74 = arith.constant 0 : index
    %c0_75 = arith.constant 0 : index
    %174 = vector.load %arg8[%c0_74, %c0_75] : memref<4x12xf32, #tpu.memory_space<vmem>>, vector<4x1xf32>
    %175 = vector.extract_strided_slice %169 {offsets = [0, 1], sizes = [1, 128], strides = [1, 1]} : vector<4x132xf32> to vector<1x128xf32>
    %176 = vector.broadcast %174 : vector<4x1xf32> to vector<4x128xf32>
    %177 = vector.broadcast %175 : vector<1x128xf32> to vector<4x128xf32>
    %178 = arith.mulf %176, %177 : vector<4x128xf32>
    %179 = arith.addf %173, %178 : vector<4x128xf32>
    %c0_76 = arith.constant 0 : index
    %c1_77 = arith.constant 1 : index
    %180 = vector.load %arg8[%c0_76, %c1_77] : memref<4x12xf32, #tpu.memory_space<vmem>>, vector<4x1xf32>
    %181 = vector.extract_strided_slice %169 {offsets = [0, 2], sizes = [1, 128], strides = [1, 1]} : vector<4x132xf32> to vector<1x128xf32>
    %182 = vector.broadcast %180 : vector<4x1xf32> to vector<4x128xf32>
    %183 = vector.broadcast %181 : vector<1x128xf32> to vector<4x128xf32>
    %184 = arith.mulf %182, %183 : vector<4x128xf32>
    %185 = arith.addf %179, %184 : vector<4x128xf32>
    %c0_78 = arith.constant 0 : index
    %c2_79 = arith.constant 2 : index
    %186 = vector.load %arg8[%c0_78, %c2_79] : memref<4x12xf32, #tpu.memory_space<vmem>>, vector<4x1xf32>
    %187 = vector.extract_strided_slice %169 {offsets = [0, 3], sizes = [1, 128], strides = [1, 1]} : vector<4x132xf32> to vector<1x128xf32>
    %188 = vector.broadcast %186 : vector<4x1xf32> to vector<4x128xf32>
    %189 = vector.broadcast %187 : vector<1x128xf32> to vector<4x128xf32>
    %190 = arith.mulf %188, %189 : vector<4x128xf32>
    %191 = arith.addf %185, %190 : vector<4x128xf32>
    %c0_80 = arith.constant 0 : index
    %c3_81 = arith.constant 3 : index
    %192 = vector.load %arg8[%c0_80, %c3_81] : memref<4x12xf32, #tpu.memory_space<vmem>>, vector<4x1xf32>
    %193 = vector.extract_strided_slice %169 {offsets = [1, 1], sizes = [1, 128], strides = [1, 1]} : vector<4x132xf32> to vector<1x128xf32>
    %194 = vector.broadcast %192 : vector<4x1xf32> to vector<4x128xf32>
    %195 = vector.broadcast %193 : vector<1x128xf32> to vector<4x128xf32>
    %196 = arith.mulf %194, %195 : vector<4x128xf32>
    %197 = arith.addf %191, %196 : vector<4x128xf32>
    %c0_82 = arith.constant 0 : index
    %c4_83 = arith.constant 4 : index
    %198 = vector.load %arg8[%c0_82, %c4_83] : memref<4x12xf32, #tpu.memory_space<vmem>>, vector<4x1xf32>
    %199 = vector.extract_strided_slice %169 {offsets = [1, 2], sizes = [1, 128], strides = [1, 1]} : vector<4x132xf32> to vector<1x128xf32>
    %200 = vector.broadcast %198 : vector<4x1xf32> to vector<4x128xf32>
    %201 = vector.broadcast %199 : vector<1x128xf32> to vector<4x128xf32>
    %202 = arith.mulf %200, %201 : vector<4x128xf32>
    %203 = arith.addf %197, %202 : vector<4x128xf32>
    %c0_84 = arith.constant 0 : index
    %c5_85 = arith.constant 5 : index
    %204 = vector.load %arg8[%c0_84, %c5_85] : memref<4x12xf32, #tpu.memory_space<vmem>>, vector<4x1xf32>
    %205 = vector.extract_strided_slice %169 {offsets = [1, 3], sizes = [1, 128], strides = [1, 1]} : vector<4x132xf32> to vector<1x128xf32>
    %206 = vector.broadcast %204 : vector<4x1xf32> to vector<4x128xf32>
    %207 = vector.broadcast %205 : vector<1x128xf32> to vector<4x128xf32>
    %208 = arith.mulf %206, %207 : vector<4x128xf32>
    %209 = arith.addf %203, %208 : vector<4x128xf32>
    %c0_86 = arith.constant 0 : index
    %c6_87 = arith.constant 6 : index
    %210 = vector.load %arg8[%c0_86, %c6_87] : memref<4x12xf32, #tpu.memory_space<vmem>>, vector<4x1xf32>
    %211 = vector.extract_strided_slice %169 {offsets = [2, 1], sizes = [1, 128], strides = [1, 1]} : vector<4x132xf32> to vector<1x128xf32>
    %212 = vector.broadcast %210 : vector<4x1xf32> to vector<4x128xf32>
    %213 = vector.broadcast %211 : vector<1x128xf32> to vector<4x128xf32>
    %214 = arith.mulf %212, %213 : vector<4x128xf32>
    %215 = arith.addf %209, %214 : vector<4x128xf32>
    %c0_88 = arith.constant 0 : index
    %c7_89 = arith.constant 7 : index
    %216 = vector.load %arg8[%c0_88, %c7_89] : memref<4x12xf32, #tpu.memory_space<vmem>>, vector<4x1xf32>
    %217 = vector.extract_strided_slice %169 {offsets = [2, 2], sizes = [1, 128], strides = [1, 1]} : vector<4x132xf32> to vector<1x128xf32>
    %218 = vector.broadcast %216 : vector<4x1xf32> to vector<4x128xf32>
    %219 = vector.broadcast %217 : vector<1x128xf32> to vector<4x128xf32>
    %220 = arith.mulf %218, %219 : vector<4x128xf32>
    %221 = arith.addf %215, %220 : vector<4x128xf32>
    %c0_90 = arith.constant 0 : index
    %c8 = arith.constant 8 : index
    %222 = vector.load %arg8[%c0_90, %c8] : memref<4x12xf32, #tpu.memory_space<vmem>>, vector<4x1xf32>
    %223 = vector.extract_strided_slice %169 {offsets = [2, 3], sizes = [1, 128], strides = [1, 1]} : vector<4x132xf32> to vector<1x128xf32>
    %224 = vector.broadcast %222 : vector<4x1xf32> to vector<4x128xf32>
    %225 = vector.broadcast %223 : vector<1x128xf32> to vector<4x128xf32>
    %226 = arith.mulf %224, %225 : vector<4x128xf32>
    %227 = arith.addf %221, %226 : vector<4x128xf32>
    %c0_91 = arith.constant 0 : index
    %c9 = arith.constant 9 : index
    %228 = vector.load %arg8[%c0_91, %c9] : memref<4x12xf32, #tpu.memory_space<vmem>>, vector<4x1xf32>
    %229 = vector.extract_strided_slice %169 {offsets = [3, 1], sizes = [1, 128], strides = [1, 1]} : vector<4x132xf32> to vector<1x128xf32>
    %230 = vector.broadcast %228 : vector<4x1xf32> to vector<4x128xf32>
    %231 = vector.broadcast %229 : vector<1x128xf32> to vector<4x128xf32>
    %232 = arith.mulf %230, %231 : vector<4x128xf32>
    %233 = arith.addf %227, %232 : vector<4x128xf32>
    %c0_92 = arith.constant 0 : index
    %c10 = arith.constant 10 : index
    %234 = vector.load %arg8[%c0_92, %c10] : memref<4x12xf32, #tpu.memory_space<vmem>>, vector<4x1xf32>
    %235 = vector.extract_strided_slice %169 {offsets = [3, 2], sizes = [1, 128], strides = [1, 1]} : vector<4x132xf32> to vector<1x128xf32>
    %236 = vector.broadcast %234 : vector<4x1xf32> to vector<4x128xf32>
    %237 = vector.broadcast %235 : vector<1x128xf32> to vector<4x128xf32>
    %238 = arith.mulf %236, %237 : vector<4x128xf32>
    %239 = arith.addf %233, %238 : vector<4x128xf32>
    %c0_93 = arith.constant 0 : index
    %c11 = arith.constant 11 : index
    %240 = vector.load %arg8[%c0_93, %c11] : memref<4x12xf32, #tpu.memory_space<vmem>>, vector<4x1xf32>
    %241 = vector.extract_strided_slice %169 {offsets = [3, 3], sizes = [1, 128], strides = [1, 1]} : vector<4x132xf32> to vector<1x128xf32>
    %242 = vector.broadcast %240 : vector<4x1xf32> to vector<4x128xf32>
    %243 = vector.broadcast %241 : vector<1x128xf32> to vector<4x128xf32>
    %244 = arith.mulf %242, %243 : vector<4x128xf32>
    %245 = arith.addf %239, %244 : vector<4x128xf32>
    %cst_94 = arith.constant 0.000000e+00 : f32
    %246 = vector.broadcast %cst_94 : f32 to vector<4x128xf32>
    %247 = arith.maximumf %245, %246 : vector<4x128xf32>
    %c4_95 = arith.constant 4 : index
    %c2_96 = arith.constant 2 : index
    %248 = vector.load %arg30[%c4_95, %c2_96] : memref<16x132xf32, #tpu.memory_space<vmem>>, vector<4x128xf32>
    tpu.vector_store %arg30[%c4_95, %c2_96], %247 {strides = array<i32>} : memref<16x132xf32, #tpu.memory_space<vmem>>, vector<4x128xf32>,
    %cst_97 = arith.constant 0.000000e+00 : f32
    %249 = vector.broadcast %cst_97 : f32 to vector<4x128xf32>
    %c0_98 = arith.constant 0 : index
    %c0_99 = arith.constant 0 : index
    %250 = vector.load %arg11[%c0_98, %c0_99] : memref<4x1xf32, #tpu.memory_space<vmem>>, vector<4x1xf32>
    %251 = vector.broadcast %250 : vector<4x1xf32> to vector<4x128xf32>
    %252 = arith.addf %249, %251 : vector<4x128xf32>
    %c0_100 = arith.constant 0 : index
    %c0_101 = arith.constant 0 : index
    %253 = vector.load %arg10[%c0_100, %c0_101] : memref<4x8xf32, #tpu.memory_space<vmem>>, vector<4x1xf32>
    %254 = vector.extract_strided_slice %58 {offsets = [0, 0], sizes = [1, 128], strides = [1, 1]} : vector<8x128xf32> to vector<1x128xf32>
    %255 = vector.broadcast %253 : vector<4x1xf32> to vector<4x128xf32>
    %256 = vector.broadcast %254 : vector<1x128xf32> to vector<4x128xf32>
    %257 = arith.mulf %255, %256 : vector<4x128xf32>
    %258 = arith.addf %252, %257 : vector<4x128xf32>
    %c0_102 = arith.constant 0 : index
    %c1_103 = arith.constant 1 : index
    %259 = vector.load %arg10[%c0_102, %c1_103] : memref<4x8xf32, #tpu.memory_space<vmem>>, vector<4x1xf32>
    %260 = vector.extract_strided_slice %58 {offsets = [1, 0], sizes = [1, 128], strides = [1, 1]} : vector<8x128xf32> to vector<1x128xf32>
    %261 = vector.broadcast %259 : vector<4x1xf32> to vector<4x128xf32>
    %262 = vector.broadcast %260 : vector<1x128xf32> to vector<4x128xf32>
    %263 = arith.mulf %261, %262 : vector<4x128xf32>
    %264 = arith.addf %258, %263 : vector<4x128xf32>
    %c0_104 = arith.constant 0 : index
    %c2_105 = arith.constant 2 : index
    %265 = vector.load %arg10[%c0_104, %c2_105] : memref<4x8xf32, #tpu.memory_space<vmem>>, vector<4x1xf32>
    %266 = vector.extract_strided_slice %58 {offsets = [2, 0], sizes = [1, 128], strides = [1, 1]} : vector<8x128xf32> to vector<1x128xf32>
    %267 = vector.broadcast %265 : vector<4x1xf32> to vector<4x128xf32>
    %268 = vector.broadcast %266 : vector<1x128xf32> to vector<4x128xf32>
    %269 = arith.mulf %267, %268 : vector<4x128xf32>
    %270 = arith.addf %264, %269 : vector<4x128xf32>
    %c0_106 = arith.constant 0 : index
    %c3_107 = arith.constant 3 : index
    %271 = vector.load %arg10[%c0_106, %c3_107] : memref<4x8xf32, #tpu.memory_space<vmem>>, vector<4x1xf32>
    %272 = vector.extract_strided_slice %58 {offsets = [3, 0], sizes = [1, 128], strides = [1, 1]} : vector<8x128xf32> to vector<1x128xf32>
    %273 = vector.broadcast %271 : vector<4x1xf32> to vector<4x128xf32>
    %274 = vector.broadcast %272 : vector<1x128xf32> to vector<4x128xf32>
    %275 = arith.mulf %273, %274 : vector<4x128xf32>
    %276 = arith.addf %270, %275 : vector<4x128xf32>
    %c0_108 = arith.constant 0 : index
    %c4_109 = arith.constant 4 : index
    %277 = vector.load %arg10[%c0_108, %c4_109] : memref<4x8xf32, #tpu.memory_space<vmem>>, vector<4x1xf32>
    %278 = vector.extract_strided_slice %58 {offsets = [4, 0], sizes = [1, 128], strides = [1, 1]} : vector<8x128xf32> to vector<1x128xf32>
    %279 = vector.broadcast %277 : vector<4x1xf32> to vector<4x128xf32>
    %280 = vector.broadcast %278 : vector<1x128xf32> to vector<4x128xf32>
    %281 = arith.mulf %279, %280 : vector<4x128xf32>
    %282 = arith.addf %276, %281 : vector<4x128xf32>
    %c0_110 = arith.constant 0 : index
    %c5_111 = arith.constant 5 : index
    %283 = vector.load %arg10[%c0_110, %c5_111] : memref<4x8xf32, #tpu.memory_space<vmem>>, vector<4x1xf32>
    %284 = vector.extract_strided_slice %58 {offsets = [5, 0], sizes = [1, 128], strides = [1, 1]} : vector<8x128xf32> to vector<1x128xf32>
    %285 = vector.broadcast %283 : vector<4x1xf32> to vector<4x128xf32>
    %286 = vector.broadcast %284 : vector<1x128xf32> to vector<4x128xf32>
    %287 = arith.mulf %285, %286 : vector<4x128xf32>
    %288 = arith.addf %282, %287 : vector<4x128xf32>
    %c0_112 = arith.constant 0 : index
    %c6_113 = arith.constant 6 : index
    %289 = vector.load %arg10[%c0_112, %c6_113] : memref<4x8xf32, #tpu.memory_space<vmem>>, vector<4x1xf32>
    %290 = vector.extract_strided_slice %58 {offsets = [6, 0], sizes = [1, 128], strides = [1, 1]} : vector<8x128xf32> to vector<1x128xf32>
    %291 = vector.broadcast %289 : vector<4x1xf32> to vector<4x128xf32>
    %292 = vector.broadcast %290 : vector<1x128xf32> to vector<4x128xf32>
    %293 = arith.mulf %291, %292 : vector<4x128xf32>
    %294 = arith.addf %288, %293 : vector<4x128xf32>
    %c0_114 = arith.constant 0 : index
    %c7_115 = arith.constant 7 : index
    %295 = vector.load %arg10[%c0_114, %c7_115] : memref<4x8xf32, #tpu.memory_space<vmem>>, vector<4x1xf32>
    %296 = vector.extract_strided_slice %58 {offsets = [7, 0], sizes = [1, 128], strides = [1, 1]} : vector<8x128xf32> to vector<1x128xf32>
    %297 = vector.broadcast %295 : vector<4x1xf32> to vector<4x128xf32>
    %298 = vector.broadcast %296 : vector<1x128xf32> to vector<4x128xf32>
    %299 = arith.mulf %297, %298 : vector<4x128xf32>
    %300 = arith.addf %294, %299 : vector<4x128xf32>
    %cst_116 = arith.constant 0.000000e+00 : f32
    %301 = vector.broadcast %cst_116 : f32 to vector<4x128xf32>
    %302 = arith.maximumf %300, %301 : vector<4x128xf32>
    %c0_117 = arith.constant 0 : index
    %c2_118 = arith.constant 2 : index
    %303 = vector.load %arg31[%c0_117, %c2_118] : memref<4x132xf32, #tpu.memory_space<vmem>>, vector<4x128xf32>
    tpu.vector_store %arg31[%c0_117, %c2_118], %302 {strides = array<i32>} : memref<4x132xf32, #tpu.memory_space<vmem>>, vector<4x128xf32>,
    %c0_119 = arith.constant 0 : index
    %c0_120 = arith.constant 0 : index
    %304 = vector.load %arg31[%c0_119, %c0_120] : memref<4x132xf32, #tpu.memory_space<vmem>>, vector<4x132xf32>
    %cst_121 = arith.constant 0.000000e+00 : f32
    %305 = vector.broadcast %cst_121 : f32 to vector<4x128xf32>
    %c0_122 = arith.constant 0 : index
    %c0_123 = arith.constant 0 : index
    %306 = vector.load %arg13[%c0_122, %c0_123] : memref<4x1xf32, #tpu.memory_space<vmem>>, vector<4x1xf32>
    %307 = vector.broadcast %306 : vector<4x1xf32> to vector<4x128xf32>
    %308 = arith.addf %305, %307 : vector<4x128xf32>
    %c0_124 = arith.constant 0 : index
    %c0_125 = arith.constant 0 : index
    %309 = vector.load %arg12[%c0_124, %c0_125] : memref<4x20xf32, #tpu.memory_space<vmem>>, vector<4x1xf32>
    %310 = vector.extract_strided_slice %304 {offsets = [0, 0], sizes = [1, 128], strides = [1, 1]} : vector<4x132xf32> to vector<1x128xf32>
    %311 = vector.broadcast %309 : vector<4x1xf32> to vector<4x128xf32>
    %312 = vector.broadcast %310 : vector<1x128xf32> to vector<4x128xf32>
    %313 = arith.mulf %311, %312 : vector<4x128xf32>
    %314 = arith.addf %308, %313 : vector<4x128xf32>
    %c0_126 = arith.constant 0 : index
    %c1_127 = arith.constant 1 : index
    %315 = vector.load %arg12[%c0_126, %c1_127] : memref<4x20xf32, #tpu.memory_space<vmem>>, vector<4x1xf32>
    %316 = vector.extract_strided_slice %304 {offsets = [0, 1], sizes = [1, 128], strides = [1, 1]} : vector<4x132xf32> to vector<1x128xf32>
    %317 = vector.broadcast %315 : vector<4x1xf32> to vector<4x128xf32>
    %318 = vector.broadcast %316 : vector<1x128xf32> to vector<4x128xf32>
    %319 = arith.mulf %317, %318 : vector<4x128xf32>
    %320 = arith.addf %314, %319 : vector<4x128xf32>
    %c0_128 = arith.constant 0 : index
    %c2_129 = arith.constant 2 : index
    %321 = vector.load %arg12[%c0_128, %c2_129] : memref<4x20xf32, #tpu.memory_space<vmem>>, vector<4x1xf32>
    %322 = vector.extract_strided_slice %304 {offsets = [0, 2], sizes = [1, 128], strides = [1, 1]} : vector<4x132xf32> to vector<1x128xf32>
    %323 = vector.broadcast %321 : vector<4x1xf32> to vector<4x128xf32>
    %324 = vector.broadcast %322 : vector<1x128xf32> to vector<4x128xf32>
    %325 = arith.mulf %323, %324 : vector<4x128xf32>
    %326 = arith.addf %320, %325 : vector<4x128xf32>
    %c0_130 = arith.constant 0 : index
    %c3_131 = arith.constant 3 : index
    %327 = vector.load %arg12[%c0_130, %c3_131] : memref<4x20xf32, #tpu.memory_space<vmem>>, vector<4x1xf32>
    %328 = vector.extract_strided_slice %304 {offsets = [0, 3], sizes = [1, 128], strides = [1, 1]} : vector<4x132xf32> to vector<1x128xf32>
    %329 = vector.broadcast %327 : vector<4x1xf32> to vector<4x128xf32>
    %330 = vector.broadcast %328 : vector<1x128xf32> to vector<4x128xf32>
    %331 = arith.mulf %329, %330 : vector<4x128xf32>
    %332 = arith.addf %326, %331 : vector<4x128xf32>
    %c0_132 = arith.constant 0 : index
    %c4_133 = arith.constant 4 : index
    %333 = vector.load %arg12[%c0_132, %c4_133] : memref<4x20xf32, #tpu.memory_space<vmem>>, vector<4x1xf32>
    %334 = vector.extract_strided_slice %304 {offsets = [0, 4], sizes = [1, 128], strides = [1, 1]} : vector<4x132xf32> to vector<1x128xf32>
    %335 = vector.broadcast %333 : vector<4x1xf32> to vector<4x128xf32>
    %336 = vector.broadcast %334 : vector<1x128xf32> to vector<4x128xf32>
    %337 = arith.mulf %335, %336 : vector<4x128xf32>
    %338 = arith.addf %332, %337 : vector<4x128xf32>
    %c0_134 = arith.constant 0 : index
    %c5_135 = arith.constant 5 : index
    %339 = vector.load %arg12[%c0_134, %c5_135] : memref<4x20xf32, #tpu.memory_space<vmem>>, vector<4x1xf32>
    %340 = vector.extract_strided_slice %304 {offsets = [1, 0], sizes = [1, 128], strides = [1, 1]} : vector<4x132xf32> to vector<1x128xf32>
    %341 = vector.broadcast %339 : vector<4x1xf32> to vector<4x128xf32>
    %342 = vector.broadcast %340 : vector<1x128xf32> to vector<4x128xf32>
    %343 = arith.mulf %341, %342 : vector<4x128xf32>
    %344 = arith.addf %338, %343 : vector<4x128xf32>
    %c0_136 = arith.constant 0 : index
    %c6_137 = arith.constant 6 : index
    %345 = vector.load %arg12[%c0_136, %c6_137] : memref<4x20xf32, #tpu.memory_space<vmem>>, vector<4x1xf32>
    %346 = vector.extract_strided_slice %304 {offsets = [1, 1], sizes = [1, 128], strides = [1, 1]} : vector<4x132xf32> to vector<1x128xf32>
    %347 = vector.broadcast %345 : vector<4x1xf32> to vector<4x128xf32>
    %348 = vector.broadcast %346 : vector<1x128xf32> to vector<4x128xf32>
    %349 = arith.mulf %347, %348 : vector<4x128xf32>
    %350 = arith.addf %344, %349 : vector<4x128xf32>
    %c0_138 = arith.constant 0 : index
    %c7_139 = arith.constant 7 : index
    %351 = vector.load %arg12[%c0_138, %c7_139] : memref<4x20xf32, #tpu.memory_space<vmem>>, vector<4x1xf32>
    %352 = vector.extract_strided_slice %304 {offsets = [1, 2], sizes = [1, 128], strides = [1, 1]} : vector<4x132xf32> to vector<1x128xf32>
    %353 = vector.broadcast %351 : vector<4x1xf32> to vector<4x128xf32>
    %354 = vector.broadcast %352 : vector<1x128xf32> to vector<4x128xf32>
    %355 = arith.mulf %353, %354 : vector<4x128xf32>
    %356 = arith.addf %350, %355 : vector<4x128xf32>
    %c0_140 = arith.constant 0 : index
    %c8_141 = arith.constant 8 : index
    %357 = vector.load %arg12[%c0_140, %c8_141] : memref<4x20xf32, #tpu.memory_space<vmem>>, vector<4x1xf32>
    %358 = vector.extract_strided_slice %304 {offsets = [1, 3], sizes = [1, 128], strides = [1, 1]} : vector<4x132xf32> to vector<1x128xf32>
    %359 = vector.broadcast %357 : vector<4x1xf32> to vector<4x128xf32>
    %360 = vector.broadcast %358 : vector<1x128xf32> to vector<4x128xf32>
    %361 = arith.mulf %359, %360 : vector<4x128xf32>
    %362 = arith.addf %356, %361 : vector<4x128xf32>
    %c0_142 = arith.constant 0 : index
    %c9_143 = arith.constant 9 : index
    %363 = vector.load %arg12[%c0_142, %c9_143] : memref<4x20xf32, #tpu.memory_space<vmem>>, vector<4x1xf32>
    %364 = vector.extract_strided_slice %304 {offsets = [1, 4], sizes = [1, 128], strides = [1, 1]} : vector<4x132xf32> to vector<1x128xf32>
    %365 = vector.broadcast %363 : vector<4x1xf32> to vector<4x128xf32>
    %366 = vector.broadcast %364 : vector<1x128xf32> to vector<4x128xf32>
    %367 = arith.mulf %365, %366 : vector<4x128xf32>
    %368 = arith.addf %362, %367 : vector<4x128xf32>
    %c0_144 = arith.constant 0 : index
    %c10_145 = arith.constant 10 : index
    %369 = vector.load %arg12[%c0_144, %c10_145] : memref<4x20xf32, #tpu.memory_space<vmem>>, vector<4x1xf32>
    %370 = vector.extract_strided_slice %304 {offsets = [2, 0], sizes = [1, 128], strides = [1, 1]} : vector<4x132xf32> to vector<1x128xf32>
    %371 = vector.broadcast %369 : vector<4x1xf32> to vector<4x128xf32>
    %372 = vector.broadcast %370 : vector<1x128xf32> to vector<4x128xf32>
    %373 = arith.mulf %371, %372 : vector<4x128xf32>
    %374 = arith.addf %368, %373 : vector<4x128xf32>
    %c0_146 = arith.constant 0 : index
    %c11_147 = arith.constant 11 : index
    %375 = vector.load %arg12[%c0_146, %c11_147] : memref<4x20xf32, #tpu.memory_space<vmem>>, vector<4x1xf32>
    %376 = vector.extract_strided_slice %304 {offsets = [2, 1], sizes = [1, 128], strides = [1, 1]} : vector<4x132xf32> to vector<1x128xf32>
    %377 = vector.broadcast %375 : vector<4x1xf32> to vector<4x128xf32>
    %378 = vector.broadcast %376 : vector<1x128xf32> to vector<4x128xf32>
    %379 = arith.mulf %377, %378 : vector<4x128xf32>
    %380 = arith.addf %374, %379 : vector<4x128xf32>
    %c0_148 = arith.constant 0 : index
    %c12 = arith.constant 12 : index
    %381 = vector.load %arg12[%c0_148, %c12] : memref<4x20xf32, #tpu.memory_space<vmem>>, vector<4x1xf32>
    %382 = vector.extract_strided_slice %304 {offsets = [2, 2], sizes = [1, 128], strides = [1, 1]} : vector<4x132xf32> to vector<1x128xf32>
    %383 = vector.broadcast %381 : vector<4x1xf32> to vector<4x128xf32>
    %384 = vector.broadcast %382 : vector<1x128xf32> to vector<4x128xf32>
    %385 = arith.mulf %383, %384 : vector<4x128xf32>
    %386 = arith.addf %380, %385 : vector<4x128xf32>
    %c0_149 = arith.constant 0 : index
    %c13 = arith.constant 13 : index
    %387 = vector.load %arg12[%c0_149, %c13] : memref<4x20xf32, #tpu.memory_space<vmem>>, vector<4x1xf32>
    %388 = vector.extract_strided_slice %304 {offsets = [2, 3], sizes = [1, 128], strides = [1, 1]} : vector<4x132xf32> to vector<1x128xf32>
    %389 = vector.broadcast %387 : vector<4x1xf32> to vector<4x128xf32>
    %390 = vector.broadcast %388 : vector<1x128xf32> to vector<4x128xf32>
    %391 = arith.mulf %389, %390 : vector<4x128xf32>
    %392 = arith.addf %386, %391 : vector<4x128xf32>
    %c0_150 = arith.constant 0 : index
    %c14 = arith.constant 14 : index
    %393 = vector.load %arg12[%c0_150, %c14] : memref<4x20xf32, #tpu.memory_space<vmem>>, vector<4x1xf32>
    %394 = vector.extract_strided_slice %304 {offsets = [2, 4], sizes = [1, 128], strides = [1, 1]} : vector<4x132xf32> to vector<1x128xf32>
    %395 = vector.broadcast %393 : vector<4x1xf32> to vector<4x128xf32>
    %396 = vector.broadcast %394 : vector<1x128xf32> to vector<4x128xf32>
    %397 = arith.mulf %395, %396 : vector<4x128xf32>
    %398 = arith.addf %392, %397 : vector<4x128xf32>
    %c0_151 = arith.constant 0 : index
    %c15 = arith.constant 15 : index
    %399 = vector.load %arg12[%c0_151, %c15] : memref<4x20xf32, #tpu.memory_space<vmem>>, vector<4x1xf32>
    %400 = vector.extract_strided_slice %304 {offsets = [3, 0], sizes = [1, 128], strides = [1, 1]} : vector<4x132xf32> to vector<1x128xf32>
    %401 = vector.broadcast %399 : vector<4x1xf32> to vector<4x128xf32>
    %402 = vector.broadcast %400 : vector<1x128xf32> to vector<4x128xf32>
    %403 = arith.mulf %401, %402 : vector<4x128xf32>
    %404 = arith.addf %398, %403 : vector<4x128xf32>
    %c0_152 = arith.constant 0 : index
    %c16 = arith.constant 16 : index
    %405 = vector.load %arg12[%c0_152, %c16] : memref<4x20xf32, #tpu.memory_space<vmem>>, vector<4x1xf32>
    %406 = vector.extract_strided_slice %304 {offsets = [3, 1], sizes = [1, 128], strides = [1, 1]} : vector<4x132xf32> to vector<1x128xf32>
    %407 = vector.broadcast %405 : vector<4x1xf32> to vector<4x128xf32>
    %408 = vector.broadcast %406 : vector<1x128xf32> to vector<4x128xf32>
    %409 = arith.mulf %407, %408 : vector<4x128xf32>
    %410 = arith.addf %404, %409 : vector<4x128xf32>
    %c0_153 = arith.constant 0 : index
    %c17 = arith.constant 17 : index
    %411 = vector.load %arg12[%c0_153, %c17] : memref<4x20xf32, #tpu.memory_space<vmem>>, vector<4x1xf32>
    %412 = vector.extract_strided_slice %304 {offsets = [3, 2], sizes = [1, 128], strides = [1, 1]} : vector<4x132xf32> to vector<1x128xf32>
    %413 = vector.broadcast %411 : vector<4x1xf32> to vector<4x128xf32>
    %414 = vector.broadcast %412 : vector<1x128xf32> to vector<4x128xf32>
    %415 = arith.mulf %413, %414 : vector<4x128xf32>
    %416 = arith.addf %410, %415 : vector<4x128xf32>
    %c0_154 = arith.constant 0 : index
    %c18 = arith.constant 18 : index
    %417 = vector.load %arg12[%c0_154, %c18] : memref<4x20xf32, #tpu.memory_space<vmem>>, vector<4x1xf32>
    %418 = vector.extract_strided_slice %304 {offsets = [3, 3], sizes = [1, 128], strides = [1, 1]} : vector<4x132xf32> to vector<1x128xf32>
    %419 = vector.broadcast %417 : vector<4x1xf32> to vector<4x128xf32>
    %420 = vector.broadcast %418 : vector<1x128xf32> to vector<4x128xf32>
    %421 = arith.mulf %419, %420 : vector<4x128xf32>
    %422 = arith.addf %416, %421 : vector<4x128xf32>
    %c0_155 = arith.constant 0 : index
    %c19 = arith.constant 19 : index
    %423 = vector.load %arg12[%c0_155, %c19] : memref<4x20xf32, #tpu.memory_space<vmem>>, vector<4x1xf32>
    %424 = vector.extract_strided_slice %304 {offsets = [3, 4], sizes = [1, 128], strides = [1, 1]} : vector<4x132xf32> to vector<1x128xf32>
    %425 = vector.broadcast %423 : vector<4x1xf32> to vector<4x128xf32>
    %426 = vector.broadcast %424 : vector<1x128xf32> to vector<4x128xf32>
    %427 = arith.mulf %425, %426 : vector<4x128xf32>
    %428 = arith.addf %422, %427 : vector<4x128xf32>
    %cst_156 = arith.constant 0.000000e+00 : f32
    %429 = vector.broadcast %cst_156 : f32 to vector<4x128xf32>
    %430 = arith.maximumf %428, %429 : vector<4x128xf32>
    %c8_157 = arith.constant 8 : index
    %c2_158 = arith.constant 2 : index
    %431 = vector.load %arg30[%c8_157, %c2_158] : memref<16x132xf32, #tpu.memory_space<vmem>>, vector<4x128xf32>
    tpu.vector_store %arg30[%c8_157, %c2_158], %430 {strides = array<i32>} : memref<16x132xf32, #tpu.memory_space<vmem>>, vector<4x128xf32>,
    %432 = vector.extract_strided_slice %57 {offsets = [0, 1], sizes = [8, 128], strides = [1, 1]} : vector<8x132xf32> to vector<8x128xf32>
    %433 = vector.extract_strided_slice %57 {offsets = [0, 2], sizes = [8, 128], strides = [1, 1]} : vector<8x132xf32> to vector<8x128xf32>
    %434 = arith.addf %432, %433 : vector<8x128xf32>
    %435 = vector.extract_strided_slice %57 {offsets = [0, 3], sizes = [8, 128], strides = [1, 1]} : vector<8x132xf32> to vector<8x128xf32>
    %436 = arith.addf %434, %435 : vector<8x128xf32>
    %cst_159 = arith.constant 0.000000e+00 : f32
    %437 = vector.broadcast %cst_159 : f32 to vector<4x128xf32>
    %c0_160 = arith.constant 0 : index
    %c0_161 = arith.constant 0 : index
    %438 = vector.load %arg15[%c0_160, %c0_161] : memref<4x1xf32, #tpu.memory_space<vmem>>, vector<4x1xf32>
    %439 = vector.broadcast %438 : vector<4x1xf32> to vector<4x128xf32>
    %440 = arith.addf %437, %439 : vector<4x128xf32>
    %c0_162 = arith.constant 0 : index
    %c0_163 = arith.constant 0 : index
    %441 = vector.load %arg14[%c0_162, %c0_163] : memref<4x8xf32, #tpu.memory_space<vmem>>, vector<4x1xf32>
    %442 = vector.extract_strided_slice %436 {offsets = [0, 0], sizes = [1, 128], strides = [1, 1]} : vector<8x128xf32> to vector<1x128xf32>
    %443 = vector.broadcast %441 : vector<4x1xf32> to vector<4x128xf32>
    %444 = vector.broadcast %442 : vector<1x128xf32> to vector<4x128xf32>
    %445 = arith.mulf %443, %444 : vector<4x128xf32>
    %446 = arith.addf %440, %445 : vector<4x128xf32>
    %c0_164 = arith.constant 0 : index
    %c1_165 = arith.constant 1 : index
    %447 = vector.load %arg14[%c0_164, %c1_165] : memref<4x8xf32, #tpu.memory_space<vmem>>, vector<4x1xf32>
    %448 = vector.extract_strided_slice %436 {offsets = [1, 0], sizes = [1, 128], strides = [1, 1]} : vector<8x128xf32> to vector<1x128xf32>
    %449 = vector.broadcast %447 : vector<4x1xf32> to vector<4x128xf32>
    %450 = vector.broadcast %448 : vector<1x128xf32> to vector<4x128xf32>
    %451 = arith.mulf %449, %450 : vector<4x128xf32>
    %452 = arith.addf %446, %451 : vector<4x128xf32>
    %c0_166 = arith.constant 0 : index
    %c2_167 = arith.constant 2 : index
    %453 = vector.load %arg14[%c0_166, %c2_167] : memref<4x8xf32, #tpu.memory_space<vmem>>, vector<4x1xf32>
    %454 = vector.extract_strided_slice %436 {offsets = [2, 0], sizes = [1, 128], strides = [1, 1]} : vector<8x128xf32> to vector<1x128xf32>
    %455 = vector.broadcast %453 : vector<4x1xf32> to vector<4x128xf32>
    %456 = vector.broadcast %454 : vector<1x128xf32> to vector<4x128xf32>
    %457 = arith.mulf %455, %456 : vector<4x128xf32>
    %458 = arith.addf %452, %457 : vector<4x128xf32>
    %c0_168 = arith.constant 0 : index
    %c3_169 = arith.constant 3 : index
    %459 = vector.load %arg14[%c0_168, %c3_169] : memref<4x8xf32, #tpu.memory_space<vmem>>, vector<4x1xf32>
    %460 = vector.extract_strided_slice %436 {offsets = [3, 0], sizes = [1, 128], strides = [1, 1]} : vector<8x128xf32> to vector<1x128xf32>
    %461 = vector.broadcast %459 : vector<4x1xf32> to vector<4x128xf32>
    %462 = vector.broadcast %460 : vector<1x128xf32> to vector<4x128xf32>
    %463 = arith.mulf %461, %462 : vector<4x128xf32>
    %464 = arith.addf %458, %463 : vector<4x128xf32>
    %c0_170 = arith.constant 0 : index
    %c4_171 = arith.constant 4 : index
    %465 = vector.load %arg14[%c0_170, %c4_171] : memref<4x8xf32, #tpu.memory_space<vmem>>, vector<4x1xf32>
    %466 = vector.extract_strided_slice %436 {offsets = [4, 0], sizes = [1, 128], strides = [1, 1]} : vector<8x128xf32> to vector<1x128xf32>
    %467 = vector.broadcast %465 : vector<4x1xf32> to vector<4x128xf32>
    %468 = vector.broadcast %466 : vector<1x128xf32> to vector<4x128xf32>
    %469 = arith.mulf %467, %468 : vector<4x128xf32>
    %470 = arith.addf %464, %469 : vector<4x128xf32>
    %c0_172 = arith.constant 0 : index
    %c5_173 = arith.constant 5 : index
    %471 = vector.load %arg14[%c0_172, %c5_173] : memref<4x8xf32, #tpu.memory_space<vmem>>, vector<4x1xf32>
    %472 = vector.extract_strided_slice %436 {offsets = [5, 0], sizes = [1, 128], strides = [1, 1]} : vector<8x128xf32> to vector<1x128xf32>
    %473 = vector.broadcast %471 : vector<4x1xf32> to vector<4x128xf32>
    %474 = vector.broadcast %472 : vector<1x128xf32> to vector<4x128xf32>
    %475 = arith.mulf %473, %474 : vector<4x128xf32>
    %476 = arith.addf %470, %475 : vector<4x128xf32>
    %c0_174 = arith.constant 0 : index
    %c6_175 = arith.constant 6 : index
    %477 = vector.load %arg14[%c0_174, %c6_175] : memref<4x8xf32, #tpu.memory_space<vmem>>, vector<4x1xf32>
    %478 = vector.extract_strided_slice %436 {offsets = [6, 0], sizes = [1, 128], strides = [1, 1]} : vector<8x128xf32> to vector<1x128xf32>
    %479 = vector.broadcast %477 : vector<4x1xf32> to vector<4x128xf32>
    %480 = vector.broadcast %478 : vector<1x128xf32> to vector<4x128xf32>
    %481 = arith.mulf %479, %480 : vector<4x128xf32>
    %482 = arith.addf %476, %481 : vector<4x128xf32>
    %c0_176 = arith.constant 0 : index
    %c7_177 = arith.constant 7 : index
    %483 = vector.load %arg14[%c0_176, %c7_177] : memref<4x8xf32, #tpu.memory_space<vmem>>, vector<4x1xf32>
    %484 = vector.extract_strided_slice %436 {offsets = [7, 0], sizes = [1, 128], strides = [1, 1]} : vector<8x128xf32> to vector<1x128xf32>
    %485 = vector.broadcast %483 : vector<4x1xf32> to vector<4x128xf32>
    %486 = vector.broadcast %484 : vector<1x128xf32> to vector<4x128xf32>
    %487 = arith.mulf %485, %486 : vector<4x128xf32>
    %488 = arith.addf %482, %487 : vector<4x128xf32>
    %cst_178 = arith.constant 0.000000e+00 : f32
    %489 = vector.broadcast %cst_178 : f32 to vector<4x128xf32>
    %490 = arith.maximumf %488, %489 : vector<4x128xf32>
    %c12_179 = arith.constant 12 : index
    %c2_180 = arith.constant 2 : index
    %491 = vector.load %arg30[%c12_179, %c2_180] : memref<16x132xf32, #tpu.memory_space<vmem>>, vector<4x128xf32>
    tpu.vector_store %arg30[%c12_179, %c2_180], %490 {strides = array<i32>} : memref<16x132xf32, #tpu.memory_space<vmem>>, vector<4x128xf32>,
    %c0_181 = arith.constant 0 : index
    %c0_182 = arith.constant 0 : index
    %492 = vector.load %arg30[%c0_181, %c0_182] : memref<16x132xf32, #tpu.memory_space<vmem>>, vector<16x132xf32>
    %493 = vector.extract_strided_slice %492 {offsets = [0, 2], sizes = [16, 128], strides = [1, 1]} : vector<16x132xf32> to vector<16x128xf32>
    %cst_183 = arith.constant 0.000000e+00 : f32
    %494 = vector.broadcast %cst_183 : f32 to vector<4x128xf32>
    %c0_184 = arith.constant 0 : index
    %c0_185 = arith.constant 0 : index
    %495 = vector.load %arg17[%c0_184, %c0_185] : memref<4x1xf32, #tpu.memory_space<vmem>>, vector<4x1xf32>
    %496 = vector.broadcast %495 : vector<4x1xf32> to vector<4x128xf32>
    %497 = arith.addf %494, %496 : vector<4x128xf32>
    %c0_186 = arith.constant 0 : index
    %c0_187 = arith.constant 0 : index
    %498 = vector.load %arg16[%c0_186, %c0_187] : memref<4x16xf32, #tpu.memory_space<vmem>>, vector<4x1xf32>
    %499 = vector.extract_strided_slice %493 {offsets = [0, 0], sizes = [1, 128], strides = [1, 1]} : vector<16x128xf32> to vector<1x128xf32>
    %500 = vector.broadcast %498 : vector<4x1xf32> to vector<4x128xf32>
    %501 = vector.broadcast %499 : vector<1x128xf32> to vector<4x128xf32>
    %502 = arith.mulf %500, %501 : vector<4x128xf32>
    %503 = arith.addf %497, %502 : vector<4x128xf32>
    %c0_188 = arith.constant 0 : index
    %c1_189 = arith.constant 1 : index
    %504 = vector.load %arg16[%c0_188, %c1_189] : memref<4x16xf32, #tpu.memory_space<vmem>>, vector<4x1xf32>
    %505 = vector.extract_strided_slice %493 {offsets = [1, 0], sizes = [1, 128], strides = [1, 1]} : vector<16x128xf32> to vector<1x128xf32>
    %506 = vector.broadcast %504 : vector<4x1xf32> to vector<4x128xf32>
    %507 = vector.broadcast %505 : vector<1x128xf32> to vector<4x128xf32>
    %508 = arith.mulf %506, %507 : vector<4x128xf32>
    %509 = arith.addf %503, %508 : vector<4x128xf32>
    %c0_190 = arith.constant 0 : index
    %c2_191 = arith.constant 2 : index
    %510 = vector.load %arg16[%c0_190, %c2_191] : memref<4x16xf32, #tpu.memory_space<vmem>>, vector<4x1xf32>
    %511 = vector.extract_strided_slice %493 {offsets = [2, 0], sizes = [1, 128], strides = [1, 1]} : vector<16x128xf32> to vector<1x128xf32>
    %512 = vector.broadcast %510 : vector<4x1xf32> to vector<4x128xf32>
    %513 = vector.broadcast %511 : vector<1x128xf32> to vector<4x128xf32>
    %514 = arith.mulf %512, %513 : vector<4x128xf32>
    %515 = arith.addf %509, %514 : vector<4x128xf32>
    %c0_192 = arith.constant 0 : index
    %c3_193 = arith.constant 3 : index
    %516 = vector.load %arg16[%c0_192, %c3_193] : memref<4x16xf32, #tpu.memory_space<vmem>>, vector<4x1xf32>
    %517 = vector.extract_strided_slice %493 {offsets = [3, 0], sizes = [1, 128], strides = [1, 1]} : vector<16x128xf32> to vector<1x128xf32>
    %518 = vector.broadcast %516 : vector<4x1xf32> to vector<4x128xf32>
    %519 = vector.broadcast %517 : vector<1x128xf32> to vector<4x128xf32>
    %520 = arith.mulf %518, %519 : vector<4x128xf32>
    %521 = arith.addf %515, %520 : vector<4x128xf32>
    %c0_194 = arith.constant 0 : index
    %c4_195 = arith.constant 4 : index
    %522 = vector.load %arg16[%c0_194, %c4_195] : memref<4x16xf32, #tpu.memory_space<vmem>>, vector<4x1xf32>
    %523 = vector.extract_strided_slice %493 {offsets = [4, 0], sizes = [1, 128], strides = [1, 1]} : vector<16x128xf32> to vector<1x128xf32>
    %524 = vector.broadcast %522 : vector<4x1xf32> to vector<4x128xf32>
    %525 = vector.broadcast %523 : vector<1x128xf32> to vector<4x128xf32>
    %526 = arith.mulf %524, %525 : vector<4x128xf32>
    %527 = arith.addf %521, %526 : vector<4x128xf32>
    %c0_196 = arith.constant 0 : index
    %c5_197 = arith.constant 5 : index
    %528 = vector.load %arg16[%c0_196, %c5_197] : memref<4x16xf32, #tpu.memory_space<vmem>>, vector<4x1xf32>
    %529 = vector.extract_strided_slice %493 {offsets = [5, 0], sizes = [1, 128], strides = [1, 1]} : vector<16x128xf32> to vector<1x128xf32>
    %530 = vector.broadcast %528 : vector<4x1xf32> to vector<4x128xf32>
    %531 = vector.broadcast %529 : vector<1x128xf32> to vector<4x128xf32>
    %532 = arith.mulf %530, %531 : vector<4x128xf32>
    %533 = arith.addf %527, %532 : vector<4x128xf32>
    %c0_198 = arith.constant 0 : index
    %c6_199 = arith.constant 6 : index
    %534 = vector.load %arg16[%c0_198, %c6_199] : memref<4x16xf32, #tpu.memory_space<vmem>>, vector<4x1xf32>
    %535 = vector.extract_strided_slice %493 {offsets = [6, 0], sizes = [1, 128], strides = [1, 1]} : vector<16x128xf32> to vector<1x128xf32>
    %536 = vector.broadcast %534 : vector<4x1xf32> to vector<4x128xf32>
    %537 = vector.broadcast %535 : vector<1x128xf32> to vector<4x128xf32>
    %538 = arith.mulf %536, %537 : vector<4x128xf32>
    %539 = arith.addf %533, %538 : vector<4x128xf32>
    %c0_200 = arith.constant 0 : index
    %c7_201 = arith.constant 7 : index
    %540 = vector.load %arg16[%c0_200, %c7_201] : memref<4x16xf32, #tpu.memory_space<vmem>>, vector<4x1xf32>
    %541 = vector.extract_strided_slice %493 {offsets = [7, 0], sizes = [1, 128], strides = [1, 1]} : vector<16x128xf32> to vector<1x128xf32>
    %542 = vector.broadcast %540 : vector<4x1xf32> to vector<4x128xf32>
    %543 = vector.broadcast %541 : vector<1x128xf32> to vector<4x128xf32>
    %544 = arith.mulf %542, %543 : vector<4x128xf32>
    %545 = arith.addf %539, %544 : vector<4x128xf32>
    %c0_202 = arith.constant 0 : index
    %c8_203 = arith.constant 8 : index
    %546 = vector.load %arg16[%c0_202, %c8_203] : memref<4x16xf32, #tpu.memory_space<vmem>>, vector<4x1xf32>
    %547 = vector.extract_strided_slice %493 {offsets = [8, 0], sizes = [1, 128], strides = [1, 1]} : vector<16x128xf32> to vector<1x128xf32>
    %548 = vector.broadcast %546 : vector<4x1xf32> to vector<4x128xf32>
    %549 = vector.broadcast %547 : vector<1x128xf32> to vector<4x128xf32>
    %550 = arith.mulf %548, %549 : vector<4x128xf32>
    %551 = arith.addf %545, %550 : vector<4x128xf32>
    %c0_204 = arith.constant 0 : index
    %c9_205 = arith.constant 9 : index
    %552 = vector.load %arg16[%c0_204, %c9_205] : memref<4x16xf32, #tpu.memory_space<vmem>>, vector<4x1xf32>
    %553 = vector.extract_strided_slice %493 {offsets = [9, 0], sizes = [1, 128], strides = [1, 1]} : vector<16x128xf32> to vector<1x128xf32>
    %554 = vector.broadcast %552 : vector<4x1xf32> to vector<4x128xf32>
    %555 = vector.broadcast %553 : vector<1x128xf32> to vector<4x128xf32>
    %556 = arith.mulf %554, %555 : vector<4x128xf32>
    %557 = arith.addf %551, %556 : vector<4x128xf32>
    %c0_206 = arith.constant 0 : index
    %c10_207 = arith.constant 10 : index
    %558 = vector.load %arg16[%c0_206, %c10_207] : memref<4x16xf32, #tpu.memory_space<vmem>>, vector<4x1xf32>
    %559 = vector.extract_strided_slice %493 {offsets = [10, 0], sizes = [1, 128], strides = [1, 1]} : vector<16x128xf32> to vector<1x128xf32>
    %560 = vector.broadcast %558 : vector<4x1xf32> to vector<4x128xf32>
    %561 = vector.broadcast %559 : vector<1x128xf32> to vector<4x128xf32>
    %562 = arith.mulf %560, %561 : vector<4x128xf32>
    %563 = arith.addf %557, %562 : vector<4x128xf32>
    %c0_208 = arith.constant 0 : index
    %c11_209 = arith.constant 11 : index
    %564 = vector.load %arg16[%c0_208, %c11_209] : memref<4x16xf32, #tpu.memory_space<vmem>>, vector<4x1xf32>
    %565 = vector.extract_strided_slice %493 {offsets = [11, 0], sizes = [1, 128], strides = [1, 1]} : vector<16x128xf32> to vector<1x128xf32>
    %566 = vector.broadcast %564 : vector<4x1xf32> to vector<4x128xf32>
    %567 = vector.broadcast %565 : vector<1x128xf32> to vector<4x128xf32>
    %568 = arith.mulf %566, %567 : vector<4x128xf32>
    %569 = arith.addf %563, %568 : vector<4x128xf32>
    %c0_210 = arith.constant 0 : index
    %c12_211 = arith.constant 12 : index
    %570 = vector.load %arg16[%c0_210, %c12_211] : memref<4x16xf32, #tpu.memory_space<vmem>>, vector<4x1xf32>
    %571 = vector.extract_strided_slice %493 {offsets = [12, 0], sizes = [1, 128], strides = [1, 1]} : vector<16x128xf32> to vector<1x128xf32>
    %572 = vector.broadcast %570 : vector<4x1xf32> to vector<4x128xf32>
    %573 = vector.broadcast %571 : vector<1x128xf32> to vector<4x128xf32>
    %574 = arith.mulf %572, %573 : vector<4x128xf32>
    %575 = arith.addf %569, %574 : vector<4x128xf32>
    %c0_212 = arith.constant 0 : index
    %c13_213 = arith.constant 13 : index
    %576 = vector.load %arg16[%c0_212, %c13_213] : memref<4x16xf32, #tpu.memory_space<vmem>>, vector<4x1xf32>
    %577 = vector.extract_strided_slice %493 {offsets = [13, 0], sizes = [1, 128], strides = [1, 1]} : vector<16x128xf32> to vector<1x128xf32>
    %578 = vector.broadcast %576 : vector<4x1xf32> to vector<4x128xf32>
    %579 = vector.broadcast %577 : vector<1x128xf32> to vector<4x128xf32>
    %580 = arith.mulf %578, %579 : vector<4x128xf32>
    %581 = arith.addf %575, %580 : vector<4x128xf32>
    %c0_214 = arith.constant 0 : index
    %c14_215 = arith.constant 14 : index
    %582 = vector.load %arg16[%c0_214, %c14_215] : memref<4x16xf32, #tpu.memory_space<vmem>>, vector<4x1xf32>
    %583 = vector.extract_strided_slice %493 {offsets = [14, 0], sizes = [1, 128], strides = [1, 1]} : vector<16x128xf32> to vector<1x128xf32>
    %584 = vector.broadcast %582 : vector<4x1xf32> to vector<4x128xf32>
    %585 = vector.broadcast %583 : vector<1x128xf32> to vector<4x128xf32>
    %586 = arith.mulf %584, %585 : vector<4x128xf32>
    %587 = arith.addf %581, %586 : vector<4x128xf32>
    %c0_216 = arith.constant 0 : index
    %c15_217 = arith.constant 15 : index
    %588 = vector.load %arg16[%c0_216, %c15_217] : memref<4x16xf32, #tpu.memory_space<vmem>>, vector<4x1xf32>
    %589 = vector.extract_strided_slice %493 {offsets = [15, 0], sizes = [1, 128], strides = [1, 1]} : vector<16x128xf32> to vector<1x128xf32>
    %590 = vector.broadcast %588 : vector<4x1xf32> to vector<4x128xf32>
    %591 = vector.broadcast %589 : vector<1x128xf32> to vector<4x128xf32>
    %592 = arith.mulf %590, %591 : vector<4x128xf32>
    %593 = arith.addf %587, %592 : vector<4x128xf32>
    %cst_218 = arith.constant 0.000000e+00 : f32
    %594 = vector.broadcast %cst_218 : f32 to vector<4x128xf32>
    %595 = arith.maximumf %593, %594 : vector<4x128xf32>
    %c0_219 = arith.constant 0 : index
    %c0_220 = arith.constant 0 : index
    %c0_221 = arith.constant 0 : index
    %596 = vector.load %arg28[%c0_219, %c0_220, %c0_221] : memref<1x16x128xf32, #tpu.memory_space<vmem>>, vector<1x4x128xf32>
    %597 = vector.shape_cast %596 : vector<1x4x128xf32> to vector<4x128xf32>
    %598 = vector.shape_cast %595 : vector<4x128xf32> to vector<1x4x128xf32>
    tpu.vector_store %arg28[%c0_219, %c0_220, %c0_221], %598 {strides = array<i32>} : memref<1x16x128xf32, #tpu.memory_space<vmem>>, vector<1x4x128xf32>,
    %cst_222 = arith.constant 0.000000e+00 : f32
    %599 = vector.broadcast %cst_222 : f32 to vector<4x128xf32>
    %c0_223 = arith.constant 0 : index
    %c0_224 = arith.constant 0 : index
    %600 = vector.load %arg19[%c0_223, %c0_224] : memref<4x1xf32, #tpu.memory_space<vmem>>, vector<4x1xf32>
    %601 = vector.broadcast %600 : vector<4x1xf32> to vector<4x128xf32>
    %602 = arith.addf %599, %601 : vector<4x128xf32>
    %c0_225 = arith.constant 0 : index
    %c0_226 = arith.constant 0 : index
    %603 = vector.load %arg18[%c0_225, %c0_226] : memref<4x16xf32, #tpu.memory_space<vmem>>, vector<4x1xf32>
    %604 = vector.extract_strided_slice %493 {offsets = [0, 0], sizes = [1, 128], strides = [1, 1]} : vector<16x128xf32> to vector<1x128xf32>
    %605 = vector.broadcast %603 : vector<4x1xf32> to vector<4x128xf32>
    %606 = vector.broadcast %604 : vector<1x128xf32> to vector<4x128xf32>
    %607 = arith.mulf %605, %606 : vector<4x128xf32>
    %608 = arith.addf %602, %607 : vector<4x128xf32>
    %c0_227 = arith.constant 0 : index
    %c1_228 = arith.constant 1 : index
    %609 = vector.load %arg18[%c0_227, %c1_228] : memref<4x16xf32, #tpu.memory_space<vmem>>, vector<4x1xf32>
    %610 = vector.extract_strided_slice %493 {offsets = [1, 0], sizes = [1, 128], strides = [1, 1]} : vector<16x128xf32> to vector<1x128xf32>
    %611 = vector.broadcast %609 : vector<4x1xf32> to vector<4x128xf32>
    %612 = vector.broadcast %610 : vector<1x128xf32> to vector<4x128xf32>
    %613 = arith.mulf %611, %612 : vector<4x128xf32>
    %614 = arith.addf %608, %613 : vector<4x128xf32>
    %c0_229 = arith.constant 0 : index
    %c2_230 = arith.constant 2 : index
    %615 = vector.load %arg18[%c0_229, %c2_230] : memref<4x16xf32, #tpu.memory_space<vmem>>, vector<4x1xf32>
    %616 = vector.extract_strided_slice %493 {offsets = [2, 0], sizes = [1, 128], strides = [1, 1]} : vector<16x128xf32> to vector<1x128xf32>
    %617 = vector.broadcast %615 : vector<4x1xf32> to vector<4x128xf32>
    %618 = vector.broadcast %616 : vector<1x128xf32> to vector<4x128xf32>
    %619 = arith.mulf %617, %618 : vector<4x128xf32>
    %620 = arith.addf %614, %619 : vector<4x128xf32>
    %c0_231 = arith.constant 0 : index
    %c3_232 = arith.constant 3 : index
    %621 = vector.load %arg18[%c0_231, %c3_232] : memref<4x16xf32, #tpu.memory_space<vmem>>, vector<4x1xf32>
    %622 = vector.extract_strided_slice %493 {offsets = [3, 0], sizes = [1, 128], strides = [1, 1]} : vector<16x128xf32> to vector<1x128xf32>
    %623 = vector.broadcast %621 : vector<4x1xf32> to vector<4x128xf32>
    %624 = vector.broadcast %622 : vector<1x128xf32> to vector<4x128xf32>
    %625 = arith.mulf %623, %624 : vector<4x128xf32>
    %626 = arith.addf %620, %625 : vector<4x128xf32>
    %c0_233 = arith.constant 0 : index
    %c4_234 = arith.constant 4 : index
    %627 = vector.load %arg18[%c0_233, %c4_234] : memref<4x16xf32, #tpu.memory_space<vmem>>, vector<4x1xf32>
    %628 = vector.extract_strided_slice %493 {offsets = [4, 0], sizes = [1, 128], strides = [1, 1]} : vector<16x128xf32> to vector<1x128xf32>
    %629 = vector.broadcast %627 : vector<4x1xf32> to vector<4x128xf32>
    %630 = vector.broadcast %628 : vector<1x128xf32> to vector<4x128xf32>
    %631 = arith.mulf %629, %630 : vector<4x128xf32>
    %632 = arith.addf %626, %631 : vector<4x128xf32>
    %c0_235 = arith.constant 0 : index
    %c5_236 = arith.constant 5 : index
    %633 = vector.load %arg18[%c0_235, %c5_236] : memref<4x16xf32, #tpu.memory_space<vmem>>, vector<4x1xf32>
    %634 = vector.extract_strided_slice %493 {offsets = [5, 0], sizes = [1, 128], strides = [1, 1]} : vector<16x128xf32> to vector<1x128xf32>
    %635 = vector.broadcast %633 : vector<4x1xf32> to vector<4x128xf32>
    %636 = vector.broadcast %634 : vector<1x128xf32> to vector<4x128xf32>
    %637 = arith.mulf %635, %636 : vector<4x128xf32>
    %638 = arith.addf %632, %637 : vector<4x128xf32>
    %c0_237 = arith.constant 0 : index
    %c6_238 = arith.constant 6 : index
    %639 = vector.load %arg18[%c0_237, %c6_238] : memref<4x16xf32, #tpu.memory_space<vmem>>, vector<4x1xf32>
    %640 = vector.extract_strided_slice %493 {offsets = [6, 0], sizes = [1, 128], strides = [1, 1]} : vector<16x128xf32> to vector<1x128xf32>
    %641 = vector.broadcast %639 : vector<4x1xf32> to vector<4x128xf32>
    %642 = vector.broadcast %640 : vector<1x128xf32> to vector<4x128xf32>
    %643 = arith.mulf %641, %642 : vector<4x128xf32>
    %644 = arith.addf %638, %643 : vector<4x128xf32>
    %c0_239 = arith.constant 0 : index
    %c7_240 = arith.constant 7 : index
    %645 = vector.load %arg18[%c0_239, %c7_240] : memref<4x16xf32, #tpu.memory_space<vmem>>, vector<4x1xf32>
    %646 = vector.extract_strided_slice %493 {offsets = [7, 0], sizes = [1, 128], strides = [1, 1]} : vector<16x128xf32> to vector<1x128xf32>
    %647 = vector.broadcast %645 : vector<4x1xf32> to vector<4x128xf32>
    %648 = vector.broadcast %646 : vector<1x128xf32> to vector<4x128xf32>
    %649 = arith.mulf %647, %648 : vector<4x128xf32>
    %650 = arith.addf %644, %649 : vector<4x128xf32>
    %c0_241 = arith.constant 0 : index
    %c8_242 = arith.constant 8 : index
    %651 = vector.load %arg18[%c0_241, %c8_242] : memref<4x16xf32, #tpu.memory_space<vmem>>, vector<4x1xf32>
    %652 = vector.extract_strided_slice %493 {offsets = [8, 0], sizes = [1, 128], strides = [1, 1]} : vector<16x128xf32> to vector<1x128xf32>
    %653 = vector.broadcast %651 : vector<4x1xf32> to vector<4x128xf32>
    %654 = vector.broadcast %652 : vector<1x128xf32> to vector<4x128xf32>
    %655 = arith.mulf %653, %654 : vector<4x128xf32>
    %656 = arith.addf %650, %655 : vector<4x128xf32>
    %c0_243 = arith.constant 0 : index
    %c9_244 = arith.constant 9 : index
    %657 = vector.load %arg18[%c0_243, %c9_244] : memref<4x16xf32, #tpu.memory_space<vmem>>, vector<4x1xf32>
    %658 = vector.extract_strided_slice %493 {offsets = [9, 0], sizes = [1, 128], strides = [1, 1]} : vector<16x128xf32> to vector<1x128xf32>
    %659 = vector.broadcast %657 : vector<4x1xf32> to vector<4x128xf32>
    %660 = vector.broadcast %658 : vector<1x128xf32> to vector<4x128xf32>
    %661 = arith.mulf %659, %660 : vector<4x128xf32>
    %662 = arith.addf %656, %661 : vector<4x128xf32>
    %c0_245 = arith.constant 0 : index
    %c10_246 = arith.constant 10 : index
    %663 = vector.load %arg18[%c0_245, %c10_246] : memref<4x16xf32, #tpu.memory_space<vmem>>, vector<4x1xf32>
    %664 = vector.extract_strided_slice %493 {offsets = [10, 0], sizes = [1, 128], strides = [1, 1]} : vector<16x128xf32> to vector<1x128xf32>
    %665 = vector.broadcast %663 : vector<4x1xf32> to vector<4x128xf32>
    %666 = vector.broadcast %664 : vector<1x128xf32> to vector<4x128xf32>
    %667 = arith.mulf %665, %666 : vector<4x128xf32>
    %668 = arith.addf %662, %667 : vector<4x128xf32>
    %c0_247 = arith.constant 0 : index
    %c11_248 = arith.constant 11 : index
    %669 = vector.load %arg18[%c0_247, %c11_248] : memref<4x16xf32, #tpu.memory_space<vmem>>, vector<4x1xf32>
    %670 = vector.extract_strided_slice %493 {offsets = [11, 0], sizes = [1, 128], strides = [1, 1]} : vector<16x128xf32> to vector<1x128xf32>
    %671 = vector.broadcast %669 : vector<4x1xf32> to vector<4x128xf32>
    %672 = vector.broadcast %670 : vector<1x128xf32> to vector<4x128xf32>
    %673 = arith.mulf %671, %672 : vector<4x128xf32>
    %674 = arith.addf %668, %673 : vector<4x128xf32>
    %c0_249 = arith.constant 0 : index
    %c12_250 = arith.constant 12 : index
    %675 = vector.load %arg18[%c0_249, %c12_250] : memref<4x16xf32, #tpu.memory_space<vmem>>, vector<4x1xf32>
    %676 = vector.extract_strided_slice %493 {offsets = [12, 0], sizes = [1, 128], strides = [1, 1]} : vector<16x128xf32> to vector<1x128xf32>
    %677 = vector.broadcast %675 : vector<4x1xf32> to vector<4x128xf32>
    %678 = vector.broadcast %676 : vector<1x128xf32> to vector<4x128xf32>
    %679 = arith.mulf %677, %678 : vector<4x128xf32>
    %680 = arith.addf %674, %679 : vector<4x128xf32>
    %c0_251 = arith.constant 0 : index
    %c13_252 = arith.constant 13 : index
    %681 = vector.load %arg18[%c0_251, %c13_252] : memref<4x16xf32, #tpu.memory_space<vmem>>, vector<4x1xf32>
    %682 = vector.extract_strided_slice %493 {offsets = [13, 0], sizes = [1, 128], strides = [1, 1]} : vector<16x128xf32> to vector<1x128xf32>
    %683 = vector.broadcast %681 : vector<4x1xf32> to vector<4x128xf32>
    %684 = vector.broadcast %682 : vector<1x128xf32> to vector<4x128xf32>
    %685 = arith.mulf %683, %684 : vector<4x128xf32>
    %686 = arith.addf %680, %685 : vector<4x128xf32>
    %c0_253 = arith.constant 0 : index
    %c14_254 = arith.constant 14 : index
    %687 = vector.load %arg18[%c0_253, %c14_254] : memref<4x16xf32, #tpu.memory_space<vmem>>, vector<4x1xf32>
    %688 = vector.extract_strided_slice %493 {offsets = [14, 0], sizes = [1, 128], strides = [1, 1]} : vector<16x128xf32> to vector<1x128xf32>
    %689 = vector.broadcast %687 : vector<4x1xf32> to vector<4x128xf32>
    %690 = vector.broadcast %688 : vector<1x128xf32> to vector<4x128xf32>
    %691 = arith.mulf %689, %690 : vector<4x128xf32>
    %692 = arith.addf %686, %691 : vector<4x128xf32>
    %c0_255 = arith.constant 0 : index
    %c15_256 = arith.constant 15 : index
    %693 = vector.load %arg18[%c0_255, %c15_256] : memref<4x16xf32, #tpu.memory_space<vmem>>, vector<4x1xf32>
    %694 = vector.extract_strided_slice %493 {offsets = [15, 0], sizes = [1, 128], strides = [1, 1]} : vector<16x128xf32> to vector<1x128xf32>
    %695 = vector.broadcast %693 : vector<4x1xf32> to vector<4x128xf32>
    %696 = vector.broadcast %694 : vector<1x128xf32> to vector<4x128xf32>
    %697 = arith.mulf %695, %696 : vector<4x128xf32>
    %698 = arith.addf %692, %697 : vector<4x128xf32>
    %cst_257 = arith.constant 0.000000e+00 : f32
    %699 = vector.broadcast %cst_257 : f32 to vector<4x128xf32>
    %700 = arith.maximumf %698, %699 : vector<4x128xf32>
    %c0_258 = arith.constant 0 : index
    %c2_259 = arith.constant 2 : index
    %701 = vector.load %arg31[%c0_258, %c2_259] : memref<4x132xf32, #tpu.memory_space<vmem>>, vector<4x128xf32>
    tpu.vector_store %arg31[%c0_258, %c2_259], %700 {strides = array<i32>} : memref<4x132xf32, #tpu.memory_space<vmem>>, vector<4x128xf32>,
    %c0_260 = arith.constant 0 : index
    %c0_261 = arith.constant 0 : index
    %702 = vector.load %arg31[%c0_260, %c0_261] : memref<4x132xf32, #tpu.memory_space<vmem>>, vector<4x132xf32>
    %cst_262 = arith.constant 0.000000e+00 : f32
    %703 = vector.broadcast %cst_262 : f32 to vector<4x128xf32>
    %c0_263 = arith.constant 0 : index
    %c0_264 = arith.constant 0 : index
    %704 = vector.load %arg21[%c0_263, %c0_264] : memref<4x1xf32, #tpu.memory_space<vmem>>, vector<4x1xf32>
    %705 = vector.broadcast %704 : vector<4x1xf32> to vector<4x128xf32>
    %706 = arith.addf %703, %705 : vector<4x128xf32>
    %c0_265 = arith.constant 0 : index
    %c0_266 = arith.constant 0 : index
    %707 = vector.load %arg20[%c0_265, %c0_266] : memref<4x12xf32, #tpu.memory_space<vmem>>, vector<4x1xf32>
    %708 = vector.extract_strided_slice %702 {offsets = [0, 1], sizes = [1, 128], strides = [1, 1]} : vector<4x132xf32> to vector<1x128xf32>
    %709 = vector.broadcast %707 : vector<4x1xf32> to vector<4x128xf32>
    %710 = vector.broadcast %708 : vector<1x128xf32> to vector<4x128xf32>
    %711 = arith.mulf %709, %710 : vector<4x128xf32>
    %712 = arith.addf %706, %711 : vector<4x128xf32>
    %c0_267 = arith.constant 0 : index
    %c1_268 = arith.constant 1 : index
    %713 = vector.load %arg20[%c0_267, %c1_268] : memref<4x12xf32, #tpu.memory_space<vmem>>, vector<4x1xf32>
    %714 = vector.extract_strided_slice %702 {offsets = [0, 2], sizes = [1, 128], strides = [1, 1]} : vector<4x132xf32> to vector<1x128xf32>
    %715 = vector.broadcast %713 : vector<4x1xf32> to vector<4x128xf32>
    %716 = vector.broadcast %714 : vector<1x128xf32> to vector<4x128xf32>
    %717 = arith.mulf %715, %716 : vector<4x128xf32>
    %718 = arith.addf %712, %717 : vector<4x128xf32>
    %c0_269 = arith.constant 0 : index
    %c2_270 = arith.constant 2 : index
    %719 = vector.load %arg20[%c0_269, %c2_270] : memref<4x12xf32, #tpu.memory_space<vmem>>, vector<4x1xf32>
    %720 = vector.extract_strided_slice %702 {offsets = [0, 3], sizes = [1, 128], strides = [1, 1]} : vector<4x132xf32> to vector<1x128xf32>
    %721 = vector.broadcast %719 : vector<4x1xf32> to vector<4x128xf32>
    %722 = vector.broadcast %720 : vector<1x128xf32> to vector<4x128xf32>
    %723 = arith.mulf %721, %722 : vector<4x128xf32>
    %724 = arith.addf %718, %723 : vector<4x128xf32>
    %c0_271 = arith.constant 0 : index
    %c3_272 = arith.constant 3 : index
    %725 = vector.load %arg20[%c0_271, %c3_272] : memref<4x12xf32, #tpu.memory_space<vmem>>, vector<4x1xf32>
    %726 = vector.extract_strided_slice %702 {offsets = [1, 1], sizes = [1, 128], strides = [1, 1]} : vector<4x132xf32> to vector<1x128xf32>
    %727 = vector.broadcast %725 : vector<4x1xf32> to vector<4x128xf32>
    %728 = vector.broadcast %726 : vector<1x128xf32> to vector<4x128xf32>
    %729 = arith.mulf %727, %728 : vector<4x128xf32>
    %730 = arith.addf %724, %729 : vector<4x128xf32>
    %c0_273 = arith.constant 0 : index
    %c4_274 = arith.constant 4 : index
    %731 = vector.load %arg20[%c0_273, %c4_274] : memref<4x12xf32, #tpu.memory_space<vmem>>, vector<4x1xf32>
    %732 = vector.extract_strided_slice %702 {offsets = [1, 2], sizes = [1, 128], strides = [1, 1]} : vector<4x132xf32> to vector<1x128xf32>
    %733 = vector.broadcast %731 : vector<4x1xf32> to vector<4x128xf32>
    %734 = vector.broadcast %732 : vector<1x128xf32> to vector<4x128xf32>
    %735 = arith.mulf %733, %734 : vector<4x128xf32>
    %736 = arith.addf %730, %735 : vector<4x128xf32>
    %c0_275 = arith.constant 0 : index
    %c5_276 = arith.constant 5 : index
    %737 = vector.load %arg20[%c0_275, %c5_276] : memref<4x12xf32, #tpu.memory_space<vmem>>, vector<4x1xf32>
    %738 = vector.extract_strided_slice %702 {offsets = [1, 3], sizes = [1, 128], strides = [1, 1]} : vector<4x132xf32> to vector<1x128xf32>
    %739 = vector.broadcast %737 : vector<4x1xf32> to vector<4x128xf32>
    %740 = vector.broadcast %738 : vector<1x128xf32> to vector<4x128xf32>
    %741 = arith.mulf %739, %740 : vector<4x128xf32>
    %742 = arith.addf %736, %741 : vector<4x128xf32>
    %c0_277 = arith.constant 0 : index
    %c6_278 = arith.constant 6 : index
    %743 = vector.load %arg20[%c0_277, %c6_278] : memref<4x12xf32, #tpu.memory_space<vmem>>, vector<4x1xf32>
    %744 = vector.extract_strided_slice %702 {offsets = [2, 1], sizes = [1, 128], strides = [1, 1]} : vector<4x132xf32> to vector<1x128xf32>
    %745 = vector.broadcast %743 : vector<4x1xf32> to vector<4x128xf32>
    %746 = vector.broadcast %744 : vector<1x128xf32> to vector<4x128xf32>
    %747 = arith.mulf %745, %746 : vector<4x128xf32>
    %748 = arith.addf %742, %747 : vector<4x128xf32>
    %c0_279 = arith.constant 0 : index
    %c7_280 = arith.constant 7 : index
    %749 = vector.load %arg20[%c0_279, %c7_280] : memref<4x12xf32, #tpu.memory_space<vmem>>, vector<4x1xf32>
    %750 = vector.extract_strided_slice %702 {offsets = [2, 2], sizes = [1, 128], strides = [1, 1]} : vector<4x132xf32> to vector<1x128xf32>
    %751 = vector.broadcast %749 : vector<4x1xf32> to vector<4x128xf32>
    %752 = vector.broadcast %750 : vector<1x128xf32> to vector<4x128xf32>
    %753 = arith.mulf %751, %752 : vector<4x128xf32>
    %754 = arith.addf %748, %753 : vector<4x128xf32>
    %c0_281 = arith.constant 0 : index
    %c8_282 = arith.constant 8 : index
    %755 = vector.load %arg20[%c0_281, %c8_282] : memref<4x12xf32, #tpu.memory_space<vmem>>, vector<4x1xf32>
    %756 = vector.extract_strided_slice %702 {offsets = [2, 3], sizes = [1, 128], strides = [1, 1]} : vector<4x132xf32> to vector<1x128xf32>
    %757 = vector.broadcast %755 : vector<4x1xf32> to vector<4x128xf32>
    %758 = vector.broadcast %756 : vector<1x128xf32> to vector<4x128xf32>
    %759 = arith.mulf %757, %758 : vector<4x128xf32>
    %760 = arith.addf %754, %759 : vector<4x128xf32>
    %c0_283 = arith.constant 0 : index
    %c9_284 = arith.constant 9 : index
    %761 = vector.load %arg20[%c0_283, %c9_284] : memref<4x12xf32, #tpu.memory_space<vmem>>, vector<4x1xf32>
    %762 = vector.extract_strided_slice %702 {offsets = [3, 1], sizes = [1, 128], strides = [1, 1]} : vector<4x132xf32> to vector<1x128xf32>
    %763 = vector.broadcast %761 : vector<4x1xf32> to vector<4x128xf32>
    %764 = vector.broadcast %762 : vector<1x128xf32> to vector<4x128xf32>
    %765 = arith.mulf %763, %764 : vector<4x128xf32>
    %766 = arith.addf %760, %765 : vector<4x128xf32>
    %c0_285 = arith.constant 0 : index
    %c10_286 = arith.constant 10 : index
    %767 = vector.load %arg20[%c0_285, %c10_286] : memref<4x12xf32, #tpu.memory_space<vmem>>, vector<4x1xf32>
    %768 = vector.extract_strided_slice %702 {offsets = [3, 2], sizes = [1, 128], strides = [1, 1]} : vector<4x132xf32> to vector<1x128xf32>
    %769 = vector.broadcast %767 : vector<4x1xf32> to vector<4x128xf32>
    %770 = vector.broadcast %768 : vector<1x128xf32> to vector<4x128xf32>
    %771 = arith.mulf %769, %770 : vector<4x128xf32>
    %772 = arith.addf %766, %771 : vector<4x128xf32>
    %c0_287 = arith.constant 0 : index
    %c11_288 = arith.constant 11 : index
    %773 = vector.load %arg20[%c0_287, %c11_288] : memref<4x12xf32, #tpu.memory_space<vmem>>, vector<4x1xf32>
    %774 = vector.extract_strided_slice %702 {offsets = [3, 3], sizes = [1, 128], strides = [1, 1]} : vector<4x132xf32> to vector<1x128xf32>
    %775 = vector.broadcast %773 : vector<4x1xf32> to vector<4x128xf32>
    %776 = vector.broadcast %774 : vector<1x128xf32> to vector<4x128xf32>
    %777 = arith.mulf %775, %776 : vector<4x128xf32>
    %778 = arith.addf %772, %777 : vector<4x128xf32>
    %cst_289 = arith.constant 0.000000e+00 : f32
    %779 = vector.broadcast %cst_289 : f32 to vector<4x128xf32>
    %780 = arith.maximumf %778, %779 : vector<4x128xf32>
    %c0_290 = arith.constant 0 : index
    %c4_291 = arith.constant 4 : index
    %c0_292 = arith.constant 0 : index
    %781 = vector.load %arg28[%c0_290, %c4_291, %c0_292] : memref<1x16x128xf32, #tpu.memory_space<vmem>>, vector<1x4x128xf32>
    %782 = vector.shape_cast %781 : vector<1x4x128xf32> to vector<4x128xf32>
    %783 = vector.shape_cast %780 : vector<4x128xf32> to vector<1x4x128xf32>
    tpu.vector_store %arg28[%c0_290, %c4_291, %c0_292], %783 {strides = array<i32>} : memref<1x16x128xf32, #tpu.memory_space<vmem>>, vector<1x4x128xf32>,
    %cst_293 = arith.constant 0.000000e+00 : f32
    %784 = vector.broadcast %cst_293 : f32 to vector<4x128xf32>
    %c0_294 = arith.constant 0 : index
    %c0_295 = arith.constant 0 : index
    %785 = vector.load %arg23[%c0_294, %c0_295] : memref<4x1xf32, #tpu.memory_space<vmem>>, vector<4x1xf32>
    %786 = vector.broadcast %785 : vector<4x1xf32> to vector<4x128xf32>
    %787 = arith.addf %784, %786 : vector<4x128xf32>
    %c0_296 = arith.constant 0 : index
    %c0_297 = arith.constant 0 : index
    %788 = vector.load %arg22[%c0_296, %c0_297] : memref<4x16xf32, #tpu.memory_space<vmem>>, vector<4x1xf32>
    %789 = vector.extract_strided_slice %493 {offsets = [0, 0], sizes = [1, 128], strides = [1, 1]} : vector<16x128xf32> to vector<1x128xf32>
    %790 = vector.broadcast %788 : vector<4x1xf32> to vector<4x128xf32>
    %791 = vector.broadcast %789 : vector<1x128xf32> to vector<4x128xf32>
    %792 = arith.mulf %790, %791 : vector<4x128xf32>
    %793 = arith.addf %787, %792 : vector<4x128xf32>
    %c0_298 = arith.constant 0 : index
    %c1_299 = arith.constant 1 : index
    %794 = vector.load %arg22[%c0_298, %c1_299] : memref<4x16xf32, #tpu.memory_space<vmem>>, vector<4x1xf32>
    %795 = vector.extract_strided_slice %493 {offsets = [1, 0], sizes = [1, 128], strides = [1, 1]} : vector<16x128xf32> to vector<1x128xf32>
    %796 = vector.broadcast %794 : vector<4x1xf32> to vector<4x128xf32>
    %797 = vector.broadcast %795 : vector<1x128xf32> to vector<4x128xf32>
    %798 = arith.mulf %796, %797 : vector<4x128xf32>
    %799 = arith.addf %793, %798 : vector<4x128xf32>
    %c0_300 = arith.constant 0 : index
    %c2_301 = arith.constant 2 : index
    %800 = vector.load %arg22[%c0_300, %c2_301] : memref<4x16xf32, #tpu.memory_space<vmem>>, vector<4x1xf32>
    %801 = vector.extract_strided_slice %493 {offsets = [2, 0], sizes = [1, 128], strides = [1, 1]} : vector<16x128xf32> to vector<1x128xf32>
    %802 = vector.broadcast %800 : vector<4x1xf32> to vector<4x128xf32>
    %803 = vector.broadcast %801 : vector<1x128xf32> to vector<4x128xf32>
    %804 = arith.mulf %802, %803 : vector<4x128xf32>
    %805 = arith.addf %799, %804 : vector<4x128xf32>
    %c0_302 = arith.constant 0 : index
    %c3_303 = arith.constant 3 : index
    %806 = vector.load %arg22[%c0_302, %c3_303] : memref<4x16xf32, #tpu.memory_space<vmem>>, vector<4x1xf32>
    %807 = vector.extract_strided_slice %493 {offsets = [3, 0], sizes = [1, 128], strides = [1, 1]} : vector<16x128xf32> to vector<1x128xf32>
    %808 = vector.broadcast %806 : vector<4x1xf32> to vector<4x128xf32>
    %809 = vector.broadcast %807 : vector<1x128xf32> to vector<4x128xf32>
    %810 = arith.mulf %808, %809 : vector<4x128xf32>
    %811 = arith.addf %805, %810 : vector<4x128xf32>
    %c0_304 = arith.constant 0 : index
    %c4_305 = arith.constant 4 : index
    %812 = vector.load %arg22[%c0_304, %c4_305] : memref<4x16xf32, #tpu.memory_space<vmem>>, vector<4x1xf32>
    %813 = vector.extract_strided_slice %493 {offsets = [4, 0], sizes = [1, 128], strides = [1, 1]} : vector<16x128xf32> to vector<1x128xf32>
    %814 = vector.broadcast %812 : vector<4x1xf32> to vector<4x128xf32>
    %815 = vector.broadcast %813 : vector<1x128xf32> to vector<4x128xf32>
    %816 = arith.mulf %814, %815 : vector<4x128xf32>
    %817 = arith.addf %811, %816 : vector<4x128xf32>
    %c0_306 = arith.constant 0 : index
    %c5_307 = arith.constant 5 : index
    %818 = vector.load %arg22[%c0_306, %c5_307] : memref<4x16xf32, #tpu.memory_space<vmem>>, vector<4x1xf32>
    %819 = vector.extract_strided_slice %493 {offsets = [5, 0], sizes = [1, 128], strides = [1, 1]} : vector<16x128xf32> to vector<1x128xf32>
    %820 = vector.broadcast %818 : vector<4x1xf32> to vector<4x128xf32>
    %821 = vector.broadcast %819 : vector<1x128xf32> to vector<4x128xf32>
    %822 = arith.mulf %820, %821 : vector<4x128xf32>
    %823 = arith.addf %817, %822 : vector<4x128xf32>
    %c0_308 = arith.constant 0 : index
    %c6_309 = arith.constant 6 : index
    %824 = vector.load %arg22[%c0_308, %c6_309] : memref<4x16xf32, #tpu.memory_space<vmem>>, vector<4x1xf32>
    %825 = vector.extract_strided_slice %493 {offsets = [6, 0], sizes = [1, 128], strides = [1, 1]} : vector<16x128xf32> to vector<1x128xf32>
    %826 = vector.broadcast %824 : vector<4x1xf32> to vector<4x128xf32>
    %827 = vector.broadcast %825 : vector<1x128xf32> to vector<4x128xf32>
    %828 = arith.mulf %826, %827 : vector<4x128xf32>
    %829 = arith.addf %823, %828 : vector<4x128xf32>
    %c0_310 = arith.constant 0 : index
    %c7_311 = arith.constant 7 : index
    %830 = vector.load %arg22[%c0_310, %c7_311] : memref<4x16xf32, #tpu.memory_space<vmem>>, vector<4x1xf32>
    %831 = vector.extract_strided_slice %493 {offsets = [7, 0], sizes = [1, 128], strides = [1, 1]} : vector<16x128xf32> to vector<1x128xf32>
    %832 = vector.broadcast %830 : vector<4x1xf32> to vector<4x128xf32>
    %833 = vector.broadcast %831 : vector<1x128xf32> to vector<4x128xf32>
    %834 = arith.mulf %832, %833 : vector<4x128xf32>
    %835 = arith.addf %829, %834 : vector<4x128xf32>
    %c0_312 = arith.constant 0 : index
    %c8_313 = arith.constant 8 : index
    %836 = vector.load %arg22[%c0_312, %c8_313] : memref<4x16xf32, #tpu.memory_space<vmem>>, vector<4x1xf32>
    %837 = vector.extract_strided_slice %493 {offsets = [8, 0], sizes = [1, 128], strides = [1, 1]} : vector<16x128xf32> to vector<1x128xf32>
    %838 = vector.broadcast %836 : vector<4x1xf32> to vector<4x128xf32>
    %839 = vector.broadcast %837 : vector<1x128xf32> to vector<4x128xf32>
    %840 = arith.mulf %838, %839 : vector<4x128xf32>
    %841 = arith.addf %835, %840 : vector<4x128xf32>
    %c0_314 = arith.constant 0 : index
    %c9_315 = arith.constant 9 : index
    %842 = vector.load %arg22[%c0_314, %c9_315] : memref<4x16xf32, #tpu.memory_space<vmem>>, vector<4x1xf32>
    %843 = vector.extract_strided_slice %493 {offsets = [9, 0], sizes = [1, 128], strides = [1, 1]} : vector<16x128xf32> to vector<1x128xf32>
    %844 = vector.broadcast %842 : vector<4x1xf32> to vector<4x128xf32>
    %845 = vector.broadcast %843 : vector<1x128xf32> to vector<4x128xf32>
    %846 = arith.mulf %844, %845 : vector<4x128xf32>
    %847 = arith.addf %841, %846 : vector<4x128xf32>
    %c0_316 = arith.constant 0 : index
    %c10_317 = arith.constant 10 : index
    %848 = vector.load %arg22[%c0_316, %c10_317] : memref<4x16xf32, #tpu.memory_space<vmem>>, vector<4x1xf32>
    %849 = vector.extract_strided_slice %493 {offsets = [10, 0], sizes = [1, 128], strides = [1, 1]} : vector<16x128xf32> to vector<1x128xf32>
    %850 = vector.broadcast %848 : vector<4x1xf32> to vector<4x128xf32>
    %851 = vector.broadcast %849 : vector<1x128xf32> to vector<4x128xf32>
    %852 = arith.mulf %850, %851 : vector<4x128xf32>
    %853 = arith.addf %847, %852 : vector<4x128xf32>
    %c0_318 = arith.constant 0 : index
    %c11_319 = arith.constant 11 : index
    %854 = vector.load %arg22[%c0_318, %c11_319] : memref<4x16xf32, #tpu.memory_space<vmem>>, vector<4x1xf32>
    %855 = vector.extract_strided_slice %493 {offsets = [11, 0], sizes = [1, 128], strides = [1, 1]} : vector<16x128xf32> to vector<1x128xf32>
    %856 = vector.broadcast %854 : vector<4x1xf32> to vector<4x128xf32>
    %857 = vector.broadcast %855 : vector<1x128xf32> to vector<4x128xf32>
    %858 = arith.mulf %856, %857 : vector<4x128xf32>
    %859 = arith.addf %853, %858 : vector<4x128xf32>
    %c0_320 = arith.constant 0 : index
    %c12_321 = arith.constant 12 : index
    %860 = vector.load %arg22[%c0_320, %c12_321] : memref<4x16xf32, #tpu.memory_space<vmem>>, vector<4x1xf32>
    %861 = vector.extract_strided_slice %493 {offsets = [12, 0], sizes = [1, 128], strides = [1, 1]} : vector<16x128xf32> to vector<1x128xf32>
    %862 = vector.broadcast %860 : vector<4x1xf32> to vector<4x128xf32>
    %863 = vector.broadcast %861 : vector<1x128xf32> to vector<4x128xf32>
    %864 = arith.mulf %862, %863 : vector<4x128xf32>
    %865 = arith.addf %859, %864 : vector<4x128xf32>
    %c0_322 = arith.constant 0 : index
    %c13_323 = arith.constant 13 : index
    %866 = vector.load %arg22[%c0_322, %c13_323] : memref<4x16xf32, #tpu.memory_space<vmem>>, vector<4x1xf32>
    %867 = vector.extract_strided_slice %493 {offsets = [13, 0], sizes = [1, 128], strides = [1, 1]} : vector<16x128xf32> to vector<1x128xf32>
    %868 = vector.broadcast %866 : vector<4x1xf32> to vector<4x128xf32>
    %869 = vector.broadcast %867 : vector<1x128xf32> to vector<4x128xf32>
    %870 = arith.mulf %868, %869 : vector<4x128xf32>
    %871 = arith.addf %865, %870 : vector<4x128xf32>
    %c0_324 = arith.constant 0 : index
    %c14_325 = arith.constant 14 : index
    %872 = vector.load %arg22[%c0_324, %c14_325] : memref<4x16xf32, #tpu.memory_space<vmem>>, vector<4x1xf32>
    %873 = vector.extract_strided_slice %493 {offsets = [14, 0], sizes = [1, 128], strides = [1, 1]} : vector<16x128xf32> to vector<1x128xf32>
    %874 = vector.broadcast %872 : vector<4x1xf32> to vector<4x128xf32>
    %875 = vector.broadcast %873 : vector<1x128xf32> to vector<4x128xf32>
    %876 = arith.mulf %874, %875 : vector<4x128xf32>
    %877 = arith.addf %871, %876 : vector<4x128xf32>
    %c0_326 = arith.constant 0 : index
    %c15_327 = arith.constant 15 : index
    %878 = vector.load %arg22[%c0_326, %c15_327] : memref<4x16xf32, #tpu.memory_space<vmem>>, vector<4x1xf32>
    %879 = vector.extract_strided_slice %493 {offsets = [15, 0], sizes = [1, 128], strides = [1, 1]} : vector<16x128xf32> to vector<1x128xf32>
    %880 = vector.broadcast %878 : vector<4x1xf32> to vector<4x128xf32>
    %881 = vector.broadcast %879 : vector<1x128xf32> to vector<4x128xf32>
    %882 = arith.mulf %880, %881 : vector<4x128xf32>
    %883 = arith.addf %877, %882 : vector<4x128xf32>
    %cst_328 = arith.constant 0.000000e+00 : f32
    %884 = vector.broadcast %cst_328 : f32 to vector<4x128xf32>
    %885 = arith.maximumf %883, %884 : vector<4x128xf32>
    %c0_329 = arith.constant 0 : index
    %c2_330 = arith.constant 2 : index
    %886 = vector.load %arg31[%c0_329, %c2_330] : memref<4x132xf32, #tpu.memory_space<vmem>>, vector<4x128xf32>
    tpu.vector_store %arg31[%c0_329, %c2_330], %885 {strides = array<i32>} : memref<4x132xf32, #tpu.memory_space<vmem>>, vector<4x128xf32>,
    %c0_331 = arith.constant 0 : index
    %c0_332 = arith.constant 0 : index
    %887 = vector.load %arg31[%c0_331, %c0_332] : memref<4x132xf32, #tpu.memory_space<vmem>>, vector<4x132xf32>
    %cst_333 = arith.constant 0.000000e+00 : f32
    %888 = vector.broadcast %cst_333 : f32 to vector<4x128xf32>
    %c0_334 = arith.constant 0 : index
    %c0_335 = arith.constant 0 : index
    %889 = vector.load %arg25[%c0_334, %c0_335] : memref<4x1xf32, #tpu.memory_space<vmem>>, vector<4x1xf32>
    %890 = vector.broadcast %889 : vector<4x1xf32> to vector<4x128xf32>
    %891 = arith.addf %888, %890 : vector<4x128xf32>
    %c0_336 = arith.constant 0 : index
    %c0_337 = arith.constant 0 : index
    %892 = vector.load %arg24[%c0_336, %c0_337] : memref<4x20xf32, #tpu.memory_space<vmem>>, vector<4x1xf32>
    %893 = vector.extract_strided_slice %887 {offsets = [0, 0], sizes = [1, 128], strides = [1, 1]} : vector<4x132xf32> to vector<1x128xf32>
    %894 = vector.broadcast %892 : vector<4x1xf32> to vector<4x128xf32>
    %895 = vector.broadcast %893 : vector<1x128xf32> to vector<4x128xf32>
    %896 = arith.mulf %894, %895 : vector<4x128xf32>
    %897 = arith.addf %891, %896 : vector<4x128xf32>
    %c0_338 = arith.constant 0 : index
    %c1_339 = arith.constant 1 : index
    %898 = vector.load %arg24[%c0_338, %c1_339] : memref<4x20xf32, #tpu.memory_space<vmem>>, vector<4x1xf32>
    %899 = vector.extract_strided_slice %887 {offsets = [0, 1], sizes = [1, 128], strides = [1, 1]} : vector<4x132xf32> to vector<1x128xf32>
    %900 = vector.broadcast %898 : vector<4x1xf32> to vector<4x128xf32>
    %901 = vector.broadcast %899 : vector<1x128xf32> to vector<4x128xf32>
    %902 = arith.mulf %900, %901 : vector<4x128xf32>
    %903 = arith.addf %897, %902 : vector<4x128xf32>
    %c0_340 = arith.constant 0 : index
    %c2_341 = arith.constant 2 : index
    %904 = vector.load %arg24[%c0_340, %c2_341] : memref<4x20xf32, #tpu.memory_space<vmem>>, vector<4x1xf32>
    %905 = vector.extract_strided_slice %887 {offsets = [0, 2], sizes = [1, 128], strides = [1, 1]} : vector<4x132xf32> to vector<1x128xf32>
    %906 = vector.broadcast %904 : vector<4x1xf32> to vector<4x128xf32>
    %907 = vector.broadcast %905 : vector<1x128xf32> to vector<4x128xf32>
    %908 = arith.mulf %906, %907 : vector<4x128xf32>
    %909 = arith.addf %903, %908 : vector<4x128xf32>
    %c0_342 = arith.constant 0 : index
    %c3_343 = arith.constant 3 : index
    %910 = vector.load %arg24[%c0_342, %c3_343] : memref<4x20xf32, #tpu.memory_space<vmem>>, vector<4x1xf32>
    %911 = vector.extract_strided_slice %887 {offsets = [0, 3], sizes = [1, 128], strides = [1, 1]} : vector<4x132xf32> to vector<1x128xf32>
    %912 = vector.broadcast %910 : vector<4x1xf32> to vector<4x128xf32>
    %913 = vector.broadcast %911 : vector<1x128xf32> to vector<4x128xf32>
    %914 = arith.mulf %912, %913 : vector<4x128xf32>
    %915 = arith.addf %909, %914 : vector<4x128xf32>
    %c0_344 = arith.constant 0 : index
    %c4_345 = arith.constant 4 : index
    %916 = vector.load %arg24[%c0_344, %c4_345] : memref<4x20xf32, #tpu.memory_space<vmem>>, vector<4x1xf32>
    %917 = vector.extract_strided_slice %887 {offsets = [0, 4], sizes = [1, 128], strides = [1, 1]} : vector<4x132xf32> to vector<1x128xf32>
    %918 = vector.broadcast %916 : vector<4x1xf32> to vector<4x128xf32>
    %919 = vector.broadcast %917 : vector<1x128xf32> to vector<4x128xf32>
    %920 = arith.mulf %918, %919 : vector<4x128xf32>
    %921 = arith.addf %915, %920 : vector<4x128xf32>
    %c0_346 = arith.constant 0 : index
    %c5_347 = arith.constant 5 : index
    %922 = vector.load %arg24[%c0_346, %c5_347] : memref<4x20xf32, #tpu.memory_space<vmem>>, vector<4x1xf32>
    %923 = vector.extract_strided_slice %887 {offsets = [1, 0], sizes = [1, 128], strides = [1, 1]} : vector<4x132xf32> to vector<1x128xf32>
    %924 = vector.broadcast %922 : vector<4x1xf32> to vector<4x128xf32>
    %925 = vector.broadcast %923 : vector<1x128xf32> to vector<4x128xf32>
    %926 = arith.mulf %924, %925 : vector<4x128xf32>
    %927 = arith.addf %921, %926 : vector<4x128xf32>
    %c0_348 = arith.constant 0 : index
    %c6_349 = arith.constant 6 : index
    %928 = vector.load %arg24[%c0_348, %c6_349] : memref<4x20xf32, #tpu.memory_space<vmem>>, vector<4x1xf32>
    %929 = vector.extract_strided_slice %887 {offsets = [1, 1], sizes = [1, 128], strides = [1, 1]} : vector<4x132xf32> to vector<1x128xf32>
    %930 = vector.broadcast %928 : vector<4x1xf32> to vector<4x128xf32>
    %931 = vector.broadcast %929 : vector<1x128xf32> to vector<4x128xf32>
    %932 = arith.mulf %930, %931 : vector<4x128xf32>
    %933 = arith.addf %927, %932 : vector<4x128xf32>
    %c0_350 = arith.constant 0 : index
    %c7_351 = arith.constant 7 : index
    %934 = vector.load %arg24[%c0_350, %c7_351] : memref<4x20xf32, #tpu.memory_space<vmem>>, vector<4x1xf32>
    %935 = vector.extract_strided_slice %887 {offsets = [1, 2], sizes = [1, 128], strides = [1, 1]} : vector<4x132xf32> to vector<1x128xf32>
    %936 = vector.broadcast %934 : vector<4x1xf32> to vector<4x128xf32>
    %937 = vector.broadcast %935 : vector<1x128xf32> to vector<4x128xf32>
    %938 = arith.mulf %936, %937 : vector<4x128xf32>
    %939 = arith.addf %933, %938 : vector<4x128xf32>
    %c0_352 = arith.constant 0 : index
    %c8_353 = arith.constant 8 : index
    %940 = vector.load %arg24[%c0_352, %c8_353] : memref<4x20xf32, #tpu.memory_space<vmem>>, vector<4x1xf32>
    %941 = vector.extract_strided_slice %887 {offsets = [1, 3], sizes = [1, 128], strides = [1, 1]} : vector<4x132xf32> to vector<1x128xf32>
    %942 = vector.broadcast %940 : vector<4x1xf32> to vector<4x128xf32>
    %943 = vector.broadcast %941 : vector<1x128xf32> to vector<4x128xf32>
    %944 = arith.mulf %942, %943 : vector<4x128xf32>
    %945 = arith.addf %939, %944 : vector<4x128xf32>
    %c0_354 = arith.constant 0 : index
    %c9_355 = arith.constant 9 : index
    %946 = vector.load %arg24[%c0_354, %c9_355] : memref<4x20xf32, #tpu.memory_space<vmem>>, vector<4x1xf32>
    %947 = vector.extract_strided_slice %887 {offsets = [1, 4], sizes = [1, 128], strides = [1, 1]} : vector<4x132xf32> to vector<1x128xf32>
    %948 = vector.broadcast %946 : vector<4x1xf32> to vector<4x128xf32>
    %949 = vector.broadcast %947 : vector<1x128xf32> to vector<4x128xf32>
    %950 = arith.mulf %948, %949 : vector<4x128xf32>
    %951 = arith.addf %945, %950 : vector<4x128xf32>
    %c0_356 = arith.constant 0 : index
    %c10_357 = arith.constant 10 : index
    %952 = vector.load %arg24[%c0_356, %c10_357] : memref<4x20xf32, #tpu.memory_space<vmem>>, vector<4x1xf32>
    %953 = vector.extract_strided_slice %887 {offsets = [2, 0], sizes = [1, 128], strides = [1, 1]} : vector<4x132xf32> to vector<1x128xf32>
    %954 = vector.broadcast %952 : vector<4x1xf32> to vector<4x128xf32>
    %955 = vector.broadcast %953 : vector<1x128xf32> to vector<4x128xf32>
    %956 = arith.mulf %954, %955 : vector<4x128xf32>
    %957 = arith.addf %951, %956 : vector<4x128xf32>
    %c0_358 = arith.constant 0 : index
    %c11_359 = arith.constant 11 : index
    %958 = vector.load %arg24[%c0_358, %c11_359] : memref<4x20xf32, #tpu.memory_space<vmem>>, vector<4x1xf32>
    %959 = vector.extract_strided_slice %887 {offsets = [2, 1], sizes = [1, 128], strides = [1, 1]} : vector<4x132xf32> to vector<1x128xf32>
    %960 = vector.broadcast %958 : vector<4x1xf32> to vector<4x128xf32>
    %961 = vector.broadcast %959 : vector<1x128xf32> to vector<4x128xf32>
    %962 = arith.mulf %960, %961 : vector<4x128xf32>
    %963 = arith.addf %957, %962 : vector<4x128xf32>
    %c0_360 = arith.constant 0 : index
    %c12_361 = arith.constant 12 : index
    %964 = vector.load %arg24[%c0_360, %c12_361] : memref<4x20xf32, #tpu.memory_space<vmem>>, vector<4x1xf32>
    %965 = vector.extract_strided_slice %887 {offsets = [2, 2], sizes = [1, 128], strides = [1, 1]} : vector<4x132xf32> to vector<1x128xf32>
    %966 = vector.broadcast %964 : vector<4x1xf32> to vector<4x128xf32>
    %967 = vector.broadcast %965 : vector<1x128xf32> to vector<4x128xf32>
    %968 = arith.mulf %966, %967 : vector<4x128xf32>
    %969 = arith.addf %963, %968 : vector<4x128xf32>
    %c0_362 = arith.constant 0 : index
    %c13_363 = arith.constant 13 : index
    %970 = vector.load %arg24[%c0_362, %c13_363] : memref<4x20xf32, #tpu.memory_space<vmem>>, vector<4x1xf32>
    %971 = vector.extract_strided_slice %887 {offsets = [2, 3], sizes = [1, 128], strides = [1, 1]} : vector<4x132xf32> to vector<1x128xf32>
    %972 = vector.broadcast %970 : vector<4x1xf32> to vector<4x128xf32>
    %973 = vector.broadcast %971 : vector<1x128xf32> to vector<4x128xf32>
    %974 = arith.mulf %972, %973 : vector<4x128xf32>
    %975 = arith.addf %969, %974 : vector<4x128xf32>
    %c0_364 = arith.constant 0 : index
    %c14_365 = arith.constant 14 : index
    %976 = vector.load %arg24[%c0_364, %c14_365] : memref<4x20xf32, #tpu.memory_space<vmem>>, vector<4x1xf32>
    %977 = vector.extract_strided_slice %887 {offsets = [2, 4], sizes = [1, 128], strides = [1, 1]} : vector<4x132xf32> to vector<1x128xf32>
    %978 = vector.broadcast %976 : vector<4x1xf32> to vector<4x128xf32>
    %979 = vector.broadcast %977 : vector<1x128xf32> to vector<4x128xf32>
    %980 = arith.mulf %978, %979 : vector<4x128xf32>
    %981 = arith.addf %975, %980 : vector<4x128xf32>
    %c0_366 = arith.constant 0 : index
    %c15_367 = arith.constant 15 : index
    %982 = vector.load %arg24[%c0_366, %c15_367] : memref<4x20xf32, #tpu.memory_space<vmem>>, vector<4x1xf32>
    %983 = vector.extract_strided_slice %887 {offsets = [3, 0], sizes = [1, 128], strides = [1, 1]} : vector<4x132xf32> to vector<1x128xf32>
    %984 = vector.broadcast %982 : vector<4x1xf32> to vector<4x128xf32>
    %985 = vector.broadcast %983 : vector<1x128xf32> to vector<4x128xf32>
    %986 = arith.mulf %984, %985 : vector<4x128xf32>
    %987 = arith.addf %981, %986 : vector<4x128xf32>
    %c0_368 = arith.constant 0 : index
    %c16_369 = arith.constant 16 : index
    %988 = vector.load %arg24[%c0_368, %c16_369] : memref<4x20xf32, #tpu.memory_space<vmem>>, vector<4x1xf32>
    %989 = vector.extract_strided_slice %887 {offsets = [3, 1], sizes = [1, 128], strides = [1, 1]} : vector<4x132xf32> to vector<1x128xf32>
    %990 = vector.broadcast %988 : vector<4x1xf32> to vector<4x128xf32>
    %991 = vector.broadcast %989 : vector<1x128xf32> to vector<4x128xf32>
    %992 = arith.mulf %990, %991 : vector<4x128xf32>
    %993 = arith.addf %987, %992 : vector<4x128xf32>
    %c0_370 = arith.constant 0 : index
    %c17_371 = arith.constant 17 : index
    %994 = vector.load %arg24[%c0_370, %c17_371] : memref<4x20xf32, #tpu.memory_space<vmem>>, vector<4x1xf32>
    %995 = vector.extract_strided_slice %887 {offsets = [3, 2], sizes = [1, 128], strides = [1, 1]} : vector<4x132xf32> to vector<1x128xf32>
    %996 = vector.broadcast %994 : vector<4x1xf32> to vector<4x128xf32>
    %997 = vector.broadcast %995 : vector<1x128xf32> to vector<4x128xf32>
    %998 = arith.mulf %996, %997 : vector<4x128xf32>
    %999 = arith.addf %993, %998 : vector<4x128xf32>
    %c0_372 = arith.constant 0 : index
    %c18_373 = arith.constant 18 : index
    %1000 = vector.load %arg24[%c0_372, %c18_373] : memref<4x20xf32, #tpu.memory_space<vmem>>, vector<4x1xf32>
    %1001 = vector.extract_strided_slice %887 {offsets = [3, 3], sizes = [1, 128], strides = [1, 1]} : vector<4x132xf32> to vector<1x128xf32>
    %1002 = vector.broadcast %1000 : vector<4x1xf32> to vector<4x128xf32>
    %1003 = vector.broadcast %1001 : vector<1x128xf32> to vector<4x128xf32>
    %1004 = arith.mulf %1002, %1003 : vector<4x128xf32>
    %1005 = arith.addf %999, %1004 : vector<4x128xf32>
    %c0_374 = arith.constant 0 : index
    %c19_375 = arith.constant 19 : index
    %1006 = vector.load %arg24[%c0_374, %c19_375] : memref<4x20xf32, #tpu.memory_space<vmem>>, vector<4x1xf32>
    %1007 = vector.extract_strided_slice %887 {offsets = [3, 4], sizes = [1, 128], strides = [1, 1]} : vector<4x132xf32> to vector<1x128xf32>
    %1008 = vector.broadcast %1006 : vector<4x1xf32> to vector<4x128xf32>
    %1009 = vector.broadcast %1007 : vector<1x128xf32> to vector<4x128xf32>
    %1010 = arith.mulf %1008, %1009 : vector<4x128xf32>
    %1011 = arith.addf %1005, %1010 : vector<4x128xf32>
    %cst_376 = arith.constant 0.000000e+00 : f32
    %1012 = vector.broadcast %cst_376 : f32 to vector<4x128xf32>
    %1013 = arith.maximumf %1011, %1012 : vector<4x128xf32>
    %c0_377 = arith.constant 0 : index
    %c8_378 = arith.constant 8 : index
    %c0_379 = arith.constant 0 : index
    %1014 = vector.load %arg28[%c0_377, %c8_378, %c0_379] : memref<1x16x128xf32, #tpu.memory_space<vmem>>, vector<1x4x128xf32>
    %1015 = vector.shape_cast %1014 : vector<1x4x128xf32> to vector<4x128xf32>
    %1016 = vector.shape_cast %1013 : vector<4x128xf32> to vector<1x4x128xf32>
    tpu.vector_store %arg28[%c0_377, %c8_378, %c0_379], %1016 {strides = array<i32>} : memref<1x16x128xf32, #tpu.memory_space<vmem>>, vector<1x4x128xf32>,
    %1017 = vector.extract_strided_slice %492 {offsets = [0, 1], sizes = [16, 128], strides = [1, 1]} : vector<16x132xf32> to vector<16x128xf32>
    %1018 = vector.extract_strided_slice %492 {offsets = [0, 2], sizes = [16, 128], strides = [1, 1]} : vector<16x132xf32> to vector<16x128xf32>
    %1019 = arith.addf %1017, %1018 : vector<16x128xf32>
    %1020 = vector.extract_strided_slice %492 {offsets = [0, 3], sizes = [16, 128], strides = [1, 1]} : vector<16x132xf32> to vector<16x128xf32>
    %1021 = arith.addf %1019, %1020 : vector<16x128xf32>
    %cst_380 = arith.constant 0.000000e+00 : f32
    %1022 = vector.broadcast %cst_380 : f32 to vector<4x128xf32>
    %c0_381 = arith.constant 0 : index
    %c0_382 = arith.constant 0 : index
    %1023 = vector.load %arg27[%c0_381, %c0_382] : memref<4x1xf32, #tpu.memory_space<vmem>>, vector<4x1xf32>
    %1024 = vector.broadcast %1023 : vector<4x1xf32> to vector<4x128xf32>
    %1025 = arith.addf %1022, %1024 : vector<4x128xf32>
    %c0_383 = arith.constant 0 : index
    %c0_384 = arith.constant 0 : index
    %1026 = vector.load %arg26[%c0_383, %c0_384] : memref<4x16xf32, #tpu.memory_space<vmem>>, vector<4x1xf32>
    %1027 = vector.extract_strided_slice %1021 {offsets = [0, 0], sizes = [1, 128], strides = [1, 1]} : vector<16x128xf32> to vector<1x128xf32>
    %1028 = vector.broadcast %1026 : vector<4x1xf32> to vector<4x128xf32>
    %1029 = vector.broadcast %1027 : vector<1x128xf32> to vector<4x128xf32>
    %1030 = arith.mulf %1028, %1029 : vector<4x128xf32>
    %1031 = arith.addf %1025, %1030 : vector<4x128xf32>
    %c0_385 = arith.constant 0 : index
    %c1_386 = arith.constant 1 : index
    %1032 = vector.load %arg26[%c0_385, %c1_386] : memref<4x16xf32, #tpu.memory_space<vmem>>, vector<4x1xf32>
    %1033 = vector.extract_strided_slice %1021 {offsets = [1, 0], sizes = [1, 128], strides = [1, 1]} : vector<16x128xf32> to vector<1x128xf32>
    %1034 = vector.broadcast %1032 : vector<4x1xf32> to vector<4x128xf32>
    %1035 = vector.broadcast %1033 : vector<1x128xf32> to vector<4x128xf32>
    %1036 = arith.mulf %1034, %1035 : vector<4x128xf32>
    %1037 = arith.addf %1031, %1036 : vector<4x128xf32>
    %c0_387 = arith.constant 0 : index
    %c2_388 = arith.constant 2 : index
    %1038 = vector.load %arg26[%c0_387, %c2_388] : memref<4x16xf32, #tpu.memory_space<vmem>>, vector<4x1xf32>
    %1039 = vector.extract_strided_slice %1021 {offsets = [2, 0], sizes = [1, 128], strides = [1, 1]} : vector<16x128xf32> to vector<1x128xf32>
    %1040 = vector.broadcast %1038 : vector<4x1xf32> to vector<4x128xf32>
    %1041 = vector.broadcast %1039 : vector<1x128xf32> to vector<4x128xf32>
    %1042 = arith.mulf %1040, %1041 : vector<4x128xf32>
    %1043 = arith.addf %1037, %1042 : vector<4x128xf32>
    %c0_389 = arith.constant 0 : index
    %c3_390 = arith.constant 3 : index
    %1044 = vector.load %arg26[%c0_389, %c3_390] : memref<4x16xf32, #tpu.memory_space<vmem>>, vector<4x1xf32>
    %1045 = vector.extract_strided_slice %1021 {offsets = [3, 0], sizes = [1, 128], strides = [1, 1]} : vector<16x128xf32> to vector<1x128xf32>
    %1046 = vector.broadcast %1044 : vector<4x1xf32> to vector<4x128xf32>
    %1047 = vector.broadcast %1045 : vector<1x128xf32> to vector<4x128xf32>
    %1048 = arith.mulf %1046, %1047 : vector<4x128xf32>
    %1049 = arith.addf %1043, %1048 : vector<4x128xf32>
    %c0_391 = arith.constant 0 : index
    %c4_392 = arith.constant 4 : index
    %1050 = vector.load %arg26[%c0_391, %c4_392] : memref<4x16xf32, #tpu.memory_space<vmem>>, vector<4x1xf32>
    %1051 = vector.extract_strided_slice %1021 {offsets = [4, 0], sizes = [1, 128], strides = [1, 1]} : vector<16x128xf32> to vector<1x128xf32>
    %1052 = vector.broadcast %1050 : vector<4x1xf32> to vector<4x128xf32>
    %1053 = vector.broadcast %1051 : vector<1x128xf32> to vector<4x128xf32>
    %1054 = arith.mulf %1052, %1053 : vector<4x128xf32>
    %1055 = arith.addf %1049, %1054 : vector<4x128xf32>
    %c0_393 = arith.constant 0 : index
    %c5_394 = arith.constant 5 : index
    %1056 = vector.load %arg26[%c0_393, %c5_394] : memref<4x16xf32, #tpu.memory_space<vmem>>, vector<4x1xf32>
    %1057 = vector.extract_strided_slice %1021 {offsets = [5, 0], sizes = [1, 128], strides = [1, 1]} : vector<16x128xf32> to vector<1x128xf32>
    %1058 = vector.broadcast %1056 : vector<4x1xf32> to vector<4x128xf32>
    %1059 = vector.broadcast %1057 : vector<1x128xf32> to vector<4x128xf32>
    %1060 = arith.mulf %1058, %1059 : vector<4x128xf32>
    %1061 = arith.addf %1055, %1060 : vector<4x128xf32>
    %c0_395 = arith.constant 0 : index
    %c6_396 = arith.constant 6 : index
    %1062 = vector.load %arg26[%c0_395, %c6_396] : memref<4x16xf32, #tpu.memory_space<vmem>>, vector<4x1xf32>
    %1063 = vector.extract_strided_slice %1021 {offsets = [6, 0], sizes = [1, 128], strides = [1, 1]} : vector<16x128xf32> to vector<1x128xf32>
    %1064 = vector.broadcast %1062 : vector<4x1xf32> to vector<4x128xf32>
    %1065 = vector.broadcast %1063 : vector<1x128xf32> to vector<4x128xf32>
    %1066 = arith.mulf %1064, %1065 : vector<4x128xf32>
    %1067 = arith.addf %1061, %1066 : vector<4x128xf32>
    %c0_397 = arith.constant 0 : index
    %c7_398 = arith.constant 7 : index
    %1068 = vector.load %arg26[%c0_397, %c7_398] : memref<4x16xf32, #tpu.memory_space<vmem>>, vector<4x1xf32>
    %1069 = vector.extract_strided_slice %1021 {offsets = [7, 0], sizes = [1, 128], strides = [1, 1]} : vector<16x128xf32> to vector<1x128xf32>
    %1070 = vector.broadcast %1068 : vector<4x1xf32> to vector<4x128xf32>
    %1071 = vector.broadcast %1069 : vector<1x128xf32> to vector<4x128xf32>
    %1072 = arith.mulf %1070, %1071 : vector<4x128xf32>
    %1073 = arith.addf %1067, %1072 : vector<4x128xf32>
    %c0_399 = arith.constant 0 : index
    %c8_400 = arith.constant 8 : index
    %1074 = vector.load %arg26[%c0_399, %c8_400] : memref<4x16xf32, #tpu.memory_space<vmem>>, vector<4x1xf32>
    %1075 = vector.extract_strided_slice %1021 {offsets = [8, 0], sizes = [1, 128], strides = [1, 1]} : vector<16x128xf32> to vector<1x128xf32>
    %1076 = vector.broadcast %1074 : vector<4x1xf32> to vector<4x128xf32>
    %1077 = vector.broadcast %1075 : vector<1x128xf32> to vector<4x128xf32>
    %1078 = arith.mulf %1076, %1077 : vector<4x128xf32>
    %1079 = arith.addf %1073, %1078 : vector<4x128xf32>
    %c0_401 = arith.constant 0 : index
    %c9_402 = arith.constant 9 : index
    %1080 = vector.load %arg26[%c0_401, %c9_402] : memref<4x16xf32, #tpu.memory_space<vmem>>, vector<4x1xf32>
    %1081 = vector.extract_strided_slice %1021 {offsets = [9, 0], sizes = [1, 128], strides = [1, 1]} : vector<16x128xf32> to vector<1x128xf32>
    %1082 = vector.broadcast %1080 : vector<4x1xf32> to vector<4x128xf32>
    %1083 = vector.broadcast %1081 : vector<1x128xf32> to vector<4x128xf32>
    %1084 = arith.mulf %1082, %1083 : vector<4x128xf32>
    %1085 = arith.addf %1079, %1084 : vector<4x128xf32>
    %c0_403 = arith.constant 0 : index
    %c10_404 = arith.constant 10 : index
    %1086 = vector.load %arg26[%c0_403, %c10_404] : memref<4x16xf32, #tpu.memory_space<vmem>>, vector<4x1xf32>
    %1087 = vector.extract_strided_slice %1021 {offsets = [10, 0], sizes = [1, 128], strides = [1, 1]} : vector<16x128xf32> to vector<1x128xf32>
    %1088 = vector.broadcast %1086 : vector<4x1xf32> to vector<4x128xf32>
    %1089 = vector.broadcast %1087 : vector<1x128xf32> to vector<4x128xf32>
    %1090 = arith.mulf %1088, %1089 : vector<4x128xf32>
    %1091 = arith.addf %1085, %1090 : vector<4x128xf32>
    %c0_405 = arith.constant 0 : index
    %c11_406 = arith.constant 11 : index
    %1092 = vector.load %arg26[%c0_405, %c11_406] : memref<4x16xf32, #tpu.memory_space<vmem>>, vector<4x1xf32>
    %1093 = vector.extract_strided_slice %1021 {offsets = [11, 0], sizes = [1, 128], strides = [1, 1]} : vector<16x128xf32> to vector<1x128xf32>
    %1094 = vector.broadcast %1092 : vector<4x1xf32> to vector<4x128xf32>
    %1095 = vector.broadcast %1093 : vector<1x128xf32> to vector<4x128xf32>
    %1096 = arith.mulf %1094, %1095 : vector<4x128xf32>
    %1097 = arith.addf %1091, %1096 : vector<4x128xf32>
    %c0_407 = arith.constant 0 : index
    %c12_408 = arith.constant 12 : index
    %1098 = vector.load %arg26[%c0_407, %c12_408] : memref<4x16xf32, #tpu.memory_space<vmem>>, vector<4x1xf32>
    %1099 = vector.extract_strided_slice %1021 {offsets = [12, 0], sizes = [1, 128], strides = [1, 1]} : vector<16x128xf32> to vector<1x128xf32>
    %1100 = vector.broadcast %1098 : vector<4x1xf32> to vector<4x128xf32>
    %1101 = vector.broadcast %1099 : vector<1x128xf32> to vector<4x128xf32>
    %1102 = arith.mulf %1100, %1101 : vector<4x128xf32>
    %1103 = arith.addf %1097, %1102 : vector<4x128xf32>
    %c0_409 = arith.constant 0 : index
    %c13_410 = arith.constant 13 : index
    %1104 = vector.load %arg26[%c0_409, %c13_410] : memref<4x16xf32, #tpu.memory_space<vmem>>, vector<4x1xf32>
    %1105 = vector.extract_strided_slice %1021 {offsets = [13, 0], sizes = [1, 128], strides = [1, 1]} : vector<16x128xf32> to vector<1x128xf32>
    %1106 = vector.broadcast %1104 : vector<4x1xf32> to vector<4x128xf32>
    %1107 = vector.broadcast %1105 : vector<1x128xf32> to vector<4x128xf32>
    %1108 = arith.mulf %1106, %1107 : vector<4x128xf32>
    %1109 = arith.addf %1103, %1108 : vector<4x128xf32>
    %c0_411 = arith.constant 0 : index
    %c14_412 = arith.constant 14 : index
    %1110 = vector.load %arg26[%c0_411, %c14_412] : memref<4x16xf32, #tpu.memory_space<vmem>>, vector<4x1xf32>
    %1111 = vector.extract_strided_slice %1021 {offsets = [14, 0], sizes = [1, 128], strides = [1, 1]} : vector<16x128xf32> to vector<1x128xf32>
    %1112 = vector.broadcast %1110 : vector<4x1xf32> to vector<4x128xf32>
    %1113 = vector.broadcast %1111 : vector<1x128xf32> to vector<4x128xf32>
    %1114 = arith.mulf %1112, %1113 : vector<4x128xf32>
    %1115 = arith.addf %1109, %1114 : vector<4x128xf32>
    %c0_413 = arith.constant 0 : index
    %c15_414 = arith.constant 15 : index
    %1116 = vector.load %arg26[%c0_413, %c15_414] : memref<4x16xf32, #tpu.memory_space<vmem>>, vector<4x1xf32>
    %1117 = vector.extract_strided_slice %1021 {offsets = [15, 0], sizes = [1, 128], strides = [1, 1]} : vector<16x128xf32> to vector<1x128xf32>
    %1118 = vector.broadcast %1116 : vector<4x1xf32> to vector<4x128xf32>
    %1119 = vector.broadcast %1117 : vector<1x128xf32> to vector<4x128xf32>
    %1120 = arith.mulf %1118, %1119 : vector<4x128xf32>
    %1121 = arith.addf %1115, %1120 : vector<4x128xf32>
    %cst_415 = arith.constant 0.000000e+00 : f32
    %1122 = vector.broadcast %cst_415 : f32 to vector<4x128xf32>
    %1123 = arith.maximumf %1121, %1122 : vector<4x128xf32>
    %c0_416 = arith.constant 0 : index
    %c12_417 = arith.constant 12 : index
    %c0_418 = arith.constant 0 : index
    %1124 = vector.load %arg28[%c0_416, %c12_417, %c0_418] : memref<1x16x128xf32, #tpu.memory_space<vmem>>, vector<1x4x128xf32>
    %1125 = vector.shape_cast %1124 : vector<1x4x128xf32> to vector<4x128xf32>
    %1126 = vector.shape_cast %1123 : vector<4x128xf32> to vector<1x4x128xf32>
    tpu.vector_store %arg28[%c0_416, %c12_417, %c0_418], %1126 {strides = array<i32>} : memref<1x16x128xf32, #tpu.memory_space<vmem>>, vector<1x4x128xf32>,
    return
  }
  func.func @transform_0(%arg0: i32) -> (i32, i32, i32) {
    %c0_i32 = arith.constant 0 : i32
    %c0_i32_0 = arith.constant 0 : i32
    %c0_i32_1 = arith.constant 0 : i32
    return %arg0, %c0_i32, %c0_i32_0 : i32, i32, i32
  }
  func.func @transform_1(%arg0: i32) -> (i32, i32) {
    %c0_i32 = arith.constant 0 : i32
    %c0_i32_0 = arith.constant 0 : i32
    %c0_i32_1 = arith.constant 0 : i32
    return %c0_i32, %c0_i32_0 : i32, i32
  }
  func.func @transform_2(%arg0: i32) -> (i32, i32) {
    %c0_i32 = arith.constant 0 : i32
    %c0_i32_0 = arith.constant 0 : i32
    %c0_i32_1 = arith.constant 0 : i32
    return %c0_i32, %c0_i32_0 : i32, i32
  }
  func.func @transform_3(%arg0: i32) -> (i32, i32) {
    %c0_i32 = arith.constant 0 : i32
    %c0_i32_0 = arith.constant 0 : i32
    %c0_i32_1 = arith.constant 0 : i32
    return %c0_i32, %c0_i32_0 : i32, i32
  }
  func.func @transform_4(%arg0: i32) -> (i32, i32) {
    %c0_i32 = arith.constant 0 : i32
    %c0_i32_0 = arith.constant 0 : i32
    %c0_i32_1 = arith.constant 0 : i32
    return %c0_i32, %c0_i32_0 : i32, i32
  }
  func.func @transform_5(%arg0: i32) -> (i32, i32) {
    %c0_i32 = arith.constant 0 : i32
    %c0_i32_0 = arith.constant 0 : i32
    %c0_i32_1 = arith.constant 0 : i32
    return %c0_i32, %c0_i32_0 : i32, i32
  }
  func.func @transform_6(%arg0: i32) -> (i32, i32) {
    %c0_i32 = arith.constant 0 : i32
    %c0_i32_0 = arith.constant 0 : i32
    %c0_i32_1 = arith.constant 0 : i32
    return %c0_i32, %c0_i32_0 : i32, i32
  }
  func.func @transform_7(%arg0: i32) -> (i32, i32) {
    %c0_i32 = arith.constant 0 : i32
    %c0_i32_0 = arith.constant 0 : i32
    %c0_i32_1 = arith.constant 0 : i32
    return %c0_i32, %c0_i32_0 : i32, i32
  }
  func.func @transform_8(%arg0: i32) -> (i32, i32) {
    %c0_i32 = arith.constant 0 : i32
    %c0_i32_0 = arith.constant 0 : i32
    %c0_i32_1 = arith.constant 0 : i32
    return %c0_i32, %c0_i32_0 : i32, i32
  }
  func.func @transform_9(%arg0: i32) -> (i32, i32) {
    %c0_i32 = arith.constant 0 : i32
    %c0_i32_0 = arith.constant 0 : i32
    %c0_i32_1 = arith.constant 0 : i32
    return %c0_i32, %c0_i32_0 : i32, i32
  }
  func.func @transform_10(%arg0: i32) -> (i32, i32) {
    %c0_i32 = arith.constant 0 : i32
    %c0_i32_0 = arith.constant 0 : i32
    %c0_i32_1 = arith.constant 0 : i32
    return %c0_i32, %c0_i32_0 : i32, i32
  }
  func.func @transform_11(%arg0: i32) -> (i32, i32) {
    %c0_i32 = arith.constant 0 : i32
    %c0_i32_0 = arith.constant 0 : i32
    %c0_i32_1 = arith.constant 0 : i32
    return %c0_i32, %c0_i32_0 : i32, i32
  }
  func.func @transform_12(%arg0: i32) -> (i32, i32) {
    %c0_i32 = arith.constant 0 : i32
    %c0_i32_0 = arith.constant 0 : i32
    %c0_i32_1 = arith.constant 0 : i32
    return %c0_i32, %c0_i32_0 : i32, i32
  }
  func.func @transform_13(%arg0: i32) -> (i32, i32) {
    %c0_i32 = arith.constant 0 : i32
    %c0_i32_0 = arith.constant 0 : i32
    %c0_i32_1 = arith.constant 0 : i32
    return %c0_i32, %c0_i32_0 : i32, i32
  }
  func.func @transform_14(%arg0: i32) -> (i32, i32) {
    %c0_i32 = arith.constant 0 : i32
    %c0_i32_0 = arith.constant 0 : i32
    %c0_i32_1 = arith.constant 0 : i32
    return %c0_i32, %c0_i32_0 : i32, i32
  }
  func.func @transform_15(%arg0: i32) -> (i32, i32) {
    %c0_i32 = arith.constant 0 : i32
    %c0_i32_0 = arith.constant 0 : i32
    %c0_i32_1 = arith.constant 0 : i32
    return %c0_i32, %c0_i32_0 : i32, i32
  }
  func.func @transform_16(%arg0: i32) -> (i32, i32) {
    %c0_i32 = arith.constant 0 : i32
    %c0_i32_0 = arith.constant 0 : i32
    %c0_i32_1 = arith.constant 0 : i32
    return %c0_i32, %c0_i32_0 : i32, i32
  }
  func.func @transform_17(%arg0: i32) -> (i32, i32) {
    %c0_i32 = arith.constant 0 : i32
    %c0_i32_0 = arith.constant 0 : i32
    %c0_i32_1 = arith.constant 0 : i32
    return %c0_i32, %c0_i32_0 : i32, i32
  }
  func.func @transform_18(%arg0: i32) -> (i32, i32) {
    %c0_i32 = arith.constant 0 : i32
    %c0_i32_0 = arith.constant 0 : i32
    %c0_i32_1 = arith.constant 0 : i32
    return %c0_i32, %c0_i32_0 : i32, i32
  }
  func.func @transform_19(%arg0: i32) -> (i32, i32) {
    %c0_i32 = arith.constant 0 : i32
    %c0_i32_0 = arith.constant 0 : i32
    %c0_i32_1 = arith.constant 0 : i32
    return %c0_i32, %c0_i32_0 : i32, i32
  }
  func.func @transform_20(%arg0: i32) -> (i32, i32) {
    %c0_i32 = arith.constant 0 : i32
    %c0_i32_0 = arith.constant 0 : i32
    %c0_i32_1 = arith.constant 0 : i32
    return %c0_i32, %c0_i32_0 : i32, i32
  }
  func.func @transform_21(%arg0: i32) -> (i32, i32) {
    %c0_i32 = arith.constant 0 : i32
    %c0_i32_0 = arith.constant 0 : i32
    %c0_i32_1 = arith.constant 0 : i32
    return %c0_i32, %c0_i32_0 : i32, i32
  }
  func.func @transform_22(%arg0: i32) -> (i32, i32) {
    %c0_i32 = arith.constant 0 : i32
    %c0_i32_0 = arith.constant 0 : i32
    %c0_i32_1 = arith.constant 0 : i32
    return %c0_i32, %c0_i32_0 : i32, i32
  }
  func.func @transform_23(%arg0: i32) -> (i32, i32) {
    %c0_i32 = arith.constant 0 : i32
    %c0_i32_0 = arith.constant 0 : i32
    %c0_i32_1 = arith.constant 0 : i32
    return %c0_i32, %c0_i32_0 : i32, i32
  }
  func.func @transform_24(%arg0: i32) -> (i32, i32) {
    %c0_i32 = arith.constant 0 : i32
    %c0_i32_0 = arith.constant 0 : i32
    %c0_i32_1 = arith.constant 0 : i32
    return %c0_i32, %c0_i32_0 : i32, i32
  }
  func.func @transform_25(%arg0: i32) -> (i32, i32) {
    %c0_i32 = arith.constant 0 : i32
    %c0_i32_0 = arith.constant 0 : i32
    %c0_i32_1 = arith.constant 0 : i32
    return %c0_i32, %c0_i32_0 : i32, i32
  }
  func.func @transform_26(%arg0: i32) -> (i32, i32) {
    %c0_i32 = arith.constant 0 : i32
    %c0_i32_0 = arith.constant 0 : i32
    %c0_i32_1 = arith.constant 0 : i32
    return %c0_i32, %c0_i32_0 : i32, i32
  }
  func.func @transform_27(%arg0: i32) -> (i32, i32, i32) {
    %c0_i32 = arith.constant 0 : i32
    %c0_i32_0 = arith.constant 0 : i32
    %c0_i32_1 = arith.constant 0 : i32
    return %arg0, %c0_i32, %c0_i32_0 : i32, i32, i32
  }
}

module attributes {stable_mosaic.version = 11 : i64} {
  func.func @_fc_kernel(%arg0: memref<2x2048xbf16, #tpu.memory_space<vmem>>, %arg1: memref<2048x64xbf16, #tpu.memory_space<vmem>>, %arg2: memref<1x64xf32, #tpu.memory_space<vmem>>, %arg3: memref<64x1xf32, #tpu.memory_space<vmem>>, %arg4: memref<1x1xf32, #tpu.memory_space<vmem>>, %arg5: memref<2x1xf32, #tpu.memory_space<vmem>>) attributes {dimension_semantics = [], scalar_prefetch = 0 : i64, scratch_operands = 0 : i64, tpu.core_type = #tpu.core_type<tc>} {
    %c0 = arith.constant 0 : index
    %c0_0 = arith.constant 0 : index
    %0 = vector.load %arg0[%c0, %c0_0] : memref<2x2048xbf16, #tpu.memory_space<vmem>>, vector<2x2048xbf16>
    %c0_1 = arith.constant 0 : index
    %c0_2 = arith.constant 0 : index
    %1 = vector.load %arg1[%c0_1, %c0_2] : memref<2048x64xbf16, #tpu.memory_space<vmem>>, vector<2048x64xbf16>
    %cst = arith.constant dense<0.000000e+00> : vector<2x64xf32>
    %2 = tpu.matmul %0, %1, %cst {dimension_numbers = #tpu.dot_dimension_numbers<[1], [0], [0], [1], [0, 0, 1, 1], [], []>} : vector<2x2048xbf16>, vector<2048x64xbf16>, vector<2x64xf32> -> vector<2x64xf32>
    %c0_3 = arith.constant 0 : index
    %c0_4 = arith.constant 0 : index
    %3 = vector.load %arg2[%c0_3, %c0_4] : memref<1x64xf32, #tpu.memory_space<vmem>>, vector<1x64xf32>
    %4 = vector.broadcast %3 : vector<1x64xf32> to vector<2x64xf32>
    %5 = arith.addf %2, %4 : vector<2x64xf32>
    %cst_5 = arith.constant 0.000000e+00 : f32
    %6 = vector.broadcast %cst_5 : f32 to vector<2x64xf32>
    %7 = arith.maximumf %5, %6 : vector<2x64xf32>
    %c0_6 = arith.constant 0 : index
    %c0_7 = arith.constant 0 : index
    %8 = vector.load %arg3[%c0_6, %c0_7] : memref<64x1xf32, #tpu.memory_space<vmem>>, vector<64x1xf32>
    %cst_8 = arith.constant dense<0.000000e+00> : vector<2x1xf32>
    %9 = tpu.matmul %7, %8, %cst_8 {dimension_numbers = #tpu.dot_dimension_numbers<[1], [0], [0], [1], [0, 0, 1, 1], [], []>} : vector<2x64xf32>, vector<64x1xf32>, vector<2x1xf32> -> vector<2x1xf32>
    %c0_9 = arith.constant 0 : index
    %c0_10 = arith.constant 0 : index
    %10 = vector.load %arg4[%c0_9, %c0_10] : memref<1x1xf32, #tpu.memory_space<vmem>>, vector<1x1xf32>
    %11 = vector.broadcast %10 : vector<1x1xf32> to vector<2x1xf32>
    %12 = arith.addf %9, %11 : vector<2x1xf32>
    %c0_11 = arith.constant 0 : index
    %c0_12 = arith.constant 0 : index
    %13 = vector.load %arg5[%c0_11, %c0_12] : memref<2x1xf32, #tpu.memory_space<vmem>>, vector<2x1xf32>
    tpu.vector_store %arg5[%c0_11, %c0_12], %12 {strides = array<i32>} : memref<2x1xf32, #tpu.memory_space<vmem>>, vector<2x1xf32>,
    return
  }
}

</mosaic_0001>

<llo_original>
// kernel: deepspectra_forward.3
$region0: #{deepspectra_forward.3}
  #allocation0 [shape = 'u32[]', space=smem, size = 0x4, offset = 0x4, fixed_abs, tag = 'smem constant byte address 0x4 - core index']
  #allocation1 [shape = 'u32[72,128]{1,0:T(1,128)}', space=vmem, size = 0x9000, scoped, tag = 'internal scratch']
  #allocation2 [shape = 'f32[1,1]{1,0:T(1,128)S(1)}', space=vmem, size = 0x200, scoped, tag = 'scoped memory for deepspectra_forward.3']
  %s0 = inlined_call_operand.vmem [shape: bf16[2,2048], index: 0, kind: input, shape index: {}]
  %s1 = inlined_call_operand.vmem [shape: bf16[2048,64], index: 1, kind: input, shape index: {}]
  %s2 = inlined_call_operand.vmem [shape: f32[1,64], index: 2, kind: input, shape index: {}]
  %s3 = inlined_call_operand.vmem [shape: f32[64,1], index: 3, kind: input, shape index: {}]
  %s4 = inlined_call_operand.<no memory space> [shape: f32[1,1], index: 4, kind: input, shape index: {}]
  %s5 = inlined_call_operand.vmem [shape: f32[2,1], index: 5, kind: output, shape index: {}]
  %s6 = sld [smem:[#allocation0]]
  $region30: #{deepspectra_forward.3} parent=0
    _
  %s8 = ssub.s32 1, %s6
  %s9 = scalar_select 0, %s8, %s6
  %v10 = vstv %s4
  %11 = vst [vmem:[#allocation2] sm:$0x1] %v10
  // Predicated region
  $region2: #{deepspectra_forward.3} parent=0 // pred_check
    _
  $region3: #{deepspectra_forward.3} parent=0 // pred_check_branch
    %13 = sbr.rel (0) target = $region5
  $region4: #{deepspectra_forward.3} parent=0 // pred_region
    _
  $region5: #{deepspectra_forward.3} parent=0 // pred_fallthru
    _
  // Predicated region
  $region6: #{deepspectra_forward.3} parent=0 // pred_check
    _
  $region7: #{deepspectra_forward.3} parent=0 // pred_check_branch
    %15 = sbr.rel (0) target = $region9
  $region8: #{deepspectra_forward.3} parent=0 // pred_region
    _
  $region9: #{deepspectra_forward.3} parent=0 // pred_fallthru
    _
  // Predicated region
  $region10: #{deepspectra_forward.3} parent=0 // pred_check
    _
  $region11: #{deepspectra_forward.3} parent=0 // pred_check_branch
    %17 = sbr.rel (0) target = $region13
  $region12: #{deepspectra_forward.3} parent=0 // pred_region
    _
  $region13: #{deepspectra_forward.3} parent=0 // pred_fallthru
    _
  // Predicated region
  $region14: #{deepspectra_forward.3} parent=0 // pred_check
    _
  $region15: #{deepspectra_forward.3} parent=0 // pred_check_branch
    %19 = sbr.rel (0) target = $region17
  $region16: #{deepspectra_forward.3} parent=0 // pred_region
    _
  $region17: #{deepspectra_forward.3} parent=0 // pred_fallthru
    _
  // Predicated region
  $region18: #{deepspectra_forward.3} parent=0 // pred_check
    _
  $region19: #{deepspectra_forward.3} parent=0 // pred_check_branch
    %21 = sbr.rel (0) target = $region21
  $region20: #{deepspectra_forward.3} parent=0 // pred_region
    _
  $region21: #{deepspectra_forward.3} parent=0 // pred_fallthru
    _
  %v22 = vld [vmem:[%s0] sm:$0xff]
  %v23 = vld [vmem:[%s0 + $0x8] sm:$0xff]
  %v24 = vld [vmem:[%s1] sm:$0xf]
  %v25 = vld [vmem:[%s1 + $0x4] sm:$0xf]
  %v26 = vld [vmem:[%s1 + $0x8] sm:$0xf]
  %v27 = vld [vmem:[%s1 + $0xc] sm:$0xf]
  %v28 = vld [vmem:[%s1 + $0x10] sm:$0xf]
  %v29 = vld [vmem:[%s1 + $0x14] sm:$0xf]
  %v30 = vld [vmem:[%s1 + $0x18] sm:$0xf]
  %v31 = vld [vmem:[%s1 + $0x1c] sm:$0xf]
  %v32 = vld [vmem:[%s1 + $0x20] sm:$0xf]
  %v33 = vld [vmem:[%s1 + $0x24] sm:$0xf]
  %v34 = vld [vmem:[%s1 + $0x28] sm:$0xf]
  %v35 = vld [vmem:[%s1 + $0x2c] sm:$0xf]
  %v36 = vld [vmem:[%s1 + $0x30] sm:$0xf]
  %v37 = vld [vmem:[%s1 + $0x34] sm:$0xf]
  %v38 = vld [vmem:[%s1 + $0x38] sm:$0xf]
  %v39 = vld [vmem:[%s1 + $0x3c] sm:$0xf]
  %v40 = vld [vmem:[%s1 + $0x40] sm:$0xf]
  %v41 = vld [vmem:[%s1 + $0x44] sm:$0xf]
  %v42 = vld [vmem:[%s1 + $0x48] sm:$0xf]
  %v43 = vld [vmem:[%s1 + $0x4c] sm:$0xf]
  %v44 = vld [vmem:[%s1 + $0x50] sm:$0xf]
  %v45 = vld [vmem:[%s1 + $0x54] sm:$0xf]
  %v46 = vld [vmem:[%s1 + $0x58] sm:$0xf]
  %v47 = vld [vmem:[%s1 + $0x5c] sm:$0xf]
  %v48 = vld [vmem:[%s1 + $0x60] sm:$0xf]
  %v49 = vld [vmem:[%s1 + $0x64] sm:$0xf]
  %v50 = vld [vmem:[%s1 + $0x68] sm:$0xf]
  %v51 = vld [vmem:[%s1 + $0x6c] sm:$0xf]
  %v52 = vld [vmem:[%s1 + $0x70] sm:$0xf]
  %v53 = vld [vmem:[%s1 + $0x74] sm:$0xf]
  %v54 = vld [vmem:[%s1 + $0x78] sm:$0xf]
  %v55 = vld [vmem:[%s1 + $0x7c] sm:$0xf]
  %v56 = vld [vmem:[%s1 + $0x80] sm:$0xf]
  %v57 = vld [vmem:[%s1 + $0x84] sm:$0xf]
  %v58 = vld [vmem:[%s1 + $0x88] sm:$0xf]
  %v59 = vld [vmem:[%s1 + $0x8c] sm:$0xf]
  %v60 = vld [vmem:[%s1 + $0x90] sm:$0xf]
  %v61 = vld [vmem:[%s1 + $0x94] sm:$0xf]
  %v62 = vld [vmem:[%s1 + $0x98] sm:$0xf]
  %v63 = vld [vmem:[%s1 + $0x9c] sm:$0xf]
  %v64 = vld [vmem:[%s1 + $0xa0] sm:$0xf]
  %v65 = vld [vmem:[%s1 + $0xa4] sm:$0xf]
  %v66 = vld [vmem:[%s1 + $0xa8] sm:$0xf]
  %v67 = vld [vmem:[%s1 + $0xac] sm:$0xf]
  %v68 = vld [vmem:[%s1 + $0xb0] sm:$0xf]
  %v69 = vld [vmem:[%s1 + $0xb4] sm:$0xf]
  %v70 = vld [vmem:[%s1 + $0xb8] sm:$0xf]
  %v71 = vld [vmem:[%s1 + $0xbc] sm:$0xf]
  %v72 = vld [vmem:[%s1 + $0xc0] sm:$0xf]
  %v73 = vld [vmem:[%s1 + $0xc4] sm:$0xf]
  %v74 = vld [vmem:[%s1 + $0xc8] sm:$0xf]
  %v75 = vld [vmem:[%s1 + $0xcc] sm:$0xf]
  %v76 = vld [vmem:[%s1 + $0xd0] sm:$0xf]
  %v77 = vld [vmem:[%s1 + $0xd4] sm:$0xf]
  %v78 = vld [vmem:[%s1 + $0xd8] sm:$0xf]
  %v79 = vld [vmem:[%s1 + $0xdc] sm:$0xf]
  %v80 = vld [vmem:[%s1 + $0xe0] sm:$0xf]
  %v81 = vld [vmem:[%s1 + $0xe4] sm:$0xf]
  %v82 = vld [vmem:[%s1 + $0xe8] sm:$0xf]
  %v83 = vld [vmem:[%s1 + $0xec] sm:$0xf]
  %v84 = vld [vmem:[%s1 + $0xf0] sm:$0xf]
  %v85 = vld [vmem:[%s1 + $0xf4] sm:$0xf]
  %v86 = vld [vmem:[%s1 + $0xf8] sm:$0xf]
  %v87 = vld [vmem:[%s1 + $0xfc] sm:$0xf]
  %v88 = vld [vmem:[%s1 + $0x100] sm:$0xf]
  %v89 = vld [vmem:[%s1 + $0x104] sm:$0xf]
  %v90 = vld [vmem:[%s1 + $0x108] sm:$0xf]
  %v91 = vld [vmem:[%s1 + $0x10c] sm:$0xf]
  %v92 = vld [vmem:[%s1 + $0x110] sm:$0xf]
  %v93 = vld [vmem:[%s1 + $0x114] sm:$0xf]
  %v94 = vld [vmem:[%s1 + $0x118] sm:$0xf]
  %v95 = vld [vmem:[%s1 + $0x11c] sm:$0xf]
  %v96 = vld [vmem:[%s1 + $0x120] sm:$0xf]
  %v97 = vld [vmem:[%s1 + $0x124] sm:$0xf]
  %v98 = vld [vmem:[%s1 + $0x128] sm:$0xf]
  %v99 = vld [vmem:[%s1 + $0x12c] sm:$0xf]
  %v100 = vld [vmem:[%s1 + $0x130] sm:$0xf]
  %v101 = vld [vmem:[%s1 + $0x134] sm:$0xf]
  %v102 = vld [vmem:[%s1 + $0x138] sm:$0xf]
  %v103 = vld [vmem:[%s1 + $0x13c] sm:$0xf]
  %v104 = vld [vmem:[%s1 + $0x140] sm:$0xf]
  %v105 = vld [vmem:[%s1 + $0x144] sm:$0xf]
  %v106 = vld [vmem:[%s1 + $0x148] sm:$0xf]
  %v107 = vld [vmem:[%s1 + $0x14c] sm:$0xf]
  %v108 = vld [vmem:[%s1 + $0x150] sm:$0xf]
  %v109 = vld [vmem:[%s1 + $0x154] sm:$0xf]
  %v110 = vld [vmem:[%s1 + $0x158] sm:$0xf]
  %v111 = vld [vmem:[%s1 + $0x15c] sm:$0xf]
  %v112 = vld [vmem:[%s1 + $0x160] sm:$0xf]
  %v113 = vld [vmem:[%s1 + $0x164] sm:$0xf]
  %v114 = vld [vmem:[%s1 + $0x168] sm:$0xf]
  %v115 = vld [vmem:[%s1 + $0x16c] sm:$0xf]
  %v116 = vld [vmem:[%s1 + $0x170] sm:$0xf]
  %v117 = vld [vmem:[%s1 + $0x174] sm:$0xf]
  %v118 = vld [vmem:[%s1 + $0x178] sm:$0xf]
  %v119 = vld [vmem:[%s1 + $0x17c] sm:$0xf]
  %v120 = vld [vmem:[%s1 + $0x180] sm:$0xf]
  %v121 = vld [vmem:[%s1 + $0x184] sm:$0xf]
  %v122 = vld [vmem:[%s1 + $0x188] sm:$0xf]
  %v123 = vld [vmem:[%s1 + $0x18c] sm:$0xf]
  %v124 = vld [vmem:[%s1 + $0x190] sm:$0xf]
  %v125 = vld [vmem:[%s1 + $0x194] sm:$0xf]
  %v126 = vld [vmem:[%s1 + $0x198] sm:$0xf]
  %v127 = vld [vmem:[%s1 + $0x19c] sm:$0xf]
  %v128 = vld [vmem:[%s1 + $0x1a0] sm:$0xf]
  %v129 = vld [vmem:[%s1 + $0x1a4] sm:$0xf]
  %v130 = vld [vmem:[%s1 + $0x1a8] sm:$0xf]
  %v131 = vld [vmem:[%s1 + $0x1ac] sm:$0xf]
  %v132 = vld [vmem:[%s1 + $0x1b0] sm:$0xf]
  %v133 = vld [vmem:[%s1 + $0x1b4] sm:$0xf]
  %v134 = vld [vmem:[%s1 + $0x1b8] sm:$0xf]
  %v135 = vld [vmem:[%s1 + $0x1bc] sm:$0xf]
  %v136 = vld [vmem:[%s1 + $0x1c0] sm:$0xf]
  %v137 = vld [vmem:[%s1 + $0x1c4] sm:$0xf]
  %v138 = vld [vmem:[%s1 + $0x1c8] sm:$0xf]
  %v139 = vld [vmem:[%s1 + $0x1cc] sm:$0xf]
  %v140 = vld [vmem:[%s1 + $0x1d0] sm:$0xf]
  %v141 = vld [vmem:[%s1 + $0x1d4] sm:$0xf]
  %v142 = vld [vmem:[%s1 + $0x1d8] sm:$0xf]
  %v143 = vld [vmem:[%s1 + $0x1dc] sm:$0xf]
  %v144 = vld [vmem:[%s1 + $0x1e0] sm:$0xf]
  %v145 = vld [vmem:[%s1 + $0x1e4] sm:$0xf]
  %v146 = vld [vmem:[%s1 + $0x1e8] sm:$0xf]
  %v147 = vld [vmem:[%s1 + $0x1ec] sm:$0xf]
  %v148 = vld [vmem:[%s1 + $0x1f0] sm:$0xf]
  %v149 = vld [vmem:[%s1 + $0x1f4] sm:$0xf]
  %v150 = vld [vmem:[%s1 + $0x1f8] sm:$0xf]
  %v151 = vld [vmem:[%s1 + $0x1fc] sm:$0xf]
  %v152 = vld [vmem:[%s1 + $0x200] sm:$0xf]
  %v153 = vld [vmem:[%s1 + $0x204] sm:$0xf]
  %v154 = vld [vmem:[%s1 + $0x208] sm:$0xf]
  %v155 = vld [vmem:[%s1 + $0x20c] sm:$0xf]
  %v156 = vld [vmem:[%s1 + $0x210] sm:$0xf]
  %v157 = vld [vmem:[%s1 + $0x214] sm:$0xf]
  %v158 = vld [vmem:[%s1 + $0x218] sm:$0xf]
  %v159 = vld [vmem:[%s1 + $0x21c] sm:$0xf]
  %v160 = vld [vmem:[%s1 + $0x220] sm:$0xf]
  %v161 = vld [vmem:[%s1 + $0x224] sm:$0xf]
  %v162 = vld [vmem:[%s1 + $0x228] sm:$0xf]
  %v163 = vld [vmem:[%s1 + $0x22c] sm:$0xf]
  %v164 = vld [vmem:[%s1 + $0x230] sm:$0xf]
  %v165 = vld [vmem:[%s1 + $0x234] sm:$0xf]
  %v166 = vld [vmem:[%s1 + $0x238] sm:$0xf]
  %v167 = vld [vmem:[%s1 + $0x23c] sm:$0xf]
  %v168 = vld [vmem:[%s1 + $0x240] sm:$0xf]
  %v169 = vld [vmem:[%s1 + $0x244] sm:$0xf]
  %v170 = vld [vmem:[%s1 + $0x248] sm:$0xf]
  %v171 = vld [vmem:[%s1 + $0x24c] sm:$0xf]
  %v172 = vld [vmem:[%s1 + $0x250] sm:$0xf]
  %v173 = vld [vmem:[%s1 + $0x254] sm:$0xf]
  %v174 = vld [vmem:[%s1 + $0x258] sm:$0xf]
  %v175 = vld [vmem:[%s1 + $0x25c] sm:$0xf]
  %v176 = vld [vmem:[%s1 + $0x260] sm:$0xf]
  %v177 = vld [vmem:[%s1 + $0x264] sm:$0xf]
  %v178 = vld [vmem:[%s1 + $0x268] sm:$0xf]
  %v179 = vld [vmem:[%s1 + $0x26c] sm:$0xf]
  %v180 = vld [vmem:[%s1 + $0x270] sm:$0xf]
  %v181 = vld [vmem:[%s1 + $0x274] sm:$0xf]
  %v182 = vld [vmem:[%s1 + $0x278] sm:$0xf]
  %v183 = vld [vmem:[%s1 + $0x27c] sm:$0xf]
  %v184 = vld [vmem:[%s1 + $0x280] sm:$0xf]
  %v185 = vld [vmem:[%s1 + $0x284] sm:$0xf]
  %v186 = vld [vmem:[%s1 + $0x288] sm:$0xf]
  %v187 = vld [vmem:[%s1 + $0x28c] sm:$0xf]
  %v188 = vld [vmem:[%s1 + $0x290] sm:$0xf]
  %v189 = vld [vmem:[%s1 + $0x294] sm:$0xf]
  %v190 = vld [vmem:[%s1 + $0x298] sm:$0xf]
  %v191 = vld [vmem:[%s1 + $0x29c] sm:$0xf]
  %v192 = vld [vmem:[%s1 + $0x2a0] sm:$0xf]
  %v193 = vld [vmem:[%s1 + $0x2a4] sm:$0xf]
  %v194 = vld [vmem:[%s1 + $0x2a8] sm:$0xf]
  %v195 = vld [vmem:[%s1 + $0x2ac] sm:$0xf]
  %v196 = vld [vmem:[%s1 + $0x2b0] sm:$0xf]
  %v197 = vld [vmem:[%s1 + $0x2b4] sm:$0xf]
  %v198 = vld [vmem:[%s1 + $0x2b8] sm:$0xf]
  %v199 = vld [vmem:[%s1 + $0x2bc] sm:$0xf]
  %v200 = vld [vmem:[%s1 + $0x2c0] sm:$0xf]
  %v201 = vld [vmem:[%s1 + $0x2c4] sm:$0xf]
  %v202 = vld [vmem:[%s1 + $0x2c8] sm:$0xf]
  %v203 = vld [vmem:[%s1 + $0x2cc] sm:$0xf]
  %v204 = vld [vmem:[%s1 + $0x2d0] sm:$0xf]
  %v205 = vld [vmem:[%s1 + $0x2d4] sm:$0xf]
  %v206 = vld [vmem:[%s1 + $0x2d8] sm:$0xf]
  %v207 = vld [vmem:[%s1 + $0x2dc] sm:$0xf]
  %v208 = vld [vmem:[%s1 + $0x2e0] sm:$0xf]
  %v209 = vld [vmem:[%s1 + $0x2e4] sm:$0xf]
  %v210 = vld [vmem:[%s1 + $0x2e8] sm:$0xf]
  %v211 = vld [vmem:[%s1 + $0x2ec] sm:$0xf]
  %v212 = vld [vmem:[%s1 + $0x2f0] sm:$0xf]
  %v213 = vld [vmem:[%s1 + $0x2f4] sm:$0xf]
  %v214 = vld [vmem:[%s1 + $0x2f8] sm:$0xf]
  %v215 = vld [vmem:[%s1 + $0x2fc] sm:$0xf]
  %v216 = vld [vmem:[%s1 + $0x300] sm:$0xf]
  %v217 = vld [vmem:[%s1 + $0x304] sm:$0xf]
  %v218 = vld [vmem:[%s1 + $0x308] sm:$0xf]
  %v219 = vld [vmem:[%s1 + $0x30c] sm:$0xf]
  %v220 = vld [vmem:[%s1 + $0x310] sm:$0xf]
  %v221 = vld [vmem:[%s1 + $0x314] sm:$0xf]
  %v222 = vld [vmem:[%s1 + $0x318] sm:$0xf]
  %v223 = vld [vmem:[%s1 + $0x31c] sm:$0xf]
  %v224 = vld [vmem:[%s1 + $0x320] sm:$0xf]
  %v225 = vld [vmem:[%s1 + $0x324] sm:$0xf]
  %v226 = vld [vmem:[%s1 + $0x328] sm:$0xf]
  %v227 = vld [vmem:[%s1 + $0x32c] sm:$0xf]
  %v228 = vld [vmem:[%s1 + $0x330] sm:$0xf]
  %v229 = vld [vmem:[%s1 + $0x334] sm:$0xf]
  %v230 = vld [vmem:[%s1 + $0x338] sm:$0xf]
  %v231 = vld [vmem:[%s1 + $0x33c] sm:$0xf]
  %v232 = vld [vmem:[%s1 + $0x340] sm:$0xf]
  %v233 = vld [vmem:[%s1 + $0x344] sm:$0xf]
  %v234 = vld [vmem:[%s1 + $0x348] sm:$0xf]
  %v235 = vld [vmem:[%s1 + $0x34c] sm:$0xf]
  %v236 = vld [vmem:[%s1 + $0x350] sm:$0xf]
  %v237 = vld [vmem:[%s1 + $0x354] sm:$0xf]
  %v238 = vld [vmem:[%s1 + $0x358] sm:$0xf]
  %v239 = vld [vmem:[%s1 + $0x35c] sm:$0xf]
  %v240 = vld [vmem:[%s1 + $0x360] sm:$0xf]
  %v241 = vld [vmem:[%s1 + $0x364] sm:$0xf]
  %v242 = vld [vmem:[%s1 + $0x368] sm:$0xf]
  %v243 = vld [vmem:[%s1 + $0x36c] sm:$0xf]
  %v244 = vld [vmem:[%s1 + $0x370] sm:$0xf]
  %v245 = vld [vmem:[%s1 + $0x374] sm:$0xf]
  %v246 = vld [vmem:[%s1 + $0x378] sm:$0xf]
  %v247 = vld [vmem:[%s1 + $0x37c] sm:$0xf]
  %v248 = vld [vmem:[%s1 + $0x380] sm:$0xf]
  %v249 = vld [vmem:[%s1 + $0x384] sm:$0xf]
  %v250 = vld [vmem:[%s1 + $0x388] sm:$0xf]
  %v251 = vld [vmem:[%s1 + $0x38c] sm:$0xf]
  %v252 = vld [vmem:[%s1 + $0x390] sm:$0xf]
  %v253 = vld [vmem:[%s1 + $0x394] sm:$0xf]
  %v254 = vld [vmem:[%s1 + $0x398] sm:$0xf]
  %v255 = vld [vmem:[%s1 + $0x39c] sm:$0xf]
  %v256 = vld [vmem:[%s1 + $0x3a0] sm:$0xf]
  %v257 = vld [vmem:[%s1 + $0x3a4] sm:$0xf]
  %v258 = vld [vmem:[%s1 + $0x3a8] sm:$0xf]
  %v259 = vld [vmem:[%s1 + $0x3ac] sm:$0xf]
  %v260 = vld [vmem:[%s1 + $0x3b0] sm:$0xf]
  %v261 = vld [vmem:[%s1 + $0x3b4] sm:$0xf]
  %v262 = vld [vmem:[%s1 + $0x3b8] sm:$0xf]
  %v263 = vld [vmem:[%s1 + $0x3bc] sm:$0xf]
  %v264 = vld [vmem:[%s1 + $0x3c0] sm:$0xf]
  %v265 = vld [vmem:[%s1 + $0x3c4] sm:$0xf]
  %v266 = vld [vmem:[%s1 + $0x3c8] sm:$0xf]
  %v267 = vld [vmem:[%s1 + $0x3cc] sm:$0xf]
  %v268 = vld [vmem:[%s1 + $0x3d0] sm:$0xf]
  %v269 = vld [vmem:[%s1 + $0x3d4] sm:$0xf]
  %v270 = vld [vmem:[%s1 + $0x3d8] sm:$0xf]
  %v271 = vld [vmem:[%s1 + $0x3dc] sm:$0xf]
  %v272 = vld [vmem:[%s1 + $0x3e0] sm:$0xf]
  %v273 = vld [vmem:[%s1 + $0x3e4] sm:$0xf]
  %v274 = vld [vmem:[%s1 + $0x3e8] sm:$0xf]
  %v275 = vld [vmem:[%s1 + $0x3ec] sm:$0xf]
  %v276 = vld [vmem:[%s1 + $0x3f0] sm:$0xf]
  %v277 = vld [vmem:[%s1 + $0x3f4] sm:$0xf]
  %v278 = vld [vmem:[%s1 + $0x3f8] sm:$0xf]
  %v279 = vld [vmem:[%s1 + $0x3fc] sm:$0xf]
  %v280 = vld [vmem:[%s2] sm:$0x1]
  %v282 = vperm.slane %v280, 0
  %285 = vst [vmem:[#allocation1] ss:$9 sm:$0xff] %v22
  %v286 = vld [vmem:[#allocation1] sm:$0xff]
  %v287 = vld [vmem:[#allocation1 + $0x9] sm:$0xff]
  %v288 = vld [vmem:[#allocation1 + $0x12] sm:$0xff]
  %v289 = vld [vmem:[#allocation1 + $0x1b] sm:$0xff]
  %v290 = vld [vmem:[#allocation1 + $0x24] sm:$0xff]
  %v291 = vld [vmem:[#allocation1 + $0x2d] sm:$0xff]
  %v292 = vld [vmem:[#allocation1 + $0x36] sm:$0xff]
  %v293 = vld [vmem:[#allocation1 + $0x3f] sm:$0xff]
  %295 = vst [vmem:[#allocation1] ss:$9 sm:$0xff] %v23
  %v296 = vld [vmem:[#allocation1] sm:$0xff]
  %v297 = vld [vmem:[#allocation1 + $0x9] sm:$0xff]
  %v298 = vld [vmem:[#allocation1 + $0x12] sm:$0xff]
  %v299 = vld [vmem:[#allocation1 + $0x1b] sm:$0xff]
  %v300 = vld [vmem:[#allocation1 + $0x24] sm:$0xff]
  %v301 = vld [vmem:[#allocation1 + $0x2d] sm:$0xff]
  %v302 = vld [vmem:[#allocation1 + $0x36] sm:$0xff]
  %v303 = vld [vmem:[#allocation1 + $0x3f] sm:$0xff]
  %v576 = vunpack.c.l.b16 %v24
  %v577 = vunpack.c.l.b16 %v25
  %v578 = vunpack.c.l.b16 %v26
  %v579 = vunpack.c.l.b16 %v27
  %v580 = vunpack.c.l.b16 %v28
  %v581 = vunpack.c.l.b16 %v29
  %v582 = vunpack.c.l.b16 %v30
  %v583 = vunpack.c.l.b16 %v31
  %v584 = vunpack.c.l.b16 %v32
  %v585 = vunpack.c.l.b16 %v33
  %v586 = vunpack.c.l.b16 %v34
  %v587 = vunpack.c.l.b16 %v35
  %v588 = vunpack.c.l.b16 %v36
  %v589 = vunpack.c.l.b16 %v37
  %v590 = vunpack.c.l.b16 %v38
  %v591 = vunpack.c.l.b16 %v39
  %v592 = vunpack.c.l.b16 %v40
  %v593 = vunpack.c.l.b16 %v41
  %v594 = vunpack.c.l.b16 %v42
  %v595 = vunpack.c.l.b16 %v43
  %v596 = vunpack.c.l.b16 %v44
  %v597 = vunpack.c.l.b16 %v45
  %v598 = vunpack.c.l.b16 %v46
  %v599 = vunpack.c.l.b16 %v47
  %v600 = vunpack.c.l.b16 %v48
  %v601 = vunpack.c.l.b16 %v49
  %v602 = vunpack.c.l.b16 %v50
  %v603 = vunpack.c.l.b16 %v51
  %v604 = vunpack.c.l.b16 %v52
  %v605 = vunpack.c.l.b16 %v53
  %v606 = vunpack.c.l.b16 %v54
  %v607 = vunpack.c.l.b16 %v55
  %v608 = vunpack.c.l.b16 %v56
  %v609 = vunpack.c.l.b16 %v57
  %v610 = vunpack.c.l.b16 %v58
  %v611 = vunpack.c.l.b16 %v59
  %v612 = vunpack.c.l.b16 %v60
  %v613 = vunpack.c.l.b16 %v61
  %v614 = vunpack.c.l.b16 %v62
  %v615 = vunpack.c.l.b16 %v63
  %v616 = vunpack.c.l.b16 %v64
  %v617 = vunpack.c.l.b16 %v65
  %v618 = vunpack.c.l.b16 %v66
  %v619 = vunpack.c.l.b16 %v67
  %v620 = vunpack.c.l.b16 %v68
  %v621 = vunpack.c.l.b16 %v69
  %v622 = vunpack.c.l.b16 %v70
  %v623 = vunpack.c.l.b16 %v71
  %v624 = vunpack.c.l.b16 %v72
  %v625 = vunpack.c.l.b16 %v73
  %v626 = vunpack.c.l.b16 %v74
  %v627 = vunpack.c.l.b16 %v75
  %v628 = vunpack.c.l.b16 %v76
  %v629 = vunpack.c.l.b16 %v77
  %v630 = vunpack.c.l.b16 %v78
  %v631 = vunpack.c.l.b16 %v79
  %v632 = vunpack.c.l.b16 %v80
  %v633 = vunpack.c.l.b16 %v81
  %v634 = vunpack.c.l.b16 %v82
  %v635 = vunpack.c.l.b16 %v83
  %v636 = vunpack.c.l.b16 %v84
  %v637 = vunpack.c.l.b16 %v85
  %v638 = vunpack.c.l.b16 %v86
  %v639 = vunpack.c.l.b16 %v87
  %v640 = vunpack.c.l.b16 %v88
  %v641 = vunpack.c.l.b16 %v89
  %v642 = vunpack.c.l.b16 %v90
  %v643 = vunpack.c.l.b16 %v91
  %v644 = vunpack.c.l.b16 %v92
  %v645 = vunpack.c.l.b16 %v93
  %v646 = vunpack.c.l.b16 %v94
  %v647 = vunpack.c.l.b16 %v95
  %v648 = vunpack.c.l.b16 %v96
  %v649 = vunpack.c.l.b16 %v97
  %v650 = vunpack.c.l.b16 %v98
  %v651 = vunpack.c.l.b16 %v99
  %v652 = vunpack.c.l.b16 %v100
  %v653 = vunpack.c.l.b16 %v101
  %v654 = vunpack.c.l.b16 %v102
  %v655 = vunpack.c.l.b16 %v103
  %v656 = vunpack.c.l.b16 %v104
  %v657 = vunpack.c.l.b16 %v105
  %v658 = vunpack.c.l.b16 %v106
  %v659 = vunpack.c.l.b16 %v107
  %v660 = vunpack.c.l.b16 %v108
  %v661 = vunpack.c.l.b16 %v109
  %v662 = vunpack.c.l.b16 %v110
  %v663 = vunpack.c.l.b16 %v111
  %v664 = vunpack.c.l.b16 %v112
  %v665 = vunpack.c.l.b16 %v113
  %v666 = vunpack.c.l.b16 %v114
  %v667 = vunpack.c.l.b16 %v115
  %v668 = vunpack.c.l.b16 %v116
  %v669 = vunpack.c.l.b16 %v117
  %v670 = vunpack.c.l.b16 %v118
  %v671 = vunpack.c.l.b16 %v119
  %v672 = vunpack.c.l.b16 %v120
  %v673 = vunpack.c.l.b16 %v121
  %v674 = vunpack.c.l.b16 %v122
  %v675 = vunpack.c.l.b16 %v123
  %v676 = vunpack.c.l.b16 %v124
  %v677 = vunpack.c.l.b16 %v125
  %v678 = vunpack.c.l.b16 %v126
  %v679 = vunpack.c.l.b16 %v127
  %v680 = vunpack.c.l.b16 %v128
  %v681 = vunpack.c.l.b16 %v129
  %v682 = vunpack.c.l.b16 %v130
  %v683 = vunpack.c.l.b16 %v131
  %v684 = vunpack.c.l.b16 %v132
  %v685 = vunpack.c.l.b16 %v133
  %v686 = vunpack.c.l.b16 %v134
  %v687 = vunpack.c.l.b16 %v135
  %v688 = vunpack.c.l.b16 %v136
  %v689 = vunpack.c.l.b16 %v137
  %v690 = vunpack.c.l.b16 %v138
  %v691 = vunpack.c.l.b16 %v139
  %v692 = vunpack.c.l.b16 %v140
  %v693 = vunpack.c.l.b16 %v141
  %v694 = vunpack.c.l.b16 %v142
  %v695 = vunpack.c.l.b16 %v143
  %v696 = vunpack.c.l.b16 %v144
  %v697 = vunpack.c.l.b16 %v145
  %v698 = vunpack.c.l.b16 %v146
  %v699 = vunpack.c.l.b16 %v147
  %v700 = vunpack.c.l.b16 %v148
  %v701 = vunpack.c.l.b16 %v149
  %v702 = vunpack.c.l.b16 %v150
  %v703 = vunpack.c.l.b16 %v151
  %v704 = vunpack.c.l.b16 %v152
  %v705 = vunpack.c.l.b16 %v153
  %v706 = vunpack.c.l.b16 %v154
  %v707 = vunpack.c.l.b16 %v155
  %v708 = vunpack.c.l.b16 %v156
  %v709 = vunpack.c.l.b16 %v157
  %v710 = vunpack.c.l.b16 %v158
  %v711 = vunpack.c.l.b16 %v159
  %v712 = vunpack.c.l.b16 %v160
  %v713 = vunpack.c.l.b16 %v161
  %v714 = vunpack.c.l.b16 %v162
  %v715 = vunpack.c.l.b16 %v163
  %v716 = vunpack.c.l.b16 %v164
  %v717 = vunpack.c.l.b16 %v165
  %v718 = vunpack.c.l.b16 %v166
  %v719 = vunpack.c.l.b16 %v167
  %v720 = vunpack.c.l.b16 %v168
  %v721 = vunpack.c.l.b16 %v169
  %v722 = vunpack.c.l.b16 %v170
  %v723 = vunpack.c.l.b16 %v171
  %v724 = vunpack.c.l.b16 %v172
  %v725 = vunpack.c.l.b16 %v173
  %v726 = vunpack.c.l.b16 %v174
  %v727 = vunpack.c.l.b16 %v175
  %v728 = vunpack.c.l.b16 %v176
  %v729 = vunpack.c.l.b16 %v177
  %v730 = vunpack.c.l.b16 %v178
  %v731 = vunpack.c.l.b16 %v179
  %v732 = vunpack.c.l.b16 %v180
  %v733 = vunpack.c.l.b16 %v181
  %v734 = vunpack.c.l.b16 %v182
  %v735 = vunpack.c.l.b16 %v183
  %v736 = vunpack.c.l.b16 %v184
  %v737 = vunpack.c.l.b16 %v185
  %v738 = vunpack.c.l.b16 %v186
  %v739 = vunpack.c.l.b16 %v187
  %v740 = vunpack.c.l.b16 %v188
  %v741 = vunpack.c.l.b16 %v189
  %v742 = vunpack.c.l.b16 %v190
  %v743 = vunpack.c.l.b16 %v191
  %v744 = vunpack.c.l.b16 %v192
  %v745 = vunpack.c.l.b16 %v193
  %v746 = vunpack.c.l.b16 %v194
  %v747 = vunpack.c.l.b16 %v195
  %v748 = vunpack.c.l.b16 %v196
  %v749 = vunpack.c.l.b16 %v197
  %v750 = vunpack.c.l.b16 %v198
  %v751 = vunpack.c.l.b16 %v199
  %v752 = vunpack.c.l.b16 %v200
  %v753 = vunpack.c.l.b16 %v201
  %v754 = vunpack.c.l.b16 %v202
  %v755 = vunpack.c.l.b16 %v203
  %v756 = vunpack.c.l.b16 %v204
  %v757 = vunpack.c.l.b16 %v205
  %v758 = vunpack.c.l.b16 %v206
  %v759 = vunpack.c.l.b16 %v207
  %v760 = vunpack.c.l.b16 %v208
  %v761 = vunpack.c.l.b16 %v209
  %v762 = vunpack.c.l.b16 %v210
  %v763 = vunpack.c.l.b16 %v211
  %v764 = vunpack.c.l.b16 %v212
  %v765 = vunpack.c.l.b16 %v213
  %v766 = vunpack.c.l.b16 %v214
  %v767 = vunpack.c.l.b16 %v215
  %v768 = vunpack.c.l.b16 %v216
  %v769 = vunpack.c.l.b16 %v217
  %v770 = vunpack.c.l.b16 %v218
  %v771 = vunpack.c.l.b16 %v219
  %v772 = vunpack.c.l.b16 %v220
  %v773 = vunpack.c.l.b16 %v221
  %v774 = vunpack.c.l.b16 %v222
  %v775 = vunpack.c.l.b16 %v223
  %v776 = vunpack.c.l.b16 %v224
  %v777 = vunpack.c.l.b16 %v225
  %v778 = vunpack.c.l.b16 %v226
  %v779 = vunpack.c.l.b16 %v227
  %v780 = vunpack.c.l.b16 %v228
  %v781 = vunpack.c.l.b16 %v229
  %v782 = vunpack.c.l.b16 %v230
  %v783 = vunpack.c.l.b16 %v231
  %v784 = vunpack.c.l.b16 %v232
  %v785 = vunpack.c.l.b16 %v233
  %v786 = vunpack.c.l.b16 %v234
  %v787 = vunpack.c.l.b16 %v235
  %v788 = vunpack.c.l.b16 %v236
  %v789 = vunpack.c.l.b16 %v237
  %v790 = vunpack.c.l.b16 %v238
  %v791 = vunpack.c.l.b16 %v239
  %v792 = vunpack.c.l.b16 %v240
  %v793 = vunpack.c.l.b16 %v241
  %v794 = vunpack.c.l.b16 %v242
  %v795 = vunpack.c.l.b16 %v243
  %v796 = vunpack.c.l.b16 %v244
  %v797 = vunpack.c.l.b16 %v245
  %v798 = vunpack.c.l.b16 %v246
  %v799 = vunpack.c.l.b16 %v247
  %v800 = vunpack.c.l.b16 %v248
  %v801 = vunpack.c.l.b16 %v249
  %v802 = vunpack.c.l.b16 %v250
  %v803 = vunpack.c.l.b16 %v251
  %v804 = vunpack.c.l.b16 %v252
  %v805 = vunpack.c.l.b16 %v253
  %v806 = vunpack.c.l.b16 %v254
  %v807 = vunpack.c.l.b16 %v255
  %v808 = vunpack.c.l.b16 %v256
  %v809 = vunpack.c.l.b16 %v257
  %v810 = vunpack.c.l.b16 %v258
  %v811 = vunpack.c.l.b16 %v259
  %v812 = vunpack.c.l.b16 %v260
  %v813 = vunpack.c.l.b16 %v261
  %v814 = vunpack.c.l.b16 %v262
  %v815 = vunpack.c.l.b16 %v263
  %v816 = vunpack.c.l.b16 %v264
  %v817 = vunpack.c.l.b16 %v265
  %v818 = vunpack.c.l.b16 %v266
  %v819 = vunpack.c.l.b16 %v267
  %v820 = vunpack.c.l.b16 %v268
  %v821 = vunpack.c.l.b16 %v269
  %v822 = vunpack.c.l.b16 %v270
  %v823 = vunpack.c.l.b16 %v271
  %v824 = vunpack.c.l.b16 %v272
  %v825 = vunpack.c.l.b16 %v273
  %v826 = vunpack.c.l.b16 %v274
  %v827 = vunpack.c.l.b16 %v275
  %v828 = vunpack.c.l.b16 %v276
  %v829 = vunpack.c.l.b16 %v277
  %v830 = vunpack.c.l.b16 %v278
  %v831 = vunpack.c.l.b16 %v279
  %v832 = vpack.c.b16 %v577, %v576
  %v833 = vpack.c.b16 %v579, %v578
  %v834 = vpack.c.b16 %v581, %v580
  %v835 = vpack.c.b16 %v583, %v582
  %v836 = vpack.c.b16 %v585, %v584
  %v837 = vpack.c.b16 %v587, %v586
  %v838 = vpack.c.b16 %v589, %v588
  %v839 = vpack.c.b16 %v591, %v590
  %v840 = vpack.c.b16 %v593, %v592
  %v841 = vpack.c.b16 %v595, %v594
  %v842 = vpack.c.b16 %v597, %v596
  %v843 = vpack.c.b16 %v599, %v598
  %v844 = vpack.c.b16 %v601, %v600
  %v845 = vpack.c.b16 %v603, %v602
  %v846 = vpack.c.b16 %v605, %v604
  %v847 = vpack.c.b16 %v607, %v606
  %v848 = vpack.c.b16 %v609, %v608
  %v849 = vpack.c.b16 %v611, %v610
  %v850 = vpack.c.b16 %v613, %v612
  %v851 = vpack.c.b16 %v615, %v614
  %v852 = vpack.c.b16 %v617, %v616
  %v853 = vpack.c.b16 %v619, %v618
  %v854 = vpack.c.b16 %v621, %v620
  %v855 = vpack.c.b16 %v623, %v622
  %v856 = vpack.c.b16 %v625, %v624
  %v857 = vpack.c.b16 %v627, %v626
  %v858 = vpack.c.b16 %v629, %v628
  %v859 = vpack.c.b16 %v631, %v630
  %v860 = vpack.c.b16 %v633, %v632
  %v861 = vpack.c.b16 %v635, %v634
  %v862 = vpack.c.b16 %v637, %v636
  %v863 = vpack.c.b16 %v639, %v638
  %v864 = vpack.c.b16 %v641, %v640
  %v865 = vpack.c.b16 %v643, %v642
  %v866 = vpack.c.b16 %v645, %v644
  %v867 = vpack.c.b16 %v647, %v646
  %v868 = vpack.c.b16 %v649, %v648
  %v869 = vpack.c.b16 %v651, %v650
  %v870 = vpack.c.b16 %v653, %v652
  %v871 = vpack.c.b16 %v655, %v654
  %v872 = vpack.c.b16 %v657, %v656
  %v873 = vpack.c.b16 %v659, %v658
  %v874 = vpack.c.b16 %v661, %v660
  %v875 = vpack.c.b16 %v663, %v662
  %v876 = vpack.c.b16 %v665, %v664
  %v877 = vpack.c.b16 %v667, %v666
  %v878 = vpack.c.b16 %v669, %v668
  %v879 = vpack.c.b16 %v671, %v670
  %v880 = vpack.c.b16 %v673, %v672
  %v881 = vpack.c.b16 %v675, %v674
  %v882 = vpack.c.b16 %v677, %v676
  %v883 = vpack.c.b16 %v679, %v678
  %v884 = vpack.c.b16 %v681, %v680
  %v885 = vpack.c.b16 %v683, %v682
  %v886 = vpack.c.b16 %v685, %v684
  %v887 = vpack.c.b16 %v687, %v686
  %v888 = vpack.c.b16 %v689, %v688
  %v889 = vpack.c.b16 %v691, %v690
  %v890 = vpack.c.b16 %v693, %v692
  %v891 = vpack.c.b16 %v695, %v694
  %v892 = vpack.c.b16 %v697, %v696
  %v893 = vpack.c.b16 %v699, %v698
  %v894 = vpack.c.b16 %v701, %v700
  %v895 = vpack.c.b16 %v703, %v702
  %v896 = vpack.c.b16 %v705, %v704
  %v897 = vpack.c.b16 %v707, %v706
  %v898 = vpack.c.b16 %v709, %v708
  %v899 = vpack.c.b16 %v711, %v710
  %v900 = vpack.c.b16 %v713, %v712
  %v901 = vpack.c.b16 %v715, %v714
  %v902 = vpack.c.b16 %v717, %v716
  %v903 = vpack.c.b16 %v719, %v718
  %v904 = vpack.c.b16 %v721, %v720
  %v905 = vpack.c.b16 %v723, %v722
  %v906 = vpack.c.b16 %v725, %v724
  %v907 = vpack.c.b16 %v727, %v726
  %v908 = vpack.c.b16 %v729, %v728
  %v909 = vpack.c.b16 %v731, %v730
  %v910 = vpack.c.b16 %v733, %v732
  %v911 = vpack.c.b16 %v735, %v734
  %v912 = vpack.c.b16 %v737, %v736
  %v913 = vpack.c.b16 %v739, %v738
  %v914 = vpack.c.b16 %v741, %v740
  %v915 = vpack.c.b16 %v743, %v742
  %v916 = vpack.c.b16 %v745, %v744
  %v917 = vpack.c.b16 %v747, %v746
  %v918 = vpack.c.b16 %v749, %v748
  %v919 = vpack.c.b16 %v751, %v750
  %v920 = vpack.c.b16 %v753, %v752
  %v921 = vpack.c.b16 %v755, %v754
  %v922 = vpack.c.b16 %v757, %v756
  %v923 = vpack.c.b16 %v759, %v758
  %v924 = vpack.c.b16 %v761, %v760
  %v925 = vpack.c.b16 %v763, %v762
  %v926 = vpack.c.b16 %v765, %v764
  %v927 = vpack.c.b16 %v767, %v766
  %v928 = vpack.c.b16 %v769, %v768
  %v929 = vpack.c.b16 %v771, %v770
  %v930 = vpack.c.b16 %v773, %v772
  %v931 = vpack.c.b16 %v775, %v774
  %v932 = vpack.c.b16 %v777, %v776
  %v933 = vpack.c.b16 %v779, %v778
  %v934 = vpack.c.b16 %v781, %v780
  %v935 = vpack.c.b16 %v783, %v782
  %v936 = vpack.c.b16 %v785, %v784
  %v937 = vpack.c.b16 %v787, %v786
  %v938 = vpack.c.b16 %v789, %v788
  %v939 = vpack.c.b16 %v791, %v790
  %v940 = vpack.c.b16 %v793, %v792
  %v941 = vpack.c.b16 %v795, %v794
  %v942 = vpack.c.b16 %v797, %v796
  %v943 = vpack.c.b16 %v799, %v798
  %v944 = vpack.c.b16 %v801, %v800
  %v945 = vpack.c.b16 %v803, %v802
  %v946 = vpack.c.b16 %v805, %v804
  %v947 = vpack.c.b16 %v807, %v806
  %v948 = vpack.c.b16 %v809, %v808
  %v949 = vpack.c.b16 %v811, %v810
  %v950 = vpack.c.b16 %v813, %v812
  %v951 = vpack.c.b16 %v815, %v814
  %v952 = vpack.c.b16 %v817, %v816
  %v953 = vpack.c.b16 %v819, %v818
  %v954 = vpack.c.b16 %v821, %v820
  %v955 = vpack.c.b16 %v823, %v822
  %v956 = vpack.c.b16 %v825, %v824
  %v957 = vpack.c.b16 %v827, %v826
  %v958 = vpack.c.b16 %v829, %v828
  %v959 = vpack.c.b16 %v831, %v830
  %1088 = vmatpush.bf16.msra.mxu0 %v839
  %1089 = vmatpush.bf16.msra.mxu0 %v838
  %1090 = vmatpush.bf16.msra.mxu0 %v837
  %1091 = vmatpush.bf16.msra.mxu0 %v836
  %1092 = vmatpush.bf16.msra.mxu0 %v835
  %1093 = vmatpush.bf16.msra.mxu0 %v834
  %1094 = vmatpush.bf16.msra.mxu0 %v833
  %1095 = vmatpush.bf16.msra.mxu0 %v832
  %1096 = vmatmul.bf16.gmra.mxu0 %v286
  %v1097 = vpop.f32.mrf.mxu0
  %v1098 = vadd.f32 %v282, %v1097
  %v1099 = vpop.f32.mrf.mxu0
  %1100 = vdwg.mxu0
  %1101 = vmatpush.bf16.msra.mxu0 %v847
  %1102 = vmatpush.bf16.msra.mxu0 %v846
  %1103 = vmatpush.bf16.msra.mxu0 %v845
  %1104 = vmatpush.bf16.msra.mxu0 %v844
  %1105 = vmatpush.bf16.msra.mxu0 %v843
  %1106 = vmatpush.bf16.msra.mxu0 %v842
  %1107 = vmatpush.bf16.msra.mxu0 %v841
  %1108 = vmatpush.bf16.msra.mxu0 %v840
  %1109 = vmatmul.bf16.gmra.mxu0 %v287
  %v1110 = vpop.f32.mrf.mxu0
  %v1111 = vadd.f32 %v1098, %v1110
  %v1112 = vpop.f32.mrf.mxu0
  %1113 = vdwg.mxu0
  %1114 = vmatpush.bf16.msra.mxu0 %v855
  %1115 = vmatpush.bf16.msra.mxu0 %v854
  %1116 = vmatpush.bf16.msra.mxu0 %v853
  %1117 = vmatpush.bf16.msra.mxu0 %v852
  %1118 = vmatpush.bf16.msra.mxu0 %v851
  %1119 = vmatpush.bf16.msra.mxu0 %v850
  %1120 = vmatpush.bf16.msra.mxu0 %v849
  %1121 = vmatpush.bf16.msra.mxu0 %v848
  %1122 = vmatmul.bf16.gmra.mxu0 %v288
  %v1123 = vpop.f32.mrf.mxu0
  %v1124 = vadd.f32 %v1111, %v1123
  %v1125 = vpop.f32.mrf.mxu0
  %1126 = vdwg.mxu0
  %1127 = vmatpush.bf16.msra.mxu0 %v863
  %1128 = vmatpush.bf16.msra.mxu0 %v862
  %1129 = vmatpush.bf16.msra.mxu0 %v861
  %1130 = vmatpush.bf16.msra.mxu0 %v860
  %1131 = vmatpush.bf16.msra.mxu0 %v859
  %1132 = vmatpush.bf16.msra.mxu0 %v858
  %1133 = vmatpush.bf16.msra.mxu0 %v857
  %1134 = vmatpush.bf16.msra.mxu0 %v856
  %1135 = vmatmul.bf16.gmra.mxu0 %v289
  %v1136 = vpop.f32.mrf.mxu0
  %v1137 = vadd.f32 %v1124, %v1136
  %v1138 = vpop.f32.mrf.mxu0
  %1139 = vdwg.mxu0
  %1140 = vmatpush.bf16.msra.mxu0 %v871
  %1141 = vmatpush.bf16.msra.mxu0 %v870
  %1142 = vmatpush.bf16.msra.mxu0 %v869
  %1143 = vmatpush.bf16.msra.mxu0 %v868
  %1144 = vmatpush.bf16.msra.mxu0 %v867
  %1145 = vmatpush.bf16.msra.mxu0 %v866
  %1146 = vmatpush.bf16.msra.mxu0 %v865
  %1147 = vmatpush.bf16.msra.mxu0 %v864
  %1148 = vmatmul.bf16.gmra.mxu0 %v290
  %v1149 = vpop.f32.mrf.mxu0
  %v1150 = vadd.f32 %v1137, %v1149
  %v1151 = vpop.f32.mrf.mxu0
  %1152 = vdwg.mxu0
  %1153 = vmatpush.bf16.msra.mxu0 %v879
  %1154 = vmatpush.bf16.msra.mxu0 %v878
  %1155 = vmatpush.bf16.msra.mxu0 %v877
  %1156 = vmatpush.bf16.msra.mxu0 %v876
  %1157 = vmatpush.bf16.msra.mxu0 %v875
  %1158 = vmatpush.bf16.msra.mxu0 %v874
  %1159 = vmatpush.bf16.msra.mxu0 %v873
  %1160 = vmatpush.bf16.msra.mxu0 %v872
  %1161 = vmatmul.bf16.gmra.mxu0 %v291
  %v1162 = vpop.f32.mrf.mxu0
  %v1163 = vadd.f32 %v1150, %v1162
  %v1164 = vpop.f32.mrf.mxu0
  %1165 = vdwg.mxu0
  %1166 = vmatpush.bf16.msra.mxu0 %v887
  %1167 = vmatpush.bf16.msra.mxu0 %v886
  %1168 = vmatpush.bf16.msra.mxu0 %v885
  %1169 = vmatpush.bf16.msra.mxu0 %v884
  %1170 = vmatpush.bf16.msra.mxu0 %v883
  %1171 = vmatpush.bf16.msra.mxu0 %v882
  %1172 = vmatpush.bf16.msra.mxu0 %v881
  %1173 = vmatpush.bf16.msra.mxu0 %v880
  %1174 = vmatmul.bf16.gmra.mxu0 %v292
  %v1175 = vpop.f32.mrf.mxu0
  %v1176 = vadd.f32 %v1163, %v1175
  %v1177 = vpop.f32.mrf.mxu0
  %1178 = vdwg.mxu0
  %1179 = vmatpush.bf16.msra.mxu0 %v895
  %1180 = vmatpush.bf16.msra.mxu0 %v894
  %1181 = vmatpush.bf16.msra.mxu0 %v893
  %1182 = vmatpush.bf16.msra.mxu0 %v892
  %1183 = vmatpush.bf16.msra.mxu0 %v891
  %1184 = vmatpush.bf16.msra.mxu0 %v890
  %1185 = vmatpush.bf16.msra.mxu0 %v889
  %1186 = vmatpush.bf16.msra.mxu0 %v888
  %1187 = vmatmul.bf16.gmra.mxu0 %v293
  %v1188 = vpop.f32.mrf.mxu0
  %v1189 = vadd.f32 %v1176, %v1188
  %v1190 = vpop.f32.mrf.mxu0
  %1191 = vdwg.mxu0
  %1192 = vmatpush.bf16.msra.mxu0 %v903
  %1193 = vmatpush.bf16.msra.mxu0 %v902
  %1194 = vmatpush.bf16.msra.mxu0 %v901
  %1195 = vmatpush.bf16.msra.mxu0 %v900
  %1196 = vmatpush.bf16.msra.mxu0 %v899
  %1197 = vmatpush.bf16.msra.mxu0 %v898
  %1198 = vmatpush.bf16.msra.mxu0 %v897
  %1199 = vmatpush.bf16.msra.mxu0 %v896
  %1200 = vmatmul.bf16.gmra.mxu0 %v296
  %v1201 = vpop.f32.mrf.mxu0
  %v1202 = vadd.f32 %v1189, %v1201
  %v1203 = vpop.f32.mrf.mxu0
  %1204 = vdwg.mxu0
  %1205 = vmatpush.bf16.msra.mxu0 %v911
  %1206 = vmatpush.bf16.msra.mxu0 %v910
  %1207 = vmatpush.bf16.msra.mxu0 %v909
  %1208 = vmatpush.bf16.msra.mxu0 %v908
  %1209 = vmatpush.bf16.msra.mxu0 %v907
  %1210 = vmatpush.bf16.msra.mxu0 %v906
  %1211 = vmatpush.bf16.msra.mxu0 %v905
  %1212 = vmatpush.bf16.msra.mxu0 %v904
  %1213 = vmatmul.bf16.gmra.mxu0 %v297
  %v1214 = vpop.f32.mrf.mxu0
  %v1215 = vadd.f32 %v1202, %v1214
  %v1216 = vpop.f32.mrf.mxu0
  %1217 = vdwg.mxu0
  %1218 = vmatpush.bf16.msra.mxu0 %v919
  %1219 = vmatpush.bf16.msra.mxu0 %v918
  %1220 = vmatpush.bf16.msra.mxu0 %v917
  %1221 = vmatpush.bf16.msra.mxu0 %v916
  %1222 = vmatpush.bf16.msra.mxu0 %v915
  %1223 = vmatpush.bf16.msra.mxu0 %v914
  %1224 = vmatpush.bf16.msra.mxu0 %v913
  %1225 = vmatpush.bf16.msra.mxu0 %v912
  %1226 = vmatmul.bf16.gmra.mxu0 %v298
  %v1227 = vpop.f32.mrf.mxu0
  %v1228 = vadd.f32 %v1215, %v1227
  %v1229 = vpop.f32.mrf.mxu0
  %1230 = vdwg.mxu0
  %1231 = vmatpush.bf16.msra.mxu0 %v927
  %1232 = vmatpush.bf16.msra.mxu0 %v926
  %1233 = vmatpush.bf16.msra.mxu0 %v925
  %1234 = vmatpush.bf16.msra.mxu0 %v924
  %1235 = vmatpush.bf16.msra.mxu0 %v923
  %1236 = vmatpush.bf16.msra.mxu0 %v922
  %1237 = vmatpush.bf16.msra.mxu0 %v921
  %1238 = vmatpush.bf16.msra.mxu0 %v920
  %1239 = vmatmul.bf16.gmra.mxu0 %v299
  %v1240 = vpop.f32.mrf.mxu0
  %v1241 = vadd.f32 %v1228, %v1240
  %v1242 = vpop.f32.mrf.mxu0
  %1243 = vdwg.mxu0
  %1244 = vmatpush.bf16.msra.mxu0 %v935
  %1245 = vmatpush.bf16.msra.mxu0 %v934
  %1246 = vmatpush.bf16.msra.mxu0 %v933
  %1247 = vmatpush.bf16.msra.mxu0 %v932
  %1248 = vmatpush.bf16.msra.mxu0 %v931
  %1249 = vmatpush.bf16.msra.mxu0 %v930
  %1250 = vmatpush.bf16.msra.mxu0 %v929
  %1251 = vmatpush.bf16.msra.mxu0 %v928
  %1252 = vmatmul.bf16.gmra.mxu0 %v300
  %v1253 = vpop.f32.mrf.mxu0
  %v1254 = vadd.f32 %v1241, %v1253
  %v1255 = vpop.f32.mrf.mxu0
  %1256 = vdwg.mxu0
  %1257 = vmatpush.bf16.msra.mxu0 %v943
  %1258 = vmatpush.bf16.msra.mxu0 %v942
  %1259 = vmatpush.bf16.msra.mxu0 %v941
  %1260 = vmatpush.bf16.msra.mxu0 %v940
  %1261 = vmatpush.bf16.msra.mxu0 %v939
  %1262 = vmatpush.bf16.msra.mxu0 %v938
  %1263 = vmatpush.bf16.msra.mxu0 %v937
  %1264 = vmatpush.bf16.msra.mxu0 %v936
  %1265 = vmatmul.bf16.gmra.mxu0 %v301
  %v1266 = vpop.f32.mrf.mxu0
  %v1267 = vadd.f32 %v1254, %v1266
  %v1268 = vpop.f32.mrf.mxu0
  %1269 = vdwg.mxu0
  %1270 = vmatpush.bf16.msra.mxu0 %v951
  %1271 = vmatpush.bf16.msra.mxu0 %v950
  %1272 = vmatpush.bf16.msra.mxu0 %v949
  %1273 = vmatpush.bf16.msra.mxu0 %v948
  %1274 = vmatpush.bf16.msra.mxu0 %v947
  %1275 = vmatpush.bf16.msra.mxu0 %v946
  %1276 = vmatpush.bf16.msra.mxu0 %v945
  %1277 = vmatpush.bf16.msra.mxu0 %v944
  %1278 = vmatmul.bf16.gmra.mxu0 %v302
  %v1279 = vpop.f32.mrf.mxu0
  %v1280 = vadd.f32 %v1267, %v1279
  %v1281 = vpop.f32.mrf.mxu0
  %1282 = vdwg.mxu0
  %1283 = vmatpush.bf16.msra.mxu0 %v959
  %1284 = vmatpush.bf16.msra.mxu0 %v958
  %1285 = vmatpush.bf16.msra.mxu0 %v957
  %1286 = vmatpush.bf16.msra.mxu0 %v956
  %1287 = vmatpush.bf16.msra.mxu0 %v955
  %1288 = vmatpush.bf16.msra.mxu0 %v954
  %1289 = vmatpush.bf16.msra.mxu0 %v953
  %1290 = vmatpush.bf16.msra.mxu0 %v952
  %1291 = vmatmul.bf16.gmra.mxu0 %v303
  %v1292 = vpop.f32.mrf.mxu0
  %v1293 = vadd.f32 %v1280, %v1292
  %v1294 = vpop.f32.mrf.mxu0
  %1295 = vdwg.mxu0
  %v1296 = vmax.f32 %v1293, 0.0
  %v1297 = vld [vmem:[%s3] sm:$0xff]
  %v1298 = vld [vmem:[%s3 + $0x8] sm:$0xff]
  %v1299 = vld [vmem:[%s3 + $0x10] sm:$0xff]
  %v1300 = vld [vmem:[%s3 + $0x18] sm:$0xff]
  %v1301 = vld [vmem:[%s3 + $0x20] sm:$0xff]
  %v1302 = vld [vmem:[%s3 + $0x28] sm:$0xff]
  %v1303 = vld [vmem:[%s3 + $0x30] sm:$0xff]
  %v1304 = vld [vmem:[%s3 + $0x38] sm:$0xff]
  %v1305 = vld [vmem:[#allocation2] sm:$0x1]
  %v1307 = vperm.slane %v1305, 0
  %vm1309 = vcmask 523264
  %v1311 = vsel %vm1309, %v1296, 0
  %1313 = vmatpush.msra.mxu0 0.0
  %1314 = vmatpush.msra.mxu0 0.0
  %1315 = vmatpush.msra.mxu0 0.0
  %1316 = vmatpush.msra.mxu0 0.0
  %1317 = vmatpush.msra.mxu0 0.0
  %1318 = vmatpush.msra.mxu0 0.0
  %1319 = vmatpush.msra.mxu0 0.0
  %1320 = vmatpush.msra.mxu0 0.0
  %1321 = vmatpush.msra.mxu0 %v1304
  %1322 = vmatpush.msra.mxu0 %v1303
  %1323 = vmatpush.msra.mxu0 %v1302
  %1324 = vmatpush.msra.mxu0 %v1301
  %1325 = vmatpush.msra.mxu0 %v1300
  %1326 = vmatpush.msra.mxu0 %v1299
  %1327 = vmatpush.msra.mxu0 %v1298
  %1328 = vmatpush.msra.mxu0 %v1297
  %1329 = vmatmul.f32.gmra.mxu0 %v1311
  %v1330 = vpop.f32.mrf.mxu0
  %v1331 = vadd.f32 %v1307, %v1330
  %1332 = vdwg.mxu0
  %vm1333 = vcmask 1024
  %1334 = vst.msk [vmem:[%s5] sm:$0x3] %vm1333, %v1331
  // Predicated region
  $region22: #{deepspectra_forward.3} parent=0 // pred_check
    _
  $region23: #{deepspectra_forward.3} parent=0 // pred_check_branch
    %1336 = sbr.rel (0) target = $region25
  $region24: #{deepspectra_forward.3} parent=0 // pred_region
    _
  $region25: #{deepspectra_forward.3} parent=0 // pred_fallthru
    _
  // Predicated region
  $region26: #{deepspectra_forward.3} parent=0 // pred_check
    _
  $region27: #{deepspectra_forward.3} parent=0 // pred_check_branch
    %1338 = sbr.rel (0) target = $region29
  $region28: #{deepspectra_forward.3} parent=0 // pred_region
    _
  $region29: #{deepspectra_forward.3} parent=0 // pred_fallthru
    _

// kernel: deepspectra_forward.2
$region0: #{deepspectra_forward.2}
  #allocation0 [shape = 'u32[]', space=smem, size = 0x4, offset = 0x4, fixed_abs, tag = 'smem constant byte address 0x4 - core index']
  #allocation1 [shape = 'u32[72,128]{1,0:T(1,128)}', space=vmem, size = 0x9000, scoped, tag = 'internal scratch']
  #allocation2 [shape = 'f32[8,132]{1,0:T(8,128)}', space=vmem, size = 0x2000, scoped, tag = 'scratch operand']
  #allocation3 [shape = 'f32[16,132]{1,0:T(8,128)}', space=vmem, size = 0x4000, scoped, tag = 'scratch operand']
  #allocation4 [shape = 'f32[4,132]{1,0:T(4,128)}', space=vmem, size = 0x1000, scoped, tag = 'scratch operand']
  %s0 = inlined_call_operand.vmem [shape: f32[2,7,128], index: 0, kind: input, shape index: {}]
  %s1 = inlined_call_operand.vmem [shape: f32[8,7], index: 1, kind: input, shape index: {}]
  %s2 = inlined_call_operand.vmem [shape: f32[8,1], index: 2, kind: input, shape index: {}]
  %s3 = inlined_call_operand.vmem [shape: f32[4,8], index: 3, kind: input, shape index: {}]
  %s4 = inlined_call_operand.vmem [shape: f32[4,1], index: 4, kind: input, shape index: {}]
  %s5 = inlined_call_operand.vmem [shape: f32[4,8], index: 5, kind: input, shape index: {}]
  %s6 = inlined_call_operand.vmem [shape: f32[4,1], index: 6, kind: input, shape index: {}]
  %s7 = inlined_call_operand.vmem [shape: f32[4,12], index: 7, kind: input, shape index: {}]
  %s8 = inlined_call_operand.vmem [shape: f32[4,1], index: 8, kind: input, shape index: {}]
  %s9 = inlined_call_operand.vmem [shape: f32[4,8], index: 9, kind: input, shape index: {}]
  %s10 = inlined_call_operand.vmem [shape: f32[4,1], index: 10, kind: input, shape index: {}]
  %s11 = inlined_call_operand.vmem [shape: f32[4,20], index: 11, kind: input, shape index: {}]
  %s12 = inlined_call_operand.vmem [shape: f32[4,1], index: 12, kind: input, shape index: {}]
  %s13 = inlined_call_operand.vmem [shape: f32[4,8], index: 13, kind: input, shape index: {}]
  %s14 = inlined_call_operand.vmem [shape: f32[4,1], index: 14, kind: input, shape index: {}]
  %s15 = inlined_call_operand.vmem [shape: f32[4,16], index: 15, kind: input, shape index: {}]
  %s16 = inlined_call_operand.vmem [shape: f32[4,1], index: 16, kind: input, shape index: {}]
  %s17 = inlined_call_operand.vmem [shape: f32[4,16], index: 17, kind: input, shape index: {}]
  %s18 = inlined_call_operand.vmem [shape: f32[4,1], index: 18, kind: input, shape index: {}]
  %s19 = inlined_call_operand.vmem [shape: f32[4,12], index: 19, kind: input, shape index: {}]
  %s20 = inlined_call_operand.vmem [shape: f32[4,1], index: 20, kind: input, shape index: {}]
  %s21 = inlined_call_operand.vmem [shape: f32[4,16], index: 21, kind: input, shape index: {}]
  %s22 = inlined_call_operand.vmem [shape: f32[4,1], index: 22, kind: input, shape index: {}]
  %s23 = inlined_call_operand.vmem [shape: f32[4,20], index: 23, kind: input, shape index: {}]
  %s24 = inlined_call_operand.vmem [shape: f32[4,1], index: 24, kind: input, shape index: {}]
  %s25 = inlined_call_operand.vmem [shape: f32[4,16], index: 25, kind: input, shape index: {}]
  %s26 = inlined_call_operand.vmem [shape: f32[4,1], index: 26, kind: input, shape index: {}]
  %s27 = inlined_call_operand.vmem [shape: f32[2,16,128], index: 27, kind: output, shape index: {}]
  %s28 = sld [smem:[#allocation0]]
  $region141: #{deepspectra_forward.2} parent=0
    _
  %s30 = ssub.s32 1, %s28
  %s31 = scalar_select 0, %s30, %s28
  loop: start=0, step=1, limit=4
  $region2: #{deepspectra_forward.2} parent=0 // loop_pre_header
    _
  $region3: #{deepspectra_forward.2} parent=0 // loop_header
    %s33 = sphi 0, %s37
    %p34 = scmp.ge.s32.totalorder %s33, 4
    %s43 = sphi 0, %s45
    %s46 = sphi 0, %s43
    %s47 = sphi 0, %s46
    %s63 = sphi 0, %s47
    %s67 = sphi 0, %s67
    %s69 = sphi 0, %s67
    %s70 = sphi 0, %s69
    %s84 = sphi 0, %s70
    %s88 = sphi 0, %s88
    %s90 = sphi 0, %s88
    %s91 = sphi 0, %s90
    %s105 = sphi 0, %s91
    %s109 = sphi 0, %s109
    %s111 = sphi 0, %s109
    %s112 = sphi 0, %s111
    %s126 = sphi 0, %s112
    %s130 = sphi 0, %s130
    %s132 = sphi 0, %s130
    %s133 = sphi 0, %s132
    %s147 = sphi 0, %s133
    %s151 = sphi 0, %s151
    %s153 = sphi 0, %s151
    %s154 = sphi 0, %s153
    %s168 = sphi 0, %s154
    %s172 = sphi 0, %s172
    %s174 = sphi 0, %s172
    %s175 = sphi 0, %s174
    %s189 = sphi 0, %s175
    %s193 = sphi 0, %s193
    %s195 = sphi 0, %s193
    %s196 = sphi 0, %s195
    %s210 = sphi 0, %s196
    %s214 = sphi 0, %s214
    %s216 = sphi 0, %s214
    %s217 = sphi 0, %s216
    %s231 = sphi 0, %s217
    %s235 = sphi 0, %s235
    %s237 = sphi 0, %s235
    %s238 = sphi 0, %s237
    %s252 = sphi 0, %s238
    %s256 = sphi 0, %s256
    %s258 = sphi 0, %s256
    %s259 = sphi 0, %s258
    %s273 = sphi 0, %s259
    %s277 = sphi 0, %s277
    %s279 = sphi 0, %s277
    %s280 = sphi 0, %s279
    %s294 = sphi 0, %s280
    %s298 = sphi 0, %s298
    %s300 = sphi 0, %s298
    %s301 = sphi 0, %s300
    %s315 = sphi 0, %s301
    %s319 = sphi 0, %s319
    %s321 = sphi 0, %s319
    %s322 = sphi 0, %s321
    %s336 = sphi 0, %s322
    %s340 = sphi 0, %s340
    %s342 = sphi 0, %s340
    %s343 = sphi 0, %s342
    %s357 = sphi 0, %s343
    %s361 = sphi 0, %s361
    %s363 = sphi 0, %s361
    %s364 = sphi 0, %s363
    %s378 = sphi 0, %s364
    %s382 = sphi 0, %s382
    %s384 = sphi 0, %s382
    %s385 = sphi 0, %s384
    %s399 = sphi 0, %s385
    %s403 = sphi 0, %s403
    %s405 = sphi 0, %s403
    %s406 = sphi 0, %s405
    %s420 = sphi 0, %s406
    %s424 = sphi 0, %s424
    %s426 = sphi 0, %s424
    %s427 = sphi 0, %s426
    %s441 = sphi 0, %s427
    %s445 = sphi 0, %s445
    %s447 = sphi 0, %s445
    %s448 = sphi 0, %s447
    %s462 = sphi 0, %s448
    %s466 = sphi 0, %s466
    %s468 = sphi 0, %s466
    %s469 = sphi 0, %s468
    %s483 = sphi 0, %s469
    %s487 = sphi 0, %s487
    %s489 = sphi 0, %s487
    %s490 = sphi 0, %s489
    %s504 = sphi 0, %s490
    %s508 = sphi 0, %s508
    %s510 = sphi 0, %s508
    %s511 = sphi 0, %s510
    %s525 = sphi 0, %s511
    %s529 = sphi 0, %s529
    %s531 = sphi 0, %s529
    %s532 = sphi 0, %s531
    %s546 = sphi 0, %s532
    %s550 = sphi 0, %s550
    %s552 = sphi 0, %s550
    %s553 = sphi 0, %s552
    %s567 = sphi 0, %s553
    %s571 = sphi 0, %s571
    %s573 = sphi 0, %s571
    %s574 = sphi 0, %s573
    %s588 = sphi 0, %s574
    %s592 = sphi 0, %s592
    %s594 = sphi 0, %s592
    %s595 = sphi 0, %s594
    %s609 = sphi 0, %s595
    %s615 = sphi 0, %s617
    %s618 = sphi 0, %s615
    %s619 = sphi 0, %s618
    %s635 = sphi 0, %s619
  $region4: #{deepspectra_forward.2} parent=0 // loop_header_branch
    %36 = sbr.rel (%p34) target = $region8
  $region5: #{deepspectra_forward.2} parent=0 // loop_body
    %s38 = ssub.s32 %s33, 1
    %s39 = ssub.s32 %s33, 2
    %s40 = sadd.s32 %s33, 1
    %s41 = ssub.s32 %s33, %s40
    %p42 = scmp.eq.s32.totalorder %s41, 0
    %s44 = sadd.s32 %s43, 1
    %s45 = scalar_select %p42, %s43, %s44
    %p48 = pneg %p42
    %p49 = scmp.eq.s32.totalorder %s33, 1
    %p50 = por %p48, %p49
    %p51 = scmp.ne.s32.totalorder %s43, %s46
    %p52 = scmp.eq.s32.totalorder %s33, 0
    %p53 = por %p51, %p52
    %p54 = scmp.ne.s32.totalorder %s43, %s46
    %p55 = scmp.eq.s32.totalorder %s38, 1
    %p56 = por %p54, %p55
    %p57 = scmp.ne.s32.totalorder %s46, %s47
    %p58 = scmp.eq.s32.totalorder %s38, 0
    %p59 = por %p57, %p58
    %p60 = scmp.ne.s32.totalorder %s46, %s47
    %p61 = scmp.eq.s32.totalorder %s39, 1
    %p62 = por %p60, %p61
    %p64 = scmp.ne.s32.totalorder %s47, %s63
    %p65 = scmp.eq.s32.totalorder %s39, 0
    %p66 = por %p64, %p65
    %s68 = sadd.s32 %s67, 1
    %p71 = scmp.eq.s32.totalorder %s33, 1
    %p72 = scmp.ne.s32.totalorder %s67, %s69
    %p73 = scmp.eq.s32.totalorder %s33, 0
    %p74 = por %p72, %p73
    %p75 = scmp.ne.s32.totalorder %s67, %s69
    %p76 = scmp.eq.s32.totalorder %s38, 1
    %p77 = por %p75, %p76
    %p78 = scmp.ne.s32.totalorder %s69, %s70
    %p79 = scmp.eq.s32.totalorder %s38, 0
    %p80 = por %p78, %p79
    %p81 = scmp.ne.s32.totalorder %s69, %s70
    %p82 = scmp.eq.s32.totalorder %s39, 1
    %p83 = por %p81, %p82
    %p85 = scmp.ne.s32.totalorder %s70, %s84
    %p86 = scmp.eq.s32.totalorder %s39, 0
    %p87 = por %p85, %p86
    %s89 = sadd.s32 %s88, 1
    %p92 = scmp.eq.s32.totalorder %s33, 1
    %p93 = scmp.ne.s32.totalorder %s88, %s90
    %p94 = scmp.eq.s32.totalorder %s33, 0
    %p95 = por %p93, %p94
    %p96 = scmp.ne.s32.totalorder %s88, %s90
    %p97 = scmp.eq.s32.totalorder %s38, 1
    %p98 = por %p96, %p97
    %p99 = scmp.ne.s32.totalorder %s90, %s91
    %p100 = scmp.eq.s32.totalorder %s38, 0
    %p101 = por %p99, %p100
    %p102 = scmp.ne.s32.totalorder %s90, %s91
    %p103 = scmp.eq.s32.totalorder %s39, 1
    %p104 = por %p102, %p103
    %p106 = scmp.ne.s32.totalorder %s91, %s105
    %p107 = scmp.eq.s32.totalorder %s39, 0
    %p108 = por %p106, %p107
    %s110 = sadd.s32 %s109, 1
    %p113 = scmp.eq.s32.totalorder %s33, 1
    %p114 = scmp.ne.s32.totalorder %s109, %s111
    %p115 = scmp.eq.s32.totalorder %s33, 0
    %p116 = por %p114, %p115
    %p117 = scmp.ne.s32.totalorder %s109, %s111
    %p118 = scmp.eq.s32.totalorder %s38, 1
    %p119 = por %p117, %p118
    %p120 = scmp.ne.s32.totalorder %s111, %s112
    %p121 = scmp.eq.s32.totalorder %s38, 0
    %p122 = por %p120, %p121
    %p123 = scmp.ne.s32.totalorder %s111, %s112
    %p124 = scmp.eq.s32.totalorder %s39, 1
    %p125 = por %p123, %p124
    %p127 = scmp.ne.s32.totalorder %s112, %s126
    %p128 = scmp.eq.s32.totalorder %s39, 0
    %p129 = por %p127, %p128
    %s131 = sadd.s32 %s130, 1
    %p134 = scmp.eq.s32.totalorder %s33, 1
    %p135 = scmp.ne.s32.totalorder %s130, %s132
    %p136 = scmp.eq.s32.totalorder %s33, 0
    %p137 = por %p135, %p136
    %p138 = scmp.ne.s32.totalorder %s130, %s132
    %p139 = scmp.eq.s32.totalorder %s38, 1
    %p140 = por %p138, %p139
    %p141 = scmp.ne.s32.totalorder %s132, %s133
    %p142 = scmp.eq.s32.totalorder %s38, 0
    %p143 = por %p141, %p142
    %p144 = scmp.ne.s32.totalorder %s132, %s133
    %p145 = scmp.eq.s32.totalorder %s39, 1
    %p146 = por %p144, %p145
    %p148 = scmp.ne.s32.totalorder %s133, %s147
    %p149 = scmp.eq.s32.totalorder %s39, 0
    %p150 = por %p148, %p149
    %s152 = sadd.s32 %s151, 1
    %p155 = scmp.eq.s32.totalorder %s33, 1
    %p156 = scmp.ne.s32.totalorder %s151, %s153
    %p157 = scmp.eq.s32.totalorder %s33, 0
    %p158 = por %p156, %p157
    %p159 = scmp.ne.s32.totalorder %s151, %s153
    %p160 = scmp.eq.s32.totalorder %s38, 1
    %p161 = por %p159, %p160
    %p162 = scmp.ne.s32.totalorder %s153, %s154
    %p163 = scmp.eq.s32.totalorder %s38, 0
    %p164 = por %p162, %p163
    %p165 = scmp.ne.s32.totalorder %s153, %s154
    %p166 = scmp.eq.s32.totalorder %s39, 1
    %p167 = por %p165, %p166
    %p169 = scmp.ne.s32.totalorder %s154, %s168
    %p170 = scmp.eq.s32.totalorder %s39, 0
    %p171 = por %p169, %p170
    %s173 = sadd.s32 %s172, 1
    %p176 = scmp.eq.s32.totalorder %s33, 1
    %p177 = scmp.ne.s32.totalorder %s172, %s174
    %p178 = scmp.eq.s32.totalorder %s33, 0
    %p179 = por %p177, %p178
    %p180 = scmp.ne.s32.totalorder %s172, %s174
    %p181 = scmp.eq.s32.totalorder %s38, 1
    %p182 = por %p180, %p181
    %p183 = scmp.ne.s32.totalorder %s174, %s175
    %p184 = scmp.eq.s32.totalorder %s38, 0
    %p185 = por %p183, %p184
    %p186 = scmp.ne.s32.totalorder %s174, %s175
    %p187 = scmp.eq.s32.totalorder %s39, 1
    %p188 = por %p186, %p187
    %p190 = scmp.ne.s32.totalorder %s175, %s189
    %p191 = scmp.eq.s32.totalorder %s39, 0
    %p192 = por %p190, %p191
    %s194 = sadd.s32 %s193, 1
    %p197 = scmp.eq.s32.totalorder %s33, 1
    %p198 = scmp.ne.s32.totalorder %s193, %s195
    %p199 = scmp.eq.s32.totalorder %s33, 0
    %p200 = por %p198, %p199
    %p201 = scmp.ne.s32.totalorder %s193, %s195
    %p202 = scmp.eq.s32.totalorder %s38, 1
    %p203 = por %p201, %p202
    %p204 = scmp.ne.s32.totalorder %s195, %s196
    %p205 = scmp.eq.s32.totalorder %s38, 0
    %p206 = por %p204, %p205
    %p207 = scmp.ne.s32.totalorder %s195, %s196
    %p208 = scmp.eq.s32.totalorder %s39, 1
    %p209 = por %p207, %p208
    %p211 = scmp.ne.s32.totalorder %s196, %s210
    %p212 = scmp.eq.s32.totalorder %s39, 0
    %p213 = por %p211, %p212
    %s215 = sadd.s32 %s214, 1
    %p218 = scmp.eq.s32.totalorder %s33, 1
    %p219 = scmp.ne.s32.totalorder %s214, %s216
    %p220 = scmp.eq.s32.totalorder %s33, 0
    %p221 = por %p219, %p220
    %p222 = scmp.ne.s32.totalorder %s214, %s216
    %p223 = scmp.eq.s32.totalorder %s38, 1
    %p224 = por %p222, %p223
    %p225 = scmp.ne.s32.totalorder %s216, %s217
    %p226 = scmp.eq.s32.totalorder %s38, 0
    %p227 = por %p225, %p226
    %p228 = scmp.ne.s32.totalorder %s216, %s217
    %p229 = scmp.eq.s32.totalorder %s39, 1
    %p230 = por %p228, %p229
    %p232 = scmp.ne.s32.totalorder %s217, %s231
    %p233 = scmp.eq.s32.totalorder %s39, 0
    %p234 = por %p232, %p233
    %s236 = sadd.s32 %s235, 1
    %p239 = scmp.eq.s32.totalorder %s33, 1
    %p240 = scmp.ne.s32.totalorder %s235, %s237
    %p241 = scmp.eq.s32.totalorder %s33, 0
    %p242 = por %p240, %p241
    %p243 = scmp.ne.s32.totalorder %s235, %s237
    %p244 = scmp.eq.s32.totalorder %s38, 1
    %p245 = por %p243, %p244
    %p246 = scmp.ne.s32.totalorder %s237, %s238
    %p247 = scmp.eq.s32.totalorder %s38, 0
    %p248 = por %p246, %p247
    %p249 = scmp.ne.s32.totalorder %s237, %s238
    %p250 = scmp.eq.s32.totalorder %s39, 1
    %p251 = por %p249, %p250
    %p253 = scmp.ne.s32.totalorder %s238, %s252
    %p254 = scmp.eq.s32.totalorder %s39, 0
    %p255 = por %p253, %p254
    %s257 = sadd.s32 %s256, 1
    %p260 = scmp.eq.s32.totalorder %s33, 1
    %p261 = scmp.ne.s32.totalorder %s256, %s258
    %p262 = scmp.eq.s32.totalorder %s33, 0
    %p263 = por %p261, %p262
    %p264 = scmp.ne.s32.totalorder %s256, %s258
    %p265 = scmp.eq.s32.totalorder %s38, 1
    %p266 = por %p264, %p265
    %p267 = scmp.ne.s32.totalorder %s258, %s259
    %p268 = scmp.eq.s32.totalorder %s38, 0
    %p269 = por %p267, %p268
    %p270 = scmp.ne.s32.totalorder %s258, %s259
    %p271 = scmp.eq.s32.totalorder %s39, 1
    %p272 = por %p270, %p271
    %p274 = scmp.ne.s32.totalorder %s259, %s273
    %p275 = scmp.eq.s32.totalorder %s39, 0
    %p276 = por %p274, %p275
    %s278 = sadd.s32 %s277, 1
    %p281 = scmp.eq.s32.totalorder %s33, 1
    %p282 = scmp.ne.s32.totalorder %s277, %s279
    %p283 = scmp.eq.s32.totalorder %s33, 0
    %p284 = por %p282, %p283
    %p285 = scmp.ne.s32.totalorder %s277, %s279
    %p286 = scmp.eq.s32.totalorder %s38, 1
    %p287 = por %p285, %p286
    %p288 = scmp.ne.s32.totalorder %s279, %s280
    %p289 = scmp.eq.s32.totalorder %s38, 0
    %p290 = por %p288, %p289
    %p291 = scmp.ne.s32.totalorder %s279, %s280
    %p292 = scmp.eq.s32.totalorder %s39, 1
    %p293 = por %p291, %p292
    %p295 = scmp.ne.s32.totalorder %s280, %s294
    %p296 = scmp.eq.s32.totalorder %s39, 0
    %p297 = por %p295, %p296
    %s299 = sadd.s32 %s298, 1
    %p302 = scmp.eq.s32.totalorder %s33, 1
    %p303 = scmp.ne.s32.totalorder %s298, %s300
    %p304 = scmp.eq.s32.totalorder %s33, 0
    %p305 = por %p303, %p304
    %p306 = scmp.ne.s32.totalorder %s298, %s300
    %p307 = scmp.eq.s32.totalorder %s38, 1
    %p308 = por %p306, %p307
    %p309 = scmp.ne.s32.totalorder %s300, %s301
    %p310 = scmp.eq.s32.totalorder %s38, 0
    %p311 = por %p309, %p310
    %p312 = scmp.ne.s32.totalorder %s300, %s301
    %p313 = scmp.eq.s32.totalorder %s39, 1
    %p314 = por %p312, %p313
    %p316 = scmp.ne.s32.totalorder %s301, %s315
    %p317 = scmp.eq.s32.totalorder %s39, 0
    %p318 = por %p316, %p317
    %s320 = sadd.s32 %s319, 1
    %p323 = scmp.eq.s32.totalorder %s33, 1
    %p324 = scmp.ne.s32.totalorder %s319, %s321
    %p325 = scmp.eq.s32.totalorder %s33, 0
    %p326 = por %p324, %p325
    %p327 = scmp.ne.s32.totalorder %s319, %s321
    %p328 = scmp.eq.s32.totalorder %s38, 1
    %p329 = por %p327, %p328
    %p330 = scmp.ne.s32.totalorder %s321, %s322
    %p331 = scmp.eq.s32.totalorder %s38, 0
    %p332 = por %p330, %p331
    %p333 = scmp.ne.s32.totalorder %s321, %s322
    %p334 = scmp.eq.s32.totalorder %s39, 1
    %p335 = por %p333, %p334
    %p337 = scmp.ne.s32.totalorder %s322, %s336
    %p338 = scmp.eq.s32.totalorder %s39, 0
    %p339 = por %p337, %p338
    %s341 = sadd.s32 %s340, 1
    %p344 = scmp.eq.s32.totalorder %s33, 1
    %p345 = scmp.ne.s32.totalorder %s340, %s342
    %p346 = scmp.eq.s32.totalorder %s33, 0
    %p347 = por %p345, %p346
    %p348 = scmp.ne.s32.totalorder %s340, %s342
    %p349 = scmp.eq.s32.totalorder %s38, 1
    %p350 = por %p348, %p349
    %p351 = scmp.ne.s32.totalorder %s342, %s343
    %p352 = scmp.eq.s32.totalorder %s38, 0
    %p353 = por %p351, %p352
    %p354 = scmp.ne.s32.totalorder %s342, %s343
    %p355 = scmp.eq.s32.totalorder %s39, 1
    %p356 = por %p354, %p355
    %p358 = scmp.ne.s32.totalorder %s343, %s357
    %p359 = scmp.eq.s32.totalorder %s39, 0
    %p360 = por %p358, %p359
    %s362 = sadd.s32 %s361, 1
    %p365 = scmp.eq.s32.totalorder %s33, 1
    %p366 = scmp.ne.s32.totalorder %s361, %s363
    %p367 = scmp.eq.s32.totalorder %s33, 0
    %p368 = por %p366, %p367
    %p369 = scmp.ne.s32.totalorder %s361, %s363
    %p370 = scmp.eq.s32.totalorder %s38, 1
    %p371 = por %p369, %p370
    %p372 = scmp.ne.s32.totalorder %s363, %s364
    %p373 = scmp.eq.s32.totalorder %s38, 0
    %p374 = por %p372, %p373
    %p375 = scmp.ne.s32.totalorder %s363, %s364
    %p376 = scmp.eq.s32.totalorder %s39, 1
    %p377 = por %p375, %p376
    %p379 = scmp.ne.s32.totalorder %s364, %s378
    %p380 = scmp.eq.s32.totalorder %s39, 0
    %p381 = por %p379, %p380
    %s383 = sadd.s32 %s382, 1
    %p386 = scmp.eq.s32.totalorder %s33, 1
    %p387 = scmp.ne.s32.totalorder %s382, %s384
    %p388 = scmp.eq.s32.totalorder %s33, 0
    %p389 = por %p387, %p388
    %p390 = scmp.ne.s32.totalorder %s382, %s384
    %p391 = scmp.eq.s32.totalorder %s38, 1
    %p392 = por %p390, %p391
    %p393 = scmp.ne.s32.totalorder %s384, %s385
    %p394 = scmp.eq.s32.totalorder %s38, 0
    %p395 = por %p393, %p394
    %p396 = scmp.ne.s32.totalorder %s384, %s385
    %p397 = scmp.eq.s32.totalorder %s39, 1
    %p398 = por %p396, %p397
    %p400 = scmp.ne.s32.totalorder %s385, %s399
    %p401 = scmp.eq.s32.totalorder %s39, 0
    %p402 = por %p400, %p401
    %s404 = sadd.s32 %s403, 1
    %p407 = scmp.eq.s32.totalorder %s33, 1
    %p408 = scmp.ne.s32.totalorder %s403, %s405
    %p409 = scmp.eq.s32.totalorder %s33, 0
    %p410 = por %p408, %p409
    %p411 = scmp.ne.s32.totalorder %s403, %s405
    %p412 = scmp.eq.s32.totalorder %s38, 1
    %p413 = por %p411, %p412
    %p414 = scmp.ne.s32.totalorder %s405, %s406
    %p415 = scmp.eq.s32.totalorder %s38, 0
    %p416 = por %p414, %p415
    %p417 = scmp.ne.s32.totalorder %s405, %s406
    %p418 = scmp.eq.s32.totalorder %s39, 1
    %p419 = por %p417, %p418
    %p421 = scmp.ne.s32.totalorder %s406, %s420
    %p422 = scmp.eq.s32.totalorder %s39, 0
    %p423 = por %p421, %p422
    %s425 = sadd.s32 %s424, 1
    %p428 = scmp.eq.s32.totalorder %s33, 1
    %p429 = scmp.ne.s32.totalorder %s424, %s426
    %p430 = scmp.eq.s32.totalorder %s33, 0
    %p431 = por %p429, %p430
    %p432 = scmp.ne.s32.totalorder %s424, %s426
    %p433 = scmp.eq.s32.totalorder %s38, 1
    %p434 = por %p432, %p433
    %p435 = scmp.ne.s32.totalorder %s426, %s427
    %p436 = scmp.eq.s32.totalorder %s38, 0
    %p437 = por %p435, %p436
    %p438 = scmp.ne.s32.totalorder %s426, %s427
    %p439 = scmp.eq.s32.totalorder %s39, 1
    %p440 = por %p438, %p439
    %p442 = scmp.ne.s32.totalorder %s427, %s441
    %p443 = scmp.eq.s32.totalorder %s39, 0
    %p444 = por %p442, %p443
    %s446 = sadd.s32 %s445, 1
    %p449 = scmp.eq.s32.totalorder %s33, 1
    %p450 = scmp.ne.s32.totalorder %s445, %s447
    %p451 = scmp.eq.s32.totalorder %s33, 0
    %p452 = por %p450, %p451
    %p453 = scmp.ne.s32.totalorder %s445, %s447
    %p454 = scmp.eq.s32.totalorder %s38, 1
    %p455 = por %p453, %p454
    %p456 = scmp.ne.s32.totalorder %s447, %s448
    %p457 = scmp.eq.s32.totalorder %s38, 0
    %p458 = por %p456, %p457
    %p459 = scmp.ne.s32.totalorder %s447, %s448
    %p460 = scmp.eq.s32.totalorder %s39, 1
    %p461 = por %p459, %p460
    %p463 = scmp.ne.s32.totalorder %s448, %s462
    %p464 = scmp.eq.s32.totalorder %s39, 0
    %p465 = por %p463, %p464
    %s467 = sadd.s32 %s466, 1
    %p470 = scmp.eq.s32.totalorder %s33, 1
    %p471 = scmp.ne.s32.totalorder %s466, %s468
    %p472 = scmp.eq.s32.totalorder %s33, 0
    %p473 = por %p471, %p472
    %p474 = scmp.ne.s32.totalorder %s466, %s468
    %p475 = scmp.eq.s32.totalorder %s38, 1
    %p476 = por %p474, %p475
    %p477 = scmp.ne.s32.totalorder %s468, %s469
    %p478 = scmp.eq.s32.totalorder %s38, 0
    %p479 = por %p477, %p478
    %p480 = scmp.ne.s32.totalorder %s468, %s469
    %p481 = scmp.eq.s32.totalorder %s39, 1
    %p482 = por %p480, %p481
    %p484 = scmp.ne.s32.totalorder %s469, %s483
    %p485 = scmp.eq.s32.totalorder %s39, 0
    %p486 = por %p484, %p485
    %s488 = sadd.s32 %s487, 1
    %p491 = scmp.eq.s32.totalorder %s33, 1
    %p492 = scmp.ne.s32.totalorder %s487, %s489
    %p493 = scmp.eq.s32.totalorder %s33, 0
    %p494 = por %p492, %p493
    %p495 = scmp.ne.s32.totalorder %s487, %s489
    %p496 = scmp.eq.s32.totalorder %s38, 1
    %p497 = por %p495, %p496
    %p498 = scmp.ne.s32.totalorder %s489, %s490
    %p499 = scmp.eq.s32.totalorder %s38, 0
    %p500 = por %p498, %p499
    %p501 = scmp.ne.s32.totalorder %s489, %s490
    %p502 = scmp.eq.s32.totalorder %s39, 1
    %p503 = por %p501, %p502
    %p505 = scmp.ne.s32.totalorder %s490, %s504
    %p506 = scmp.eq.s32.totalorder %s39, 0
    %p507 = por %p505, %p506
    %s509 = sadd.s32 %s508, 1
    %p512 = scmp.eq.s32.totalorder %s33, 1
    %p513 = scmp.ne.s32.totalorder %s508, %s510
    %p514 = scmp.eq.s32.totalorder %s33, 0
    %p515 = por %p513, %p514
    %p516 = scmp.ne.s32.totalorder %s508, %s510
    %p517 = scmp.eq.s32.totalorder %s38, 1
    %p518 = por %p516, %p517
    %p519 = scmp.ne.s32.totalorder %s510, %s511
    %p520 = scmp.eq.s32.totalorder %s38, 0
    %p521 = por %p519, %p520
    %p522 = scmp.ne.s32.totalorder %s510, %s511
    %p523 = scmp.eq.s32.totalorder %s39, 1
    %p524 = por %p522, %p523
    %p526 = scmp.ne.s32.totalorder %s511, %s525
    %p527 = scmp.eq.s32.totalorder %s39, 0
    %p528 = por %p526, %p527
    %s530 = sadd.s32 %s529, 1
    %p533 = scmp.eq.s32.totalorder %s33, 1
    %p534 = scmp.ne.s32.totalorder %s529, %s531
    %p535 = scmp.eq.s32.totalorder %s33, 0
    %p536 = por %p534, %p535
    %p537 = scmp.ne.s32.totalorder %s529, %s531
    %p538 = scmp.eq.s32.totalorder %s38, 1
    %p539 = por %p537, %p538
    %p540 = scmp.ne.s32.totalorder %s531, %s532
    %p541 = scmp.eq.s32.totalorder %s38, 0
    %p542 = por %p540, %p541
    %p543 = scmp.ne.s32.totalorder %s531, %s532
    %p544 = scmp.eq.s32.totalorder %s39, 1
    %p545 = por %p543, %p544
    %p547 = scmp.ne.s32.totalorder %s532, %s546
    %p548 = scmp.eq.s32.totalorder %s39, 0
    %p549 = por %p547, %p548
    %s551 = sadd.s32 %s550, 1
    %p554 = scmp.eq.s32.totalorder %s33, 1
    %p555 = scmp.ne.s32.totalorder %s550, %s552
    %p556 = scmp.eq.s32.totalorder %s33, 0
    %p557 = por %p555, %p556
    %p558 = scmp.ne.s32.totalorder %s550, %s552
    %p559 = scmp.eq.s32.totalorder %s38, 1
    %p560 = por %p558, %p559
    %p561 = scmp.ne.s32.totalorder %s552, %s553
    %p562 = scmp.eq.s32.totalorder %s38, 0
    %p563 = por %p561, %p562
    %p564 = scmp.ne.s32.totalorder %s552, %s553
    %p565 = scmp.eq.s32.totalorder %s39, 1
    %p566 = por %p564, %p565
    %p568 = scmp.ne.s32.totalorder %s553, %s567
    %p569 = scmp.eq.s32.totalorder %s39, 0
    %p570 = por %p568, %p569
    %s572 = sadd.s32 %s571, 1
    %p575 = scmp.eq.s32.totalorder %s33, 1
    %p576 = scmp.ne.s32.totalorder %s571, %s573
    %p577 = scmp.eq.s32.totalorder %s33, 0
    %p578 = por %p576, %p577
    %p579 = scmp.ne.s32.totalorder %s571, %s573
    %p580 = scmp.eq.s32.totalorder %s38, 1
    %p581 = por %p579, %p580
    %p582 = scmp.ne.s32.totalorder %s573, %s574
    %p583 = scmp.eq.s32.totalorder %s38, 0
    %p584 = por %p582, %p583
    %p585 = scmp.ne.s32.totalorder %s573, %s574
    %p586 = scmp.eq.s32.totalorder %s39, 1
    %p587 = por %p585, %p586
    %p589 = scmp.ne.s32.totalorder %s574, %s588
    %p590 = scmp.eq.s32.totalorder %s39, 0
    %p591 = por %p589, %p590
    %s593 = sadd.s32 %s592, 1
    %p596 = scmp.eq.s32.totalorder %s33, 1
    %p597 = scmp.ne.s32.totalorder %s592, %s594
    %p598 = scmp.eq.s32.totalorder %s33, 0
    %p599 = por %p597, %p598
    %p600 = scmp.ne.s32.totalorder %s592, %s594
    %p601 = scmp.eq.s32.totalorder %s38, 1
    %p602 = por %p600, %p601
    %p603 = scmp.ne.s32.totalorder %s594, %s595
    %p604 = scmp.eq.s32.totalorder %s38, 0
    %p605 = por %p603, %p604
    %p606 = scmp.ne.s32.totalorder %s594, %s595
    %p607 = scmp.eq.s32.totalorder %s39, 1
    %p608 = por %p606, %p607
    %p610 = scmp.ne.s32.totalorder %s595, %s609
    %p611 = scmp.eq.s32.totalorder %s39, 0
    %p612 = por %p610, %p611
    %s613 = ssub.s32 %s33, %s40
    %p614 = scmp.eq.s32.totalorder %s613, 0
    %s616 = sadd.s32 %s615, 1
    %s617 = scalar_select %p614, %s615, %s616
    %p620 = pneg %p614
    %p621 = scmp.eq.s32.totalorder %s33, 1
    %p622 = por %p620, %p621
    %p623 = scmp.ne.s32.totalorder %s615, %s618
    %p624 = scmp.eq.s32.totalorder %s33, 0
    %p625 = por %p623, %p624
    %p626 = scmp.ne.s32.totalorder %s615, %s618
    %p627 = scmp.eq.s32.totalorder %s38, 1
    %p628 = por %p626, %p627
    %p629 = scmp.ne.s32.totalorder %s618, %s619
    %p630 = scmp.eq.s32.totalorder %s38, 0
    %p631 = por %p629, %p630
    %p632 = scmp.ne.s32.totalorder %s618, %s619
    %p633 = scmp.eq.s32.totalorder %s39, 1
    %p634 = por %p632, %p633
    %p636 = scmp.ne.s32.totalorder %s619, %s635
    %p637 = scmp.eq.s32.totalorder %s39, 0
    %p638 = por %p636, %p637
    %p639 = scmp.le.s32.totalorder 1, %s33
    %p640 = scmp.lt.s32.totalorder %s33, 3
    %p641 = pnand %p639, %p640
    %p642 = pneg %p641
    // Predicated region
    $region9: #{deepspectra_forward.2} parent=5 // pred_check
      _
    $region10: #{deepspectra_forward.2} parent=5 // pred_check_branch
      %644 = sbr.rel (%p641) target = $region12
    $region11: #{deepspectra_forward.2} parent=5 // pred_region
      %s645 = ssub.s32 %s33, 1
      // Predicated region
      $region13: #{deepspectra_forward.2} parent=11 // pred_check
        %p646 = pneg %p80
      $region14: #{deepspectra_forward.2} parent=11 // pred_check_branch
        %648 = sbr.rel (%p646) target = $region16
      $region15: #{deepspectra_forward.2} parent=11 // pred_region
        _
      $region16: #{deepspectra_forward.2} parent=11 // pred_fallthru
        _
      // Predicated region
      $region17: #{deepspectra_forward.2} parent=11 // pred_check
        %p649 = pneg %p101
      $region18: #{deepspectra_forward.2} parent=11 // pred_check_branch
        %651 = sbr.rel (%p649) target = $region20
      $region19: #{deepspectra_forward.2} parent=11 // pred_region
        _
      $region20: #{deepspectra_forward.2} parent=11 // pred_fallthru
        _
      // Predicated region
      $region21: #{deepspectra_forward.2} parent=11 // pred_check
        %p652 = pneg %p122
      $region22: #{deepspectra_forward.2} parent=11 // pred_check_branch
        %654 = sbr.rel (%p652) target = $region24
      $region23: #{deepspectra_forward.2} parent=11 // pred_region
        _
      $region24: #{deepspectra_forward.2} parent=11 // pred_fallthru
        _
      // Predicated region
      $region25: #{deepspectra_forward.2} parent=11 // pred_check
        %p655 = pneg %p143
      $region26: #{deepspectra_forward.2} parent=11 // pred_check_branch
        %657 = sbr.rel (%p655) target = $region28
      $region27: #{deepspectra_forward.2} parent=11 // pred_region
        _
      $region28: #{deepspectra_forward.2} parent=11 // pred_fallthru
        _
      // Predicated region
      $region29: #{deepspectra_forward.2} parent=11 // pred_check
        %p658 = pneg %p164
      $region30: #{deepspectra_forward.2} parent=11 // pred_check_branch
        %660 = sbr.rel (%p658) target = $region32
      $region31: #{deepspectra_forward.2} parent=11 // pred_region
        _
      $region32: #{deepspectra_forward.2} parent=11 // pred_fallthru
        _
      // Predicated region
      $region33: #{deepspectra_forward.2} parent=11 // pred_check
        %p661 = pneg %p185
      $region34: #{deepspectra_forward.2} parent=11 // pred_check_branch
        %663 = sbr.rel (%p661) target = $region36
      $region35: #{deepspectra_forward.2} parent=11 // pred_region
        _
      $region36: #{deepspectra_forward.2} parent=11 // pred_fallthru
        _
      // Predicated region
      $region37: #{deepspectra_forward.2} parent=11 // pred_check
        %p664 = pneg %p206
      $region38: #{deepspectra_forward.2} parent=11 // pred_check_branch
        %666 = sbr.rel (%p664) target = $region40
      $region39: #{deepspectra_forward.2} parent=11 // pred_region
        _
      $region40: #{deepspectra_forward.2} parent=11 // pred_fallthru
        _
      // Predicated region
      $region41: #{deepspectra_forward.2} parent=11 // pred_check
        %p667 = pneg %p227
      $region42: #{deepspectra_forward.2} parent=11 // pred_check_branch
        %669 = sbr.rel (%p667) target = $region44
      $region43: #{deepspectra_forward.2} parent=11 // pred_region
        _
      $region44: #{deepspectra_forward.2} parent=11 // pred_fallthru
        _
      // Predicated region
      $region45: #{deepspectra_forward.2} parent=11 // pred_check
        %p670 = pneg %p248
      $region46: #{deepspectra_forward.2} parent=11 // pred_check_branch
        %672 = sbr.rel (%p670) target = $region48
      $region47: #{deepspectra_forward.2} parent=11 // pred_region
        _
      $region48: #{deepspectra_forward.2} parent=11 // pred_fallthru
        _
      // Predicated region
      $region49: #{deepspectra_forward.2} parent=11 // pred_check
        %p673 = pneg %p269
      $region50: #{deepspectra_forward.2} parent=11 // pred_check_branch
        %675 = sbr.rel (%p673) target = $region52
      $region51: #{deepspectra_forward.2} parent=11 // pred_region
        _
      $region52: #{deepspectra_forward.2} parent=11 // pred_fallthru
        _
      // Predicated region
      $region53: #{deepspectra_forward.2} parent=11 // pred_check
        %p676 = pneg %p290
      $region54: #{deepspectra_forward.2} parent=11 // pred_check_branch
        %678 = sbr.rel (%p676) target = $region56
      $region55: #{deepspectra_forward.2} parent=11 // pred_region
        _
      $region56: #{deepspectra_forward.2} parent=11 // pred_fallthru
        _
      // Predicated region
      $region57: #{deepspectra_forward.2} parent=11 // pred_check
        %p679 = pneg %p311
      $region58: #{deepspectra_forward.2} parent=11 // pred_check_branch
        %681 = sbr.rel (%p679) target = $region60
      $region59: #{deepspectra_forward.2} parent=11 // pred_region
        _
      $region60: #{deepspectra_forward.2} parent=11 // pred_fallthru
        _
      // Predicated region
      $region61: #{deepspectra_forward.2} parent=11 // pred_check
        %p682 = pneg %p332
      $region62: #{deepspectra_forward.2} parent=11 // pred_check_branch
        %684 = sbr.rel (%p682) target = $region64
      $region63: #{deepspectra_forward.2} parent=11 // pred_region
        _
      $region64: #{deepspectra_forward.2} parent=11 // pred_fallthru
        _
      // Predicated region
      $region65: #{deepspectra_forward.2} parent=11 // pred_check
        %p685 = pneg %p353
      $region66: #{deepspectra_forward.2} parent=11 // pred_check_branch
        %687 = sbr.rel (%p685) target = $region68
      $region67: #{deepspectra_forward.2} parent=11 // pred_region
        _
      $region68: #{deepspectra_forward.2} parent=11 // pred_fallthru
        _
      // Predicated region
      $region69: #{deepspectra_forward.2} parent=11 // pred_check
        %p688 = pneg %p374
      $region70: #{deepspectra_forward.2} parent=11 // pred_check_branch
        %690 = sbr.rel (%p688) target = $region72
      $region71: #{deepspectra_forward.2} parent=11 // pred_region
        _
      $region72: #{deepspectra_forward.2} parent=11 // pred_fallthru
        _
      // Predicated region
      $region73: #{deepspectra_forward.2} parent=11 // pred_check
        %p691 = pneg %p395
      $region74: #{deepspectra_forward.2} parent=11 // pred_check_branch
        %693 = sbr.rel (%p691) target = $region76
      $region75: #{deepspectra_forward.2} parent=11 // pred_region
        _
      $region76: #{deepspectra_forward.2} parent=11 // pred_fallthru
        _
      // Predicated region
      $region77: #{deepspectra_forward.2} parent=11 // pred_check
        %p694 = pneg %p416
      $region78: #{deepspectra_forward.2} parent=11 // pred_check_branch
        %696 = sbr.rel (%p694) target = $region80
      $region79: #{deepspectra_forward.2} parent=11 // pred_region
        _
      $region80: #{deepspectra_forward.2} parent=11 // pred_fallthru
        _
      // Predicated region
      $region81: #{deepspectra_forward.2} parent=11 // pred_check
        %p697 = pneg %p437
      $region82: #{deepspectra_forward.2} parent=11 // pred_check_branch
        %699 = sbr.rel (%p697) target = $region84
      $region83: #{deepspectra_forward.2} parent=11 // pred_region
        _
      $region84: #{deepspectra_forward.2} parent=11 // pred_fallthru
        _
      // Predicated region
      $region85: #{deepspectra_forward.2} parent=11 // pred_check
        %p700 = pneg %p458
      $region86: #{deepspectra_forward.2} parent=11 // pred_check_branch
        %702 = sbr.rel (%p700) target = $region88
      $region87: #{deepspectra_forward.2} parent=11 // pred_region
        _
      $region88: #{deepspectra_forward.2} parent=11 // pred_fallthru
        _
      // Predicated region
      $region89: #{deepspectra_forward.2} parent=11 // pred_check
        %p703 = pneg %p479
      $region90: #{deepspectra_forward.2} parent=11 // pred_check_branch
        %705 = sbr.rel (%p703) target = $region92
      $region91: #{deepspectra_forward.2} parent=11 // pred_region
        _
      $region92: #{deepspectra_forward.2} parent=11 // pred_fallthru
        _
      // Predicated region
      $region93: #{deepspectra_forward.2} parent=11 // pred_check
        %p706 = pneg %p500
      $region94: #{deepspectra_forward.2} parent=11 // pred_check_branch
        %708 = sbr.rel (%p706) target = $region96
      $region95: #{deepspectra_forward.2} parent=11 // pred_region
        _
      $region96: #{deepspectra_forward.2} parent=11 // pred_fallthru
        _
      // Predicated region
      $region97: #{deepspectra_forward.2} parent=11 // pred_check
        %p709 = pneg %p521
      $region98: #{deepspectra_forward.2} parent=11 // pred_check_branch
        %711 = sbr.rel (%p709) target = $region100
      $region99: #{deepspectra_forward.2} parent=11 // pred_region
        _
      $region100: #{deepspectra_forward.2} parent=11 // pred_fallthru
        _
      // Predicated region
      $region101: #{deepspectra_forward.2} parent=11 // pred_check
        %p712 = pneg %p542
      $region102: #{deepspectra_forward.2} parent=11 // pred_check_branch
        %714 = sbr.rel (%p712) target = $region104
      $region103: #{deepspectra_forward.2} parent=11 // pred_region
        _
      $region104: #{deepspectra_forward.2} parent=11 // pred_fallthru
        _
      // Predicated region
      $region105: #{deepspectra_forward.2} parent=11 // pred_check
        %p715 = pneg %p563
      $region106: #{deepspectra_forward.2} parent=11 // pred_check_branch
        %717 = sbr.rel (%p715) target = $region108
      $region107: #{deepspectra_forward.2} parent=11 // pred_region
        _
      $region108: #{deepspectra_forward.2} parent=11 // pred_fallthru
        _
      // Predicated region
      $region109: #{deepspectra_forward.2} parent=11 // pred_check
        %p718 = pneg %p584
      $region110: #{deepspectra_forward.2} parent=11 // pred_check_branch
        %720 = sbr.rel (%p718) target = $region112
      $region111: #{deepspectra_forward.2} parent=11 // pred_region
        _
      $region112: #{deepspectra_forward.2} parent=11 // pred_fallthru
        _
      // Predicated region
      $region113: #{deepspectra_forward.2} parent=11 // pred_check
        %p721 = pneg %p605
      $region114: #{deepspectra_forward.2} parent=11 // pred_check_branch
        %723 = sbr.rel (%p721) target = $region116
      $region115: #{deepspectra_forward.2} parent=11 // pred_region
        _
      $region116: #{deepspectra_forward.2} parent=11 // pred_fallthru
        _
    $region12: #{deepspectra_forward.2} parent=5 // pred_fallthru
      _
    %p724 = scmp.lt.s32.totalorder %s33, 2
    // Predicated region
    $region117: #{deepspectra_forward.2} parent=5 // pred_check
      %p725 = pneg %p724
    $region118: #{deepspectra_forward.2} parent=5 // pred_check_branch
      %727 = sbr.rel (%p725) target = $region120
    $region119: #{deepspectra_forward.2} parent=5 // pred_region
      // Predicated region
      $region121: #{deepspectra_forward.2} parent=119 // pred_check
        %p728 = pneg %p53
      $region122: #{deepspectra_forward.2} parent=119 // pred_check_branch
        %730 = sbr.rel (%p728) target = $region124
      $region123: #{deepspectra_forward.2} parent=119 // pred_region
        %p731 = scmp.lt.s32.totalorder %s33, 1
        %s732 = scalar_select %p731, %s33, 1
        %s733 = smul.addr %s732, 8
        %s734 = scalar_lea.vmem %s0, %s733
      $region124: #{deepspectra_forward.2} parent=119 // pred_fallthru
        _
    $region120: #{deepspectra_forward.2} parent=5 // pred_fallthru
      _
    %p735 = scmp.le.s32.totalorder 1, %s33
    %p736 = scmp.lt.s32.totalorder %s33, 3
    %p737 = pnand %p735, %p736
    %p738 = pneg %p737
    // Predicated region
    $region125: #{deepspectra_forward.2} parent=5 // pred_check
      _
    $region126: #{deepspectra_forward.2} parent=5 // pred_check_branch
      %740 = sbr.rel (%p737) target = $region128
    $region127: #{deepspectra_forward.2} parent=5 // pred_region
      %s741 = ssub.s32 %s33, 1
      %p742 = scmp.lt.s32.totalorder %s38, 1
      %s743 = scalar_select %p742, %s38, 1
      %s744 = smul.addr %s743, 8
      %s745 = scalar_lea.vmem %s0, %s744
      %p746 = pneg %p59
      %p747 = pneg %p56
      %p748 = pneg %p80
      %p749 = pneg %p77
      %p750 = pneg %p101
      %p751 = pneg %p98
      %p752 = pneg %p122
      %p753 = pneg %p119
      %p754 = pneg %p143
      %p755 = pneg %p140
      %p756 = pneg %p164
      %p757 = pneg %p161
      %p758 = pneg %p185
      %p759 = pneg %p182
      %p760 = pneg %p206
      %p761 = pneg %p203
      %p762 = pneg %p227
      %p763 = pneg %p224
      %p764 = pneg %p248
      %p765 = pneg %p245
      %p766 = pneg %p269
      %p767 = pneg %p266
      %p768 = pneg %p290
      %p769 = pneg %p287
      %p770 = pneg %p311
      %p771 = pneg %p308
      %p772 = pneg %p332
      %p773 = pneg %p329
      %p774 = pneg %p353
      %p775 = pneg %p350
      %p776 = pneg %p374
      %p777 = pneg %p371
      %p778 = pneg %p395
      %p779 = pneg %p392
      %p780 = pneg %p416
      %p781 = pneg %p413
      %p782 = pneg %p437
      %p783 = pneg %p434
      %p784 = pneg %p458
      %p785 = pneg %p455
      %p786 = pneg %p479
      %p787 = pneg %p476
      %p788 = pneg %p500
      %p789 = pneg %p497
      %p790 = pneg %p521
      %p791 = pneg %p518
      %p792 = pneg %p542
      %p793 = pneg %p539
      %p794 = pneg %p563
      %p795 = pneg %p560
      %p796 = pneg %p584
      %p797 = pneg %p581
      %p798 = pneg %p605
      %p799 = pneg %p602
      %p800 = pneg %p631
      %p801 = pneg %p628
      %p802 = scmp.lt.s32.totalorder %s38, 1
      %s803 = scalar_select %p802, %s38, 1
      %s804 = smul.addr %s803, 2
      %s805 = smul.addr %s804, 8
      %s806 = scalar_lea.vmem %s27, %s805
      %p807 = scmp.lt.s32.totalorder %s38, 1
      %s808 = scalar_select %p807, %s38, 1
      %s809 = smul.addr %s808, 8
      %s810 = scalar_lea.vmem %s0, %s809
      %p811 = scmp.lt.s32.totalorder %s38, 1
      %s812 = scalar_select %p811, %s38, 1
      %s813 = smul.addr %s812, 2
      %s814 = smul.addr %s813, 8
      %s815 = scalar_lea.vmem %s27, %s814
      %816 = vst [vmem:[#allocation2] sm:$0xff] 0.0
      %vm817 = vcmask 31744
      %818 = vst.msk [vmem:[#allocation2 + $0x8] sm:$0xff] %vm817, 0.0
      %819 = vst [vmem:[#allocation3] sm:$0xff] 0.0
      %820 = vst.msk [vmem:[#allocation3 + $0x8] sm:$0xff] %vm817, 0.0
      %821 = vst [vmem:[#allocation3 + $0x10] sm:$0xff] 0.0
      %822 = vst.msk [vmem:[#allocation3 + $0x18] sm:$0xff] %vm817, 0.0
      %vm823 = vcmask 1043456
      %vm824 = vcmask 31748
      %vm825 = vmor %vm824, %vm823
      %826 = vst.msk [vmem:[#allocation4] sm:$0xff] %vm825, 0.0
      %v827 = vld [vmem:[%s810] sm:$0x7f]
      %v828 = vld [vmem:[%s2] sm:$0xff]
      %830 = vset.pattern.permute.xlu0 0
      %831 = vperm.xlu0 %830, %v828
      %v832 = vpop.permute.xlu0 %831
      %v834 = vadd.f32 %v832, 0.0
      %v835 = vld [vmem:[%s1] sm:$0xff]
      %837 = vset.pattern.permute.xlu0 0
      %838 = vperm.xlu0 %837, %v835
      %v839 = vpop.permute.xlu0 %838
      %v841 = vperm.slane %v827, 0
      %v842 = vmul.f32 %v839, %v841
      %v843 = vadd.f32 %v834, %v842
      %844 = vset.pattern.permute.xlu0 1
      %845 = vperm.xlu0 %844, %v835
      %v846 = vpop.permute.xlu0 %845
      %v848 = vperm.slane %v827, 1
      %v849 = vmul.f32 %v846, %v848
      %v850 = vadd.f32 %v843, %v849
      %851 = vset.pattern.permute.xlu0 2
      %852 = vperm.xlu0 %851, %v835
      %v853 = vpop.permute.xlu0 %852
      %v855 = vperm.slane %v827, 2
      %v856 = vmul.f32 %v853, %v855
      %v857 = vadd.f32 %v850, %v856
      %858 = vset.pattern.permute.xlu0 3
      %859 = vperm.xlu0 %858, %v835
      %v860 = vpop.permute.xlu0 %859
      %v862 = vperm.slane %v827, 3
      %v863 = vmul.f32 %v860, %v862
      %v864 = vadd.f32 %v857, %v863
      %865 = vset.pattern.permute.xlu0 4
      %866 = vperm.xlu0 %865, %v835
      %v867 = vpop.permute.xlu0 %866
      %v869 = vperm.slane %v827, 4
      %v870 = vmul.f32 %v867, %v869
      %v871 = vadd.f32 %v864, %v870
      %872 = vset.pattern.permute.xlu0 5
      %873 = vperm.xlu0 %872, %v835
      %v874 = vpop.permute.xlu0 %873
      %v876 = vperm.slane %v827, 5
      %v877 = vmul.f32 %v874, %v876
      %v878 = vadd.f32 %v871, %v877
      %879 = vset.pattern.permute.xlu0 6
      %880 = vperm.xlu0 %879, %v835
      %v881 = vpop.permute.xlu0 %880
      %v883 = vperm.slane %v827, 6
      %v884 = vmul.f32 %v881, %v883
      %v885 = vadd.f32 %v878, %v884
      %v886 = vmax.f32 %v885, 0.0
      %888 = vrot.lane.b32.xlu0 %v886, 2
      %v889 = vpop.permute.xlu0 %888
      %vm891 = vcmask 1047568
      %892 = vst.msk [vmem:[#allocation2] sm:$0xff] %vm891, %v889
      %vm893 = vcmask 15360
      %894 = vst.msk [vmem:[#allocation2 + $0x8] sm:$0xff] %vm893, %v889
      %v895 = vld [vmem:[#allocation2] sm:$0xff]
      %v896 = vld [vmem:[#allocation2 + $0x8] sm:$0xff]
      %v897 = vld [vmem:[%s4] sm:$0xf]
      %899 = vset.pattern.permute.xlu0 0
      %900 = vperm.xlu0 %899, %v897
      %v901 = vpop.permute.xlu0 %900
      %v903 = vadd.f32 %v901, 0.0
      %v904 = vld [vmem:[%s3] sm:$0xf]
      %906 = vset.pattern.permute.xlu0 0
      %907 = vperm.xlu0 %906, %v904
      %v908 = vpop.permute.xlu0 %907
      %v910 = vperm.slane %v895, 0
      %v911 = vperm.slane %v896, 0
      %v912 = vmul.f32 %v908, %v910
      %v913 = vmul.f32 %v908, %v911
      %v914 = vadd.f32 %v903, %v912
      %v915 = vadd.f32 %v903, %v913
      %916 = vset.pattern.permute.xlu0 1
      %917 = vperm.xlu0 %916, %v904
      %v918 = vpop.permute.xlu0 %917
      %v920 = vperm.slane %v895, 1
      %v921 = vperm.slane %v896, 1
      %v922 = vmul.f32 %v918, %v920
      %v923 = vmul.f32 %v918, %v921
      %v924 = vadd.f32 %v914, %v922
      %v925 = vadd.f32 %v915, %v923
      %926 = vset.pattern.permute.xlu0 2
      %927 = vperm.xlu0 %926, %v904
      %v928 = vpop.permute.xlu0 %927
      %v930 = vperm.slane %v895, 2
      %v931 = vperm.slane %v896, 2
      %v932 = vmul.f32 %v928, %v930
      %v933 = vmul.f32 %v928, %v931
      %v934 = vadd.f32 %v924, %v932
      %v935 = vadd.f32 %v925, %v933
      %936 = vset.pattern.permute.xlu0 3
      %937 = vperm.xlu0 %936, %v904
      %v938 = vpop.permute.xlu0 %937
      %v940 = vperm.slane %v895, 3
      %v941 = vperm.slane %v896, 3
      %v942 = vmul.f32 %v938, %v940
      %v943 = vmul.f32 %v938, %v941
      %v944 = vadd.f32 %v934, %v942
      %v945 = vadd.f32 %v935, %v943
      %946 = vset.pattern.permute.xlu0 4
      %947 = vperm.xlu0 %946, %v904
      %v948 = vpop.permute.xlu0 %947
      %v950 = vperm.slane %v895, 4
      %v951 = vperm.slane %v896, 4
      %v952 = vmul.f32 %v948, %v950
      %v953 = vmul.f32 %v948, %v951
      %v954 = vadd.f32 %v944, %v952
      %v955 = vadd.f32 %v945, %v953
      %956 = vset.pattern.permute.xlu0 5
      %957 = vperm.xlu0 %956, %v904
      %v958 = vpop.permute.xlu0 %957
      %v960 = vperm.slane %v895, 5
      %v961 = vperm.slane %v896, 5
      %v962 = vmul.f32 %v958, %v960
      %v963 = vmul.f32 %v958, %v961
      %v964 = vadd.f32 %v954, %v962
      %v965 = vadd.f32 %v955, %v963
      %966 = vset.pattern.permute.xlu0 6
      %967 = vperm.xlu0 %966, %v904
      %v968 = vpop.permute.xlu0 %967
      %v970 = vperm.slane %v895, 6
      %v971 = vperm.slane %v896, 6
      %v972 = vmul.f32 %v968, %v970
      %v973 = vmul.f32 %v968, %v971
      %v974 = vadd.f32 %v964, %v972
      %v975 = vadd.f32 %v965, %v973
      %976 = vset.pattern.permute.xlu0 7
      %977 = vperm.xlu0 %976, %v904
      %v978 = vpop.permute.xlu0 %977
      %v980 = vperm.slane %v895, 7
      %v981 = vperm.slane %v896, 7
      %v982 = vmul.f32 %v978, %v980
      %v983 = vmul.f32 %v978, %v981
      %v984 = vadd.f32 %v974, %v982
      %v985 = vadd.f32 %v975, %v983
      %v986 = vmax.f32 %v984, 0.0
      %v987 = vmax.f32 %v985, 0.0
      %vm988 = vcmask 1043472
      %989 = vst.msk [vmem:[#allocation3] sm:$0xf] %vm988, %v986
      %vm990 = vcmask 11264
      %991 = vst.msk [vmem:[#allocation3 + $0x8] sm:$0xf] %vm990, %v987
      %v992 = vld [vmem:[%s6] sm:$0xf]
      %994 = vset.pattern.permute.xlu0 0
      %995 = vperm.xlu0 %994, %v992
      %v996 = vpop.permute.xlu0 %995
      %v998 = vadd.f32 %v996, 0.0
      %v999 = vld [vmem:[%s5] sm:$0xf]
      %1001 = vset.pattern.permute.xlu0 0
      %1002 = vperm.xlu0 %1001, %v999
      %v1003 = vpop.permute.xlu0 %1002
      %v1005 = vmul.f32 %v1003, %v910
      %v1006 = vmul.f32 %v1003, %v911
      %v1007 = vadd.f32 %v998, %v1005
      %v1008 = vadd.f32 %v998, %v1006
      %1009 = vset.pattern.permute.xlu0 1
      %1010 = vperm.xlu0 %1009, %v999
      %v1011 = vpop.permute.xlu0 %1010
      %v1013 = vmul.f32 %v1011, %v920
      %v1014 = vmul.f32 %v1011, %v921
      %v1015 = vadd.f32 %v1007, %v1013
      %v1016 = vadd.f32 %v1008, %v1014
      %1017 = vset.pattern.permute.xlu0 2
      %1018 = vperm.xlu0 %1017, %v999
      %v1019 = vpop.permute.xlu0 %1018
      %v1021 = vmul.f32 %v1019, %v930
      %v1022 = vmul.f32 %v1019, %v931
      %v1023 = vadd.f32 %v1015, %v1021
      %v1024 = vadd.f32 %v1016, %v1022
      %1025 = vset.pattern.permute.xlu0 3
      %1026 = vperm.xlu0 %1025, %v999
      %v1027 = vpop.permute.xlu0 %1026
      %v1029 = vmul.f32 %v1027, %v940
      %v1030 = vmul.f32 %v1027, %v941
      %v1031 = vadd.f32 %v1023, %v1029
      %v1032 = vadd.f32 %v1024, %v1030
      %1033 = vset.pattern.permute.xlu0 4
      %1034 = vperm.xlu0 %1033, %v999
      %v1035 = vpop.permute.xlu0 %1034
      %v1037 = vmul.f32 %v1035, %v950
      %v1038 = vmul.f32 %v1035, %v951
      %v1039 = vadd.f32 %v1031, %v1037
      %v1040 = vadd.f32 %v1032, %v1038
      %1041 = vset.pattern.permute.xlu0 5
      %1042 = vperm.xlu0 %1041, %v999
      %v1043 = vpop.permute.xlu0 %1042
      %v1045 = vmul.f32 %v1043, %v960
      %v1046 = vmul.f32 %v1043, %v961
      %v1047 = vadd.f32 %v1039, %v1045
      %v1048 = vadd.f32 %v1040, %v1046
      %1049 = vset.pattern.permute.xlu0 6
      %1050 = vperm.xlu0 %1049, %v999
      %v1051 = vpop.permute.xlu0 %1050
      %v1053 = vmul.f32 %v1051, %v970
      %v1054 = vmul.f32 %v1051, %v971
      %v1055 = vadd.f32 %v1047, %v1053
      %v1056 = vadd.f32 %v1048, %v1054
      %1057 = vset.pattern.permute.xlu0 7
      %1058 = vperm.xlu0 %1057, %v999
      %v1059 = vpop.permute.xlu0 %1058
      %v1061 = vmul.f32 %v1059, %v980
      %v1062 = vmul.f32 %v1059, %v981
      %v1063 = vadd.f32 %v1055, %v1061
      %v1064 = vadd.f32 %v1056, %v1062
      %v1065 = vmax.f32 %v1063, 0.0
      %v1066 = vmax.f32 %v1064, 0.0
      %v1069 = vrot.slane %v1066, 4
      %v1070 = vsel %vm823, %v1065, %v1069
      %vm1072 = vcmask 15364
      %vm1073 = vmor %vm1072, %vm988
      %1074 = vst.msk [vmem:[#allocation4] sm:$0xff] %vm1073, %v1070
      %v1075 = vld [vmem:[#allocation4] sm:$0xff]
      %v1076 = vld [vmem:[%s8] sm:$0xf]
      %1078 = vset.pattern.permute.xlu0 0
      %1079 = vperm.xlu0 %1078, %v1076
      %v1080 = vpop.permute.xlu0 %1079
      %v1082 = vadd.f32 %v1080, 0.0
      %v1083 = vld [vmem:[%s7] sm:$0xf]
      %1085 = vset.pattern.permute.xlu0 0
      %1086 = vperm.xlu0 %1085, %v1083
      %v1087 = vpop.permute.xlu0 %1086
      %v1090 = vperm.slane %v1075, 0
      %v1091 = vperm.slane %v1075, 4
      %v1094 = vperm.slane %v1090, 0
      %v1095 = vperm.slane %v1091, 0
      %v1096 = vmul.f32 %v1087, %v1094
      %v1097 = vmul.f32 %v1087, %v1095
      %v1098 = vadd.f32 %v1082, %v1096
      %v1099 = vadd.f32 %v1082, %v1097
      %1100 = vset.pattern.permute.xlu0 1
      %1101 = vperm.xlu0 %1100, %v1083
      %v1102 = vpop.permute.xlu0 %1101
      %v1104 = vmul.f32 %v1102, %v1094
      %v1105 = vmul.f32 %v1102, %v1095
      %1108 = vrot.lane.b32.xlu0 %v1104, 127
      %v1109 = vpop.permute.xlu0 %1108
      %1110 = vrot.lane.b32.xlu0 %v1105, 127
      %v1111 = vpop.permute.xlu0 %1110
      %vm1112 = vcmask 1039360
      %v1113 = vsel %vm1112, %v1109, %v1111
      %v1116 = vadd.f32 %v1098, %v1113
      %v1117 = vadd.f32 %v1099, %v1111
      %1118 = vset.pattern.permute.xlu0 2
      %1119 = vperm.xlu0 %1118, %v1083
      %v1120 = vpop.permute.xlu0 %1119
      %v1122 = vmul.f32 %v1120, %v1094
      %v1123 = vmul.f32 %v1120, %v1095
      %1126 = vrot.lane.b32.xlu0 %v1122, 126
      %v1127 = vpop.permute.xlu0 %1126
      %1128 = vrot.lane.b32.xlu0 %v1123, 126
      %v1129 = vpop.permute.xlu0 %1128
      %vm1130 = vcmask 1031168
      %v1131 = vsel %vm1130, %v1127, %v1129
      %v1134 = vadd.f32 %v1116, %v1131
      %v1135 = vadd.f32 %v1117, %v1129
      %1136 = vset.pattern.permute.xlu0 3
      %1137 = vperm.xlu0 %1136, %v1083
      %v1138 = vpop.permute.xlu0 %1137
      %v1140 = vperm.slane %v1075, 1
      %v1141 = vperm.slane %v1075, 5
      %v1144 = vperm.slane %v1140, 1
      %v1145 = vperm.slane %v1141, 1
      %v1146 = vmul.f32 %v1138, %v1144
      %v1147 = vmul.f32 %v1138, %v1145
      %v1148 = vadd.f32 %v1134, %v1146
      %v1149 = vadd.f32 %v1135, %v1147
      %1150 = vset.pattern.permute.xlu0 4
      %1151 = vperm.xlu0 %1150, %v1083
      %v1152 = vpop.permute.xlu0 %1151
      %v1154 = vmul.f32 %v1152, %v1144
      %v1155 = vmul.f32 %v1152, %v1145
      %1158 = vrot.lane.b32.xlu0 %v1154, 127
      %v1159 = vpop.permute.xlu0 %1158
      %1160 = vrot.lane.b32.xlu0 %v1155, 127
      %v1161 = vpop.permute.xlu0 %1160
      %v1162 = vsel %vm1112, %v1159, %v1161
      %v1165 = vadd.f32 %v1148, %v1162
      %v1166 = vadd.f32 %v1149, %v1161
      %1167 = vset.pattern.permute.xlu0 5
      %1168 = vperm.xlu0 %1167, %v1083
      %v1169 = vpop.permute.xlu0 %1168
      %v1171 = vmul.f32 %v1169, %v1144
      %v1172 = vmul.f32 %v1169, %v1145
      %1175 = vrot.lane.b32.xlu0 %v1171, 126
      %v1176 = vpop.permute.xlu0 %1175
      %1177 = vrot.lane.b32.xlu0 %v1172, 126
      %v1178 = vpop.permute.xlu0 %1177
      %v1179 = vsel %vm1130, %v1176, %v1178
      %v1182 = vadd.f32 %v1165, %v1179
      %v1183 = vadd.f32 %v1166, %v1178
      %1184 = vset.pattern.permute.xlu0 6
      %1185 = vperm.xlu0 %1184, %v1083
      %v1186 = vpop.permute.xlu0 %1185
      %v1188 = vperm.slane %v1075, 2
      %v1189 = vperm.slane %v1075, 6
      %v1192 = vperm.slane %v1188, 2
      %v1193 = vperm.slane %v1189, 2
      %v1194 = vmul.f32 %v1186, %v1192
      %v1195 = vmul.f32 %v1186, %v1193
      %v1196 = vadd.f32 %v1182, %v1194
      %v1197 = vadd.f32 %v1183, %v1195
      %1198 = vset.pattern.permute.xlu0 7
      %1199 = vperm.xlu0 %1198, %v1083
      %v1200 = vpop.permute.xlu0 %1199
      %v1202 = vmul.f32 %v1200, %v1192
      %v1203 = vmul.f32 %v1200, %v1193
      %1206 = vrot.lane.b32.xlu0 %v1202, 127
      %v1207 = vpop.permute.xlu0 %1206
      %1208 = vrot.lane.b32.xlu0 %v1203, 127
      %v1209 = vpop.permute.xlu0 %1208
      %v1210 = vsel %vm1112, %v1207, %v1209
      %v1213 = vadd.f32 %v1196, %v1210
      %v1214 = vadd.f32 %v1197, %v1209
      %1215 = vset.pattern.permute.xlu0 8
      %1216 = vperm.xlu0 %1215, %v1083
      %v1217 = vpop.permute.xlu0 %1216
      %v1219 = vmul.f32 %v1217, %v1192
      %v1220 = vmul.f32 %v1217, %v1193
      %1223 = vrot.lane.b32.xlu0 %v1219, 126
      %v1224 = vpop.permute.xlu0 %1223
      %1225 = vrot.lane.b32.xlu0 %v1220, 126
      %v1226 = vpop.permute.xlu0 %1225
      %v1227 = vsel %vm1130, %v1224, %v1226
      %v1230 = vadd.f32 %v1213, %v1227
      %v1231 = vadd.f32 %v1214, %v1226
      %1232 = vset.pattern.permute.xlu0 9
      %1233 = vperm.xlu0 %1232, %v1083
      %v1234 = vpop.permute.xlu0 %1233
      %v1236 = vperm.slane %v1075, 3
      %v1237 = vperm.slane %v1075, 7
      %v1240 = vperm.slane %v1236, 3
      %v1241 = vperm.slane %v1237, 3
      %v1242 = vmul.f32 %v1234, %v1240
      %v1243 = vmul.f32 %v1234, %v1241
      %v1244 = vadd.f32 %v1230, %v1242
      %v1245 = vadd.f32 %v1231, %v1243
      %1246 = vset.pattern.permute.xlu0 10
      %1247 = vperm.xlu0 %1246, %v1083
      %v1248 = vpop.permute.xlu0 %1247
      %v1250 = vmul.f32 %v1248, %v1240
      %v1251 = vmul.f32 %v1248, %v1241
      %1254 = vrot.lane.b32.xlu0 %v1250, 127
      %v1255 = vpop.permute.xlu0 %1254
      %1256 = vrot.lane.b32.xlu0 %v1251, 127
      %v1257 = vpop.permute.xlu0 %1256
      %v1258 = vsel %vm1112, %v1255, %v1257
      %v1261 = vadd.f32 %v1244, %v1258
      %v1262 = vadd.f32 %v1245, %v1257
      %1263 = vset.pattern.permute.xlu0 11
      %1264 = vperm.xlu0 %1263, %v1083
      %v1265 = vpop.permute.xlu0 %1264
      %v1267 = vmul.f32 %v1265, %v1240
      %v1268 = vmul.f32 %v1265, %v1241
      %1271 = vrot.lane.b32.xlu0 %v1267, 126
      %v1272 = vpop.permute.xlu0 %1271
      %1273 = vrot.lane.b32.xlu0 %v1268, 126
      %v1274 = vpop.permute.xlu0 %1273
      %v1275 = vsel %vm1130, %v1272, %v1274
      %v1278 = vadd.f32 %v1261, %v1275
      %v1279 = vadd.f32 %v1262, %v1274
      %v1280 = vmax.f32 %v1278, 0.0
      %v1281 = vmax.f32 %v1279, 0.0
      %v1284 = vrot.slane %v1280, 4
      %v1285 = vrot.slane %v1281, 4
      %1286 = vrot.lane.b32.xlu0 %v1284, 1
      %v1287 = vpop.permute.xlu0 %1286
      %1288 = vrot.lane.b32.xlu0 %v1285, 1
      %v1289 = vpop.permute.xlu0 %1288
      %vm1290 = vcmask 7168
      %v1291 = vsel %vm1290, %v1287, %v1289
      %vm1294 = vcmask 1047572
      %1295 = vst.msk [vmem:[#allocation3] sm:$0xf0] %vm1294, %v1287
      %1296 = vst.msk [vmem:[#allocation3 + $0x8] sm:$0xf0] %vm1072, %v1291
      %v1297 = vld [vmem:[%s10] sm:$0xf]
      %1299 = vset.pattern.permute.xlu0 0
      %1300 = vperm.xlu0 %1299, %v1297
      %v1301 = vpop.permute.xlu0 %1300
      %v1303 = vadd.f32 %v1301, 0.0
      %v1304 = vld [vmem:[%s9] sm:$0xf]
      %1306 = vset.pattern.permute.xlu0 0
      %1307 = vperm.xlu0 %1306, %v1304
      %v1308 = vpop.permute.xlu0 %1307
      %v1310 = vmul.f32 %v1308, %v910
      %v1311 = vmul.f32 %v1308, %v911
      %v1312 = vadd.f32 %v1303, %v1310
      %v1313 = vadd.f32 %v1303, %v1311
      %1314 = vset.pattern.permute.xlu0 1
      %1315 = vperm.xlu0 %1314, %v1304
      %v1316 = vpop.permute.xlu0 %1315
      %v1318 = vmul.f32 %v1316, %v920
      %v1319 = vmul.f32 %v1316, %v921
      %v1320 = vadd.f32 %v1312, %v1318
      %v1321 = vadd.f32 %v1313, %v1319
      %1322 = vset.pattern.permute.xlu0 2
      %1323 = vperm.xlu0 %1322, %v1304
      %v1324 = vpop.permute.xlu0 %1323
      %v1326 = vmul.f32 %v1324, %v930
      %v1327 = vmul.f32 %v1324, %v931
      %v1328 = vadd.f32 %v1320, %v1326
      %v1329 = vadd.f32 %v1321, %v1327
      %1330 = vset.pattern.permute.xlu0 3
      %1331 = vperm.xlu0 %1330, %v1304
      %v1332 = vpop.permute.xlu0 %1331
      %v1334 = vmul.f32 %v1332, %v940
      %v1335 = vmul.f32 %v1332, %v941
      %v1336 = vadd.f32 %v1328, %v1334
      %v1337 = vadd.f32 %v1329, %v1335
      %1338 = vset.pattern.permute.xlu0 4
      %1339 = vperm.xlu0 %1338, %v1304
      %v1340 = vpop.permute.xlu0 %1339
      %v1342 = vmul.f32 %v1340, %v950
      %v1343 = vmul.f32 %v1340, %v951
      %v1344 = vadd.f32 %v1336, %v1342
      %v1345 = vadd.f32 %v1337, %v1343
      %1346 = vset.pattern.permute.xlu0 5
      %1347 = vperm.xlu0 %1346, %v1304
      %v1348 = vpop.permute.xlu0 %1347
      %v1350 = vmul.f32 %v1348, %v960
      %v1351 = vmul.f32 %v1348, %v961
      %v1352 = vadd.f32 %v1344, %v1350
      %v1353 = vadd.f32 %v1345, %v1351
      %1354 = vset.pattern.permute.xlu0 6
      %1355 = vperm.xlu0 %1354, %v1304
      %v1356 = vpop.permute.xlu0 %1355
      %v1358 = vmul.f32 %v1356, %v970
      %v1359 = vmul.f32 %v1356, %v971
      %v1360 = vadd.f32 %v1352, %v1358
      %v1361 = vadd.f32 %v1353, %v1359
      %1362 = vset.pattern.permute.xlu0 7
      %1363 = vperm.xlu0 %1362, %v1304
      %v1364 = vpop.permute.xlu0 %1363
      %v1366 = vmul.f32 %v1364, %v980
      %v1367 = vmul.f32 %v1364, %v981
      %v1368 = vadd.f32 %v1360, %v1366
      %v1369 = vadd.f32 %v1361, %v1367
      %v1370 = vmax.f32 %v1368, 0.0
      %v1371 = vmax.f32 %v1369, 0.0
      %v1374 = vrot.slane %v1371, 4
      %v1375 = vsel %vm823, %v1370, %v1374
      %1377 = vst.msk [vmem:[#allocation4] sm:$0xff] %vm1073, %v1375
      %v1378 = vld [vmem:[#allocation4] sm:$0xff]
      %v1379 = vld [vmem:[%s12] sm:$0xf]
      %1381 = vset.pattern.permute.xlu0 0
      %1382 = vperm.xlu0 %1381, %v1379
      %v1383 = vpop.permute.xlu0 %1382
      %v1385 = vadd.f32 %v1383, 0.0
      %v1386 = vld [vmem:[%s11] sm:$0xf]
      %1388 = vset.pattern.permute.xlu0 0
      %1389 = vperm.xlu0 %1388, %v1386
      %v1390 = vpop.permute.xlu0 %1389
      %v1392 = vperm.slane %v1378, 0
      %v1393 = vmul.f32 %v1390, %v1392
      %v1394 = vadd.f32 %v1385, %v1393
      %1395 = vset.pattern.permute.xlu0 1
      %1396 = vperm.xlu0 %1395, %v1386
      %v1397 = vpop.permute.xlu0 %1396
      %v1400 = vperm.slane %v1378, 0
      %v1401 = vperm.slane %v1378, 4
      %v1404 = vperm.slane %v1400, 0
      %v1405 = vperm.slane %v1401, 0
      %v1406 = vmul.f32 %v1397, %v1404
      %v1407 = vmul.f32 %v1397, %v1405
      %1410 = vrot.lane.b32.xlu0 %v1406, 127
      %v1411 = vpop.permute.xlu0 %1410
      %1412 = vrot.lane.b32.xlu0 %v1407, 127
      %v1413 = vpop.permute.xlu0 %1412
      %v1414 = vsel %vm1112, %v1411, %v1413
      %v1416 = vadd.f32 %v1394, %v1414
      %1417 = vset.pattern.permute.xlu0 2
      %1418 = vperm.xlu0 %1417, %v1386
      %v1419 = vpop.permute.xlu0 %1418
      %v1421 = vmul.f32 %v1419, %v1404
      %v1422 = vmul.f32 %v1419, %v1405
      %1425 = vrot.lane.b32.xlu0 %v1421, 126
      %v1426 = vpop.permute.xlu0 %1425
      %1427 = vrot.lane.b32.xlu0 %v1422, 126
      %v1428 = vpop.permute.xlu0 %1427
      %v1429 = vsel %vm1130, %v1426, %v1428
      %v1431 = vadd.f32 %v1416, %v1429
      %1432 = vset.pattern.permute.xlu0 3
      %1433 = vperm.xlu0 %1432, %v1386
      %v1434 = vpop.permute.xlu0 %1433
      %v1436 = vmul.f32 %v1434, %v1404
      %v1437 = vmul.f32 %v1434, %v1405
      %1440 = vrot.lane.b32.xlu0 %v1436, 125
      %v1441 = vpop.permute.xlu0 %1440
      %1442 = vrot.lane.b32.xlu0 %v1437, 125
      %v1443 = vpop.permute.xlu0 %1442
      %vm1444 = vcmask 1022976
      %v1445 = vsel %vm1444, %v1441, %v1443
      %v1447 = vadd.f32 %v1431, %v1445
      %1448 = vset.pattern.permute.xlu0 4
      %1449 = vperm.xlu0 %1448, %v1386
      %v1450 = vpop.permute.xlu0 %1449
      %v1452 = vmul.f32 %v1450, %v1404
      %v1453 = vmul.f32 %v1450, %v1405
      %1456 = vrot.lane.b32.xlu0 %v1452, 124
      %v1457 = vpop.permute.xlu0 %1456
      %1458 = vrot.lane.b32.xlu0 %v1453, 124
      %v1459 = vpop.permute.xlu0 %1458
      %vm1460 = vcmask 1014784
      %v1461 = vsel %vm1460, %v1457, %v1459
      %v1463 = vadd.f32 %v1447, %v1461
      %1464 = vset.pattern.permute.xlu0 5
      %1465 = vperm.xlu0 %1464, %v1386
      %v1466 = vpop.permute.xlu0 %1465
      %v1468 = vperm.slane %v1378, 1
      %v1469 = vmul.f32 %v1466, %v1468
      %v1470 = vadd.f32 %v1463, %v1469
      %1471 = vset.pattern.permute.xlu0 6
      %1472 = vperm.xlu0 %1471, %v1386
      %v1473 = vpop.permute.xlu0 %1472
      %v1475 = vperm.slane %v1378, 1
      %v1476 = vperm.slane %v1378, 5
      %v1479 = vperm.slane %v1475, 1
      %v1480 = vperm.slane %v1476, 1
      %v1481 = vmul.f32 %v1473, %v1479
      %v1482 = vmul.f32 %v1473, %v1480
      %1485 = vrot.lane.b32.xlu0 %v1481, 127
      %v1486 = vpop.permute.xlu0 %1485
      %1487 = vrot.lane.b32.xlu0 %v1482, 127
      %v1488 = vpop.permute.xlu0 %1487
      %v1489 = vsel %vm1112, %v1486, %v1488
      %v1491 = vadd.f32 %v1470, %v1489
      %1492 = vset.pattern.permute.xlu0 7
      %1493 = vperm.xlu0 %1492, %v1386
      %v1494 = vpop.permute.xlu0 %1493
      %v1496 = vmul.f32 %v1494, %v1479
      %v1497 = vmul.f32 %v1494, %v1480
      %1500 = vrot.lane.b32.xlu0 %v1496, 126
      %v1501 = vpop.permute.xlu0 %1500
      %1502 = vrot.lane.b32.xlu0 %v1497, 126
      %v1503 = vpop.permute.xlu0 %1502
      %v1504 = vsel %vm1130, %v1501, %v1503
      %v1506 = vadd.f32 %v1491, %v1504
      %1507 = vset.pattern.permute.xlu0 8
      %1508 = vperm.xlu0 %1507, %v1386
      %v1509 = vpop.permute.xlu0 %1508
      %v1511 = vmul.f32 %v1509, %v1479
      %v1512 = vmul.f32 %v1509, %v1480
      %1515 = vrot.lane.b32.xlu0 %v1511, 125
      %v1516 = vpop.permute.xlu0 %1515
      %1517 = vrot.lane.b32.xlu0 %v1512, 125
      %v1518 = vpop.permute.xlu0 %1517
      %v1519 = vsel %vm1444, %v1516, %v1518
      %v1521 = vadd.f32 %v1506, %v1519
      %1522 = vset.pattern.permute.xlu0 9
      %1523 = vperm.xlu0 %1522, %v1386
      %v1524 = vpop.permute.xlu0 %1523
      %v1526 = vmul.f32 %v1524, %v1479
      %v1527 = vmul.f32 %v1524, %v1480
      %1530 = vrot.lane.b32.xlu0 %v1526, 124
      %v1531 = vpop.permute.xlu0 %1530
      %1532 = vrot.lane.b32.xlu0 %v1527, 124
      %v1533 = vpop.permute.xlu0 %1532
      %v1534 = vsel %vm1460, %v1531, %v1533
      %v1536 = vadd.f32 %v1521, %v1534
      %1537 = vset.pattern.permute.xlu0 10
      %1538 = vperm.xlu0 %1537, %v1386
      %v1539 = vpop.permute.xlu0 %1538
      %v1541 = vperm.slane %v1378, 2
      %v1542 = vmul.f32 %v1539, %v1541
      %v1543 = vadd.f32 %v1536, %v1542
      %1544 = vset.pattern.permute.xlu0 11
      %1545 = vperm.xlu0 %1544, %v1386
      %v1546 = vpop.permute.xlu0 %1545
      %v1548 = vperm.slane %v1378, 2
      %v1549 = vperm.slane %v1378, 6
      %v1552 = vperm.slane %v1548, 2
      %v1553 = vperm.slane %v1549, 2
      %v1554 = vmul.f32 %v1546, %v1552
      %v1555 = vmul.f32 %v1546, %v1553
      %1558 = vrot.lane.b32.xlu0 %v1554, 127
      %v1559 = vpop.permute.xlu0 %1558
      %1560 = vrot.lane.b32.xlu0 %v1555, 127
      %v1561 = vpop.permute.xlu0 %1560
      %v1562 = vsel %vm1112, %v1559, %v1561
      %v1564 = vadd.f32 %v1543, %v1562
      %1565 = vset.pattern.permute.xlu0 12
      %1566 = vperm.xlu0 %1565, %v1386
      %v1567 = vpop.permute.xlu0 %1566
      %v1569 = vmul.f32 %v1567, %v1552
      %v1570 = vmul.f32 %v1567, %v1553
      %1573 = vrot.lane.b32.xlu0 %v1569, 126
      %v1574 = vpop.permute.xlu0 %1573
      %1575 = vrot.lane.b32.xlu0 %v1570, 126
      %v1576 = vpop.permute.xlu0 %1575
      %v1577 = vsel %vm1130, %v1574, %v1576
      %v1579 = vadd.f32 %v1564, %v1577
      %1580 = vset.pattern.permute.xlu0 13
      %1581 = vperm.xlu0 %1580, %v1386
      %v1582 = vpop.permute.xlu0 %1581
      %v1584 = vmul.f32 %v1582, %v1552
      %v1585 = vmul.f32 %v1582, %v1553
      %1588 = vrot.lane.b32.xlu0 %v1584, 125
      %v1589 = vpop.permute.xlu0 %1588
      %1590 = vrot.lane.b32.xlu0 %v1585, 125
      %v1591 = vpop.permute.xlu0 %1590
      %v1592 = vsel %vm1444, %v1589, %v1591
      %v1594 = vadd.f32 %v1579, %v1592
      %1595 = vset.pattern.permute.xlu0 14
      %1596 = vperm.xlu0 %1595, %v1386
      %v1597 = vpop.permute.xlu0 %1596
      %v1599 = vmul.f32 %v1597, %v1552
      %v1600 = vmul.f32 %v1597, %v1553
      %1603 = vrot.lane.b32.xlu0 %v1599, 124
      %v1604 = vpop.permute.xlu0 %1603
      %1605 = vrot.lane.b32.xlu0 %v1600, 124
      %v1606 = vpop.permute.xlu0 %1605
      %v1607 = vsel %vm1460, %v1604, %v1606
      %v1609 = vadd.f32 %v1594, %v1607
      %1610 = vset.pattern.permute.xlu0 15
      %1611 = vperm.xlu0 %1610, %v1386
      %v1612 = vpop.permute.xlu0 %1611
      %v1614 = vperm.slane %v1378, 3
      %v1615 = vmul.f32 %v1612, %v1614
      %v1616 = vadd.f32 %v1609, %v1615
      %1617 = vset.pattern.permute.xlu0 16
      %1618 = vperm.xlu0 %1617, %v1386
      %v1619 = vpop.permute.xlu0 %1618
      %v1621 = vperm.slane %v1378, 3
      %v1622 = vperm.slane %v1378, 7
      %v1625 = vperm.slane %v1621, 3
      %v1626 = vperm.slane %v1622, 3
      %v1627 = vmul.f32 %v1619, %v1625
      %v1628 = vmul.f32 %v1619, %v1626
      %1631 = vrot.lane.b32.xlu0 %v1627, 127
      %v1632 = vpop.permute.xlu0 %1631
      %1633 = vrot.lane.b32.xlu0 %v1628, 127
      %v1634 = vpop.permute.xlu0 %1633
      %v1635 = vsel %vm1112, %v1632, %v1634
      %v1637 = vadd.f32 %v1616, %v1635
      %1638 = vset.pattern.permute.xlu0 17
      %1639 = vperm.xlu0 %1638, %v1386
      %v1640 = vpop.permute.xlu0 %1639
      %v1642 = vmul.f32 %v1640, %v1625
      %v1643 = vmul.f32 %v1640, %v1626
      %1646 = vrot.lane.b32.xlu0 %v1642, 126
      %v1647 = vpop.permute.xlu0 %1646
      %1648 = vrot.lane.b32.xlu0 %v1643, 126
      %v1649 = vpop.permute.xlu0 %1648
      %v1650 = vsel %vm1130, %v1647, %v1649
      %v1652 = vadd.f32 %v1637, %v1650
      %1653 = vset.pattern.permute.xlu0 18
      %1654 = vperm.xlu0 %1653, %v1386
      %v1655 = vpop.permute.xlu0 %1654
      %v1657 = vmul.f32 %v1655, %v1625
      %v1658 = vmul.f32 %v1655, %v1626
      %1661 = vrot.lane.b32.xlu0 %v1657, 125
      %v1662 = vpop.permute.xlu0 %1661
      %1663 = vrot.lane.b32.xlu0 %v1658, 125
      %v1664 = vpop.permute.xlu0 %1663
      %v1665 = vsel %vm1444, %v1662, %v1664
      %v1667 = vadd.f32 %v1652, %v1665
      %1668 = vset.pattern.permute.xlu0 19
      %1669 = vperm.xlu0 %1668, %v1386
      %v1670 = vpop.permute.xlu0 %1669
      %v1672 = vmul.f32 %v1670, %v1625
      %v1673 = vmul.f32 %v1670, %v1626
      %1676 = vrot.lane.b32.xlu0 %v1672, 124
      %v1677 = vpop.permute.xlu0 %1676
      %1678 = vrot.lane.b32.xlu0 %v1673, 124
      %v1679 = vpop.permute.xlu0 %1678
      %v1680 = vsel %vm1460, %v1677, %v1679
      %v1682 = vadd.f32 %v1667, %v1680
      %v1683 = vmax.f32 %v1682, 0.0
      %1685 = vrot.lane.b32.xlu0 %v1683, 2
      %v1686 = vpop.permute.xlu0 %1685
      %1688 = vst.msk [vmem:[#allocation3 + $0x10] sm:$0xf] %vm988, %v1686
      %1689 = vst.msk [vmem:[#allocation3 + $0x18] sm:$0xf] %vm990, %v1686
      %1692 = vrot.lane.b32.xlu0 %v895, 127
      %v1693 = vpop.permute.xlu0 %1692
      %1694 = vrot.lane.b32.xlu0 %v896, 127
      %v1695 = vpop.permute.xlu0 %1694
      %v1696 = vsel %vm1112, %v1693, %v1695
      %v1699 = vadd.f32 %v895, %v1696
      %v1700 = vadd.f32 %v896, %v1695
      %1701 = vrot.lane.b32.xlu0 %v895, 126
      %v1702 = vpop.permute.xlu0 %1701
      %1703 = vrot.lane.b32.xlu0 %v896, 126
      %v1704 = vpop.permute.xlu0 %1703
      %v1705 = vsel %vm1130, %v1702, %v1704
      %v1708 = vadd.f32 %v1699, %v1705
      %v1709 = vadd.f32 %v1700, %v1704
      %v1710 = vld [vmem:[%s14] sm:$0xf]
      %1712 = vset.pattern.permute.xlu0 0
      %1713 = vperm.xlu0 %1712, %v1710
      %v1714 = vpop.permute.xlu0 %1713
      %v1716 = vadd.f32 %v1714, 0.0
      %v1717 = vld [vmem:[%s13] sm:$0xf]
      %1719 = vset.pattern.permute.xlu0 0
      %1720 = vperm.xlu0 %1719, %v1717
      %v1721 = vpop.permute.xlu0 %1720
      %v1723 = vperm.slane %v1708, 0
      %v1724 = vperm.slane %v1709, 0
      %v1725 = vmul.f32 %v1721, %v1723
      %v1726 = vmul.f32 %v1721, %v1724
      %v1727 = vadd.f32 %v1716, %v1725
      %v1728 = vadd.f32 %v1716, %v1726
      %1729 = vset.pattern.permute.xlu0 1
      %1730 = vperm.xlu0 %1729, %v1717
      %v1731 = vpop.permute.xlu0 %1730
      %v1733 = vperm.slane %v1708, 1
      %v1734 = vperm.slane %v1709, 1
      %v1735 = vmul.f32 %v1731, %v1733
      %v1736 = vmul.f32 %v1731, %v1734
      %v1737 = vadd.f32 %v1727, %v1735
      %v1738 = vadd.f32 %v1728, %v1736
      %1739 = vset.pattern.permute.xlu0 2
      %1740 = vperm.xlu0 %1739, %v1717
      %v1741 = vpop.permute.xlu0 %1740
      %v1743 = vperm.slane %v1708, 2
      %v1744 = vperm.slane %v1709, 2
      %v1745 = vmul.f32 %v1741, %v1743
      %v1746 = vmul.f32 %v1741, %v1744
      %v1747 = vadd.f32 %v1737, %v1745
      %v1748 = vadd.f32 %v1738, %v1746
      %1749 = vset.pattern.permute.xlu0 3
      %1750 = vperm.xlu0 %1749, %v1717
      %v1751 = vpop.permute.xlu0 %1750
      %v1753 = vperm.slane %v1708, 3
      %v1754 = vperm.slane %v1709, 3
      %v1755 = vmul.f32 %v1751, %v1753
      %v1756 = vmul.f32 %v1751, %v1754
      %v1757 = vadd.f32 %v1747, %v1755
      %v1758 = vadd.f32 %v1748, %v1756
      %1759 = vset.pattern.permute.xlu0 4
      %1760 = vperm.xlu0 %1759, %v1717
      %v1761 = vpop.permute.xlu0 %1760
      %v1763 = vperm.slane %v1708, 4
      %v1764 = vperm.slane %v1709, 4
      %v1765 = vmul.f32 %v1761, %v1763
      %v1766 = vmul.f32 %v1761, %v1764
      %v1767 = vadd.f32 %v1757, %v1765
      %v1768 = vadd.f32 %v1758, %v1766
      %1769 = vset.pattern.permute.xlu0 5
      %1770 = vperm.xlu0 %1769, %v1717
      %v1771 = vpop.permute.xlu0 %1770
      %v1773 = vperm.slane %v1708, 5
      %v1774 = vperm.slane %v1709, 5
      %v1775 = vmul.f32 %v1771, %v1773
      %v1776 = vmul.f32 %v1771, %v1774
      %v1777 = vadd.f32 %v1767, %v1775
      %v1778 = vadd.f32 %v1768, %v1776
      %1779 = vset.pattern.permute.xlu0 6
      %1780 = vperm.xlu0 %1779, %v1717
      %v1781 = vpop.permute.xlu0 %1780
      %v1783 = vperm.slane %v1708, 6
      %v1784 = vperm.slane %v1709, 6
      %v1785 = vmul.f32 %v1781, %v1783
      %v1786 = vmul.f32 %v1781, %v1784
      %v1787 = vadd.f32 %v1777, %v1785
      %v1788 = vadd.f32 %v1778, %v1786
      %1789 = vset.pattern.permute.xlu0 7
      %1790 = vperm.xlu0 %1789, %v1717
      %v1791 = vpop.permute.xlu0 %1790
      %v1793 = vperm.slane %v1708, 7
      %v1794 = vperm.slane %v1709, 7
      %v1795 = vmul.f32 %v1791, %v1793
      %v1796 = vmul.f32 %v1791, %v1794
      %v1797 = vadd.f32 %v1787, %v1795
      %v1798 = vadd.f32 %v1788, %v1796
      %v1799 = vmax.f32 %v1797, 0.0
      %v1800 = vmax.f32 %v1798, 0.0
      %v1803 = vrot.slane %v1799, 4
      %v1804 = vrot.slane %v1800, 4
      %1805 = vrot.lane.b32.xlu0 %v1803, 1
      %v1806 = vpop.permute.xlu0 %1805
      %1807 = vrot.lane.b32.xlu0 %v1804, 1
      %v1808 = vpop.permute.xlu0 %1807
      %v1809 = vsel %vm1290, %v1806, %v1808
      %1812 = vst.msk [vmem:[#allocation3 + $0x10] sm:$0xf0] %vm1294, %v1806
      %1813 = vst.msk [vmem:[#allocation3 + $0x18] sm:$0xf0] %vm1072, %v1809
      %v1814 = vld [vmem:[#allocation3] sm:$0xff]
      %v1815 = vld [vmem:[#allocation3 + $0x8] sm:$0xff]
      %v1816 = vld [vmem:[#allocation3 + $0x10] sm:$0xff]
      %v1817 = vld [vmem:[#allocation3 + $0x18] sm:$0xff]
      %v1818 = vld [vmem:[%s16] sm:$0xf]
      %1820 = vset.pattern.permute.xlu0 0
      %1821 = vperm.xlu0 %1820, %v1818
      %v1822 = vpop.permute.xlu0 %1821
      %v1824 = vadd.f32 %v1822, 0.0
      %v1825 = vld [vmem:[%s15] sm:$0xf]
      %1827 = vset.pattern.permute.xlu0 0
      %1828 = vperm.xlu0 %1827, %v1825
      %v1829 = vpop.permute.xlu0 %1828
      %v1831 = vperm.slane %v1814, 0
      %v1832 = vperm.slane %v1815, 0
      %v1833 = vmul.f32 %v1829, %v1831
      %v1834 = vmul.f32 %v1829, %v1832
      %v1835 = vadd.f32 %v1824, %v1833
      %v1836 = vadd.f32 %v1824, %v1834
      %1837 = vset.pattern.permute.xlu0 1
      %1838 = vperm.xlu0 %1837, %v1825
      %v1839 = vpop.permute.xlu0 %1838
      %v1841 = vperm.slane %v1814, 1
      %v1842 = vperm.slane %v1815, 1
      %v1843 = vmul.f32 %v1839, %v1841
      %v1844 = vmul.f32 %v1839, %v1842
      %v1845 = vadd.f32 %v1835, %v1843
      %v1846 = vadd.f32 %v1836, %v1844
      %1847 = vset.pattern.permute.xlu0 2
      %1848 = vperm.xlu0 %1847, %v1825
      %v1849 = vpop.permute.xlu0 %1848
      %v1851 = vperm.slane %v1814, 2
      %v1852 = vperm.slane %v1815, 2
      %v1853 = vmul.f32 %v1849, %v1851
      %v1854 = vmul.f32 %v1849, %v1852
      %v1855 = vadd.f32 %v1845, %v1853
      %v1856 = vadd.f32 %v1846, %v1854
      %1857 = vset.pattern.permute.xlu0 3
      %1858 = vperm.xlu0 %1857, %v1825
      %v1859 = vpop.permute.xlu0 %1858
      %v1861 = vperm.slane %v1814, 3
      %v1862 = vperm.slane %v1815, 3
      %v1863 = vmul.f32 %v1859, %v1861
      %v1864 = vmul.f32 %v1859, %v1862
      %v1865 = vadd.f32 %v1855, %v1863
      %v1866 = vadd.f32 %v1856, %v1864
      %1867 = vset.pattern.permute.xlu0 4
      %1868 = vperm.xlu0 %1867, %v1825
      %v1869 = vpop.permute.xlu0 %1868
      %v1871 = vperm.slane %v1814, 4
      %v1872 = vperm.slane %v1815, 4
      %v1873 = vmul.f32 %v1869, %v1871
      %v1874 = vmul.f32 %v1869, %v1872
      %v1875 = vadd.f32 %v1865, %v1873
      %v1876 = vadd.f32 %v1866, %v1874
      %1877 = vset.pattern.permute.xlu0 5
      %1878 = vperm.xlu0 %1877, %v1825
      %v1879 = vpop.permute.xlu0 %1878
      %v1881 = vperm.slane %v1814, 5
      %v1882 = vperm.slane %v1815, 5
      %v1883 = vmul.f32 %v1879, %v1881
      %v1884 = vmul.f32 %v1879, %v1882
      %v1885 = vadd.f32 %v1875, %v1883
      %v1886 = vadd.f32 %v1876, %v1884
      %1887 = vset.pattern.permute.xlu0 6
      %1888 = vperm.xlu0 %1887, %v1825
      %v1889 = vpop.permute.xlu0 %1888
      %v1891 = vperm.slane %v1814, 6
      %v1892 = vperm.slane %v1815, 6
      %v1893 = vmul.f32 %v1889, %v1891
      %v1894 = vmul.f32 %v1889, %v1892
      %v1895 = vadd.f32 %v1885, %v1893
      %v1896 = vadd.f32 %v1886, %v1894
      %1897 = vset.pattern.permute.xlu0 7
      %1898 = vperm.xlu0 %1897, %v1825
      %v1899 = vpop.permute.xlu0 %1898
      %v1901 = vperm.slane %v1814, 7
      %v1902 = vperm.slane %v1815, 7
      %v1903 = vmul.f32 %v1899, %v1901
      %v1904 = vmul.f32 %v1899, %v1902
      %v1905 = vadd.f32 %v1895, %v1903
      %v1906 = vadd.f32 %v1896, %v1904
      %1907 = vset.pattern.permute.xlu0 8
      %1908 = vperm.xlu0 %1907, %v1825
      %v1909 = vpop.permute.xlu0 %1908
      %v1911 = vperm.slane %v1816, 0
      %v1912 = vperm.slane %v1817, 0
      %v1913 = vmul.f32 %v1909, %v1911
      %v1914 = vmul.f32 %v1909, %v1912
      %v1915 = vadd.f32 %v1905, %v1913
      %v1916 = vadd.f32 %v1906, %v1914
      %1917 = vset.pattern.permute.xlu0 9
      %1918 = vperm.xlu0 %1917, %v1825
      %v1919 = vpop.permute.xlu0 %1918
      %v1921 = vperm.slane %v1816, 1
      %v1922 = vperm.slane %v1817, 1
      %v1923 = vmul.f32 %v1919, %v1921
      %v1924 = vmul.f32 %v1919, %v1922
      %v1925 = vadd.f32 %v1915, %v1923
      %v1926 = vadd.f32 %v1916, %v1924
      %1927 = vset.pattern.permute.xlu0 10
      %1928 = vperm.xlu0 %1927, %v1825
      %v1929 = vpop.permute.xlu0 %1928
      %v1931 = vperm.slane %v1816, 2
      %v1932 = vperm.slane %v1817, 2
      %v1933 = vmul.f32 %v1929, %v1931
      %v1934 = vmul.f32 %v1929, %v1932
      %v1935 = vadd.f32 %v1925, %v1933
      %v1936 = vadd.f32 %v1926, %v1934
      %1937 = vset.pattern.permute.xlu0 11
      %1938 = vperm.xlu0 %1937, %v1825
      %v1939 = vpop.permute.xlu0 %1938
      %v1941 = vperm.slane %v1816, 3
      %v1942 = vperm.slane %v1817, 3
      %v1943 = vmul.f32 %v1939, %v1941
      %v1944 = vmul.f32 %v1939, %v1942
      %v1945 = vadd.f32 %v1935, %v1943
      %v1946 = vadd.f32 %v1936, %v1944
      %1947 = vset.pattern.permute.xlu0 12
      %1948 = vperm.xlu0 %1947, %v1825
      %v1949 = vpop.permute.xlu0 %1948
      %v1951 = vperm.slane %v1816, 4
      %v1952 = vperm.slane %v1817, 4
      %v1953 = vmul.f32 %v1949, %v1951
      %v1954 = vmul.f32 %v1949, %v1952
      %v1955 = vadd.f32 %v1945, %v1953
      %v1956 = vadd.f32 %v1946, %v1954
      %1957 = vset.pattern.permute.xlu0 13
      %1958 = vperm.xlu0 %1957, %v1825
      %v1959 = vpop.permute.xlu0 %1958
      %v1961 = vperm.slane %v1816, 5
      %v1962 = vperm.slane %v1817, 5
      %v1963 = vmul.f32 %v1959, %v1961
      %v1964 = vmul.f32 %v1959, %v1962
      %v1965 = vadd.f32 %v1955, %v1963
      %v1966 = vadd.f32 %v1956, %v1964
      %1967 = vset.pattern.permute.xlu0 14
      %1968 = vperm.xlu0 %1967, %v1825
      %v1969 = vpop.permute.xlu0 %1968
      %v1971 = vperm.slane %v1816, 6
      %v1972 = vperm.slane %v1817, 6
      %v1973 = vmul.f32 %v1969, %v1971
      %v1974 = vmul.f32 %v1969, %v1972
      %v1975 = vadd.f32 %v1965, %v1973
      %v1976 = vadd.f32 %v1966, %v1974
      %1977 = vset.pattern.permute.xlu0 15
      %1978 = vperm.xlu0 %1977, %v1825
      %v1979 = vpop.permute.xlu0 %1978
      %v1981 = vperm.slane %v1816, 7
      %v1982 = vperm.slane %v1817, 7
      %v1983 = vmul.f32 %v1979, %v1981
      %v1984 = vmul.f32 %v1979, %v1982
      %v1985 = vadd.f32 %v1975, %v1983
      %v1986 = vadd.f32 %v1976, %v1984
      %v1987 = vmax.f32 %v1985, 0.0
      %v1988 = vmax.f32 %v1986, 0.0
      %1991 = vrot.lane.b32.xlu0 %v1987, 126
      %v1992 = vpop.permute.xlu0 %1991
      %1993 = vrot.lane.b32.xlu0 %v1988, 126
      %v1994 = vpop.permute.xlu0 %1993
      %v1995 = vsel %vm1130, %v1992, %v1994
      %1997 = vst [vmem:[%s815] sm:$0xf] %v1995
      %v1998 = vld [vmem:[%s18] sm:$0xf]
      %2000 = vset.pattern.permute.xlu0 0
      %2001 = vperm.xlu0 %2000, %v1998
      %v2002 = vpop.permute.xlu0 %2001
      %v2004 = vadd.f32 %v2002, 0.0
      %v2005 = vld [vmem:[%s17] sm:$0xf]
      %2007 = vset.pattern.permute.xlu0 0
      %2008 = vperm.xlu0 %2007, %v2005
      %v2009 = vpop.permute.xlu0 %2008
      %v2011 = vmul.f32 %v2009, %v1831
      %v2012 = vmul.f32 %v2009, %v1832
      %v2013 = vadd.f32 %v2004, %v2011
      %v2014 = vadd.f32 %v2004, %v2012
      %2015 = vset.pattern.permute.xlu0 1
      %2016 = vperm.xlu0 %2015, %v2005
      %v2017 = vpop.permute.xlu0 %2016
      %v2019 = vmul.f32 %v2017, %v1841
      %v2020 = vmul.f32 %v2017, %v1842
      %v2021 = vadd.f32 %v2013, %v2019
      %v2022 = vadd.f32 %v2014, %v2020
      %2023 = vset.pattern.permute.xlu0 2
      %2024 = vperm.xlu0 %2023, %v2005
      %v2025 = vpop.permute.xlu0 %2024
      %v2027 = vmul.f32 %v2025, %v1851
      %v2028 = vmul.f32 %v2025, %v1852
      %v2029 = vadd.f32 %v2021, %v2027
      %v2030 = vadd.f32 %v2022, %v2028
      %2031 = vset.pattern.permute.xlu0 3
      %2032 = vperm.xlu0 %2031, %v2005
      %v2033 = vpop.permute.xlu0 %2032
      %v2035 = vmul.f32 %v2033, %v1861
      %v2036 = vmul.f32 %v2033, %v1862
      %v2037 = vadd.f32 %v2029, %v2035
      %v2038 = vadd.f32 %v2030, %v2036
      %2039 = vset.pattern.permute.xlu0 4
      %2040 = vperm.xlu0 %2039, %v2005
      %v2041 = vpop.permute.xlu0 %2040
      %v2043 = vmul.f32 %v2041, %v1871
      %v2044 = vmul.f32 %v2041, %v1872
      %v2045 = vadd.f32 %v2037, %v2043
      %v2046 = vadd.f32 %v2038, %v2044
      %2047 = vset.pattern.permute.xlu0 5
      %2048 = vperm.xlu0 %2047, %v2005
      %v2049 = vpop.permute.xlu0 %2048
      %v2051 = vmul.f32 %v2049, %v1881
      %v2052 = vmul.f32 %v2049, %v1882
      %v2053 = vadd.f32 %v2045, %v2051
      %v2054 = vadd.f32 %v2046, %v2052
      %2055 = vset.pattern.permute.xlu0 6
      %2056 = vperm.xlu0 %2055, %v2005
      %v2057 = vpop.permute.xlu0 %2056
      %v2059 = vmul.f32 %v2057, %v1891
      %v2060 = vmul.f32 %v2057, %v1892
      %v2061 = vadd.f32 %v2053, %v2059
      %v2062 = vadd.f32 %v2054, %v2060
      %2063 = vset.pattern.permute.xlu0 7
      %2064 = vperm.xlu0 %2063, %v2005
      %v2065 = vpop.permute.xlu0 %2064
      %v2067 = vmul.f32 %v2065, %v1901
      %v2068 = vmul.f32 %v2065, %v1902
      %v2069 = vadd.f32 %v2061, %v2067
      %v2070 = vadd.f32 %v2062, %v2068
      %2071 = vset.pattern.permute.xlu0 8
      %2072 = vperm.xlu0 %2071, %v2005
      %v2073 = vpop.permute.xlu0 %2072
      %v2075 = vmul.f32 %v2073, %v1911
      %v2076 = vmul.f32 %v2073, %v1912
      %v2077 = vadd.f32 %v2069, %v2075
      %v2078 = vadd.f32 %v2070, %v2076
      %2079 = vset.pattern.permute.xlu0 9
      %2080 = vperm.xlu0 %2079, %v2005
      %v2081 = vpop.permute.xlu0 %2080
      %v2083 = vmul.f32 %v2081, %v1921
      %v2084 = vmul.f32 %v2081, %v1922
      %v2085 = vadd.f32 %v2077, %v2083
      %v2086 = vadd.f32 %v2078, %v2084
      %2087 = vset.pattern.permute.xlu0 10
      %2088 = vperm.xlu0 %2087, %v2005
      %v2089 = vpop.permute.xlu0 %2088
      %v2091 = vmul.f32 %v2089, %v1931
      %v2092 = vmul.f32 %v2089, %v1932
      %v2093 = vadd.f32 %v2085, %v2091
      %v2094 = vadd.f32 %v2086, %v2092
      %2095 = vset.pattern.permute.xlu0 11
      %2096 = vperm.xlu0 %2095, %v2005
      %v2097 = vpop.permute.xlu0 %2096
      %v2099 = vmul.f32 %v2097, %v1941
      %v2100 = vmul.f32 %v2097, %v1942
      %v2101 = vadd.f32 %v2093, %v2099
      %v2102 = vadd.f32 %v2094, %v2100
      %2103 = vset.pattern.permute.xlu0 12
      %2104 = vperm.xlu0 %2103, %v2005
      %v2105 = vpop.permute.xlu0 %2104
      %v2107 = vmul.f32 %v2105, %v1951
      %v2108 = vmul.f32 %v2105, %v1952
      %v2109 = vadd.f32 %v2101, %v2107
      %v2110 = vadd.f32 %v2102, %v2108
      %2111 = vset.pattern.permute.xlu0 13
      %2112 = vperm.xlu0 %2111, %v2005
      %v2113 = vpop.permute.xlu0 %2112
      %v2115 = vmul.f32 %v2113, %v1961
      %v2116 = vmul.f32 %v2113, %v1962
      %v2117 = vadd.f32 %v2109, %v2115
      %v2118 = vadd.f32 %v2110, %v2116
      %2119 = vset.pattern.permute.xlu0 14
      %2120 = vperm.xlu0 %2119, %v2005
      %v2121 = vpop.permute.xlu0 %2120
      %v2123 = vmul.f32 %v2121, %v1971
      %v2124 = vmul.f32 %v2121, %v1972
      %v2125 = vadd.f32 %v2117, %v2123
      %v2126 = vadd.f32 %v2118, %v2124
      %2127 = vset.pattern.permute.xlu0 15
      %2128 = vperm.xlu0 %2127, %v2005
      %v2129 = vpop.permute.xlu0 %2128
      %v2131 = vmul.f32 %v2129, %v1981
      %v2132 = vmul.f32 %v2129, %v1982
      %v2133 = vadd.f32 %v2125, %v2131
      %v2134 = vadd.f32 %v2126, %v2132
      %v2135 = vmax.f32 %v2133, 0.0
      %v2136 = vmax.f32 %v2134, 0.0
      %v2139 = vrot.slane %v2136, 4
      %v2140 = vsel %vm823, %v2135, %v2139
      %2142 = vst.msk [vmem:[#allocation4] sm:$0xff] %vm1073, %v2140
      %v2143 = vld [vmem:[#allocation4] sm:$0xff]
      %v2144 = vld [vmem:[%s20] sm:$0xf]
      %2146 = vset.pattern.permute.xlu0 0
      %2147 = vperm.xlu0 %2146, %v2144
      %v2148 = vpop.permute.xlu0 %2147
      %v2150 = vadd.f32 %v2148, 0.0
      %v2151 = vld [vmem:[%s19] sm:$0xf]
      %2153 = vset.pattern.permute.xlu0 0
      %2154 = vperm.xlu0 %2153, %v2151
      %v2155 = vpop.permute.xlu0 %2154
      %v2158 = vperm.slane %v2143, 0
      %v2159 = vperm.slane %v2143, 4
      %v2162 = vperm.slane %v2158, 0
      %v2163 = vperm.slane %v2159, 0
      %v2164 = vmul.f32 %v2155, %v2162
      %v2165 = vmul.f32 %v2155, %v2163
      %v2166 = vadd.f32 %v2150, %v2164
      %v2167 = vadd.f32 %v2150, %v2165
      %2168 = vset.pattern.permute.xlu0 1
      %2169 = vperm.xlu0 %2168, %v2151
      %v2170 = vpop.permute.xlu0 %2169
      %v2172 = vmul.f32 %v2170, %v2162
      %v2173 = vmul.f32 %v2170, %v2163
      %2176 = vrot.lane.b32.xlu0 %v2172, 127
      %v2177 = vpop.permute.xlu0 %2176
      %2178 = vrot.lane.b32.xlu0 %v2173, 127
      %v2179 = vpop.permute.xlu0 %2178
      %v2180 = vsel %vm1112, %v2177, %v2179
      %v2183 = vadd.f32 %v2166, %v2180
      %v2184 = vadd.f32 %v2167, %v2179
      %2185 = vset.pattern.permute.xlu0 2
      %2186 = vperm.xlu0 %2185, %v2151
      %v2187 = vpop.permute.xlu0 %2186
      %v2189 = vmul.f32 %v2187, %v2162
      %v2190 = vmul.f32 %v2187, %v2163
      %2193 = vrot.lane.b32.xlu0 %v2189, 126
      %v2194 = vpop.permute.xlu0 %2193
      %2195 = vrot.lane.b32.xlu0 %v2190, 126
      %v2196 = vpop.permute.xlu0 %2195
      %v2197 = vsel %vm1130, %v2194, %v2196
      %v2200 = vadd.f32 %v2183, %v2197
      %v2201 = vadd.f32 %v2184, %v2196
      %2202 = vset.pattern.permute.xlu0 3
      %2203 = vperm.xlu0 %2202, %v2151
      %v2204 = vpop.permute.xlu0 %2203
      %v2206 = vperm.slane %v2143, 1
      %v2207 = vperm.slane %v2143, 5
      %v2210 = vperm.slane %v2206, 1
      %v2211 = vperm.slane %v2207, 1
      %v2212 = vmul.f32 %v2204, %v2210
      %v2213 = vmul.f32 %v2204, %v2211
      %v2214 = vadd.f32 %v2200, %v2212
      %v2215 = vadd.f32 %v2201, %v2213
      %2216 = vset.pattern.permute.xlu0 4
      %2217 = vperm.xlu0 %2216, %v2151
      %v2218 = vpop.permute.xlu0 %2217
      %v2220 = vmul.f32 %v2218, %v2210
      %v2221 = vmul.f32 %v2218, %v2211
      %2224 = vrot.lane.b32.xlu0 %v2220, 127
      %v2225 = vpop.permute.xlu0 %2224
      %2226 = vrot.lane.b32.xlu0 %v2221, 127
      %v2227 = vpop.permute.xlu0 %2226
      %v2228 = vsel %vm1112, %v2225, %v2227
      %v2231 = vadd.f32 %v2214, %v2228
      %v2232 = vadd.f32 %v2215, %v2227
      %2233 = vset.pattern.permute.xlu0 5
      %2234 = vperm.xlu0 %2233, %v2151
      %v2235 = vpop.permute.xlu0 %2234
      %v2237 = vmul.f32 %v2235, %v2210
      %v2238 = vmul.f32 %v2235, %v2211
      %2241 = vrot.lane.b32.xlu0 %v2237, 126
      %v2242 = vpop.permute.xlu0 %2241
      %2243 = vrot.lane.b32.xlu0 %v2238, 126
      %v2244 = vpop.permute.xlu0 %2243
      %v2245 = vsel %vm1130, %v2242, %v2244
      %v2248 = vadd.f32 %v2231, %v2245
      %v2249 = vadd.f32 %v2232, %v2244
      %2250 = vset.pattern.permute.xlu0 6
      %2251 = vperm.xlu0 %2250, %v2151
      %v2252 = vpop.permute.xlu0 %2251
      %v2254 = vperm.slane %v2143, 2
      %v2255 = vperm.slane %v2143, 6
      %v2258 = vperm.slane %v2254, 2
      %v2259 = vperm.slane %v2255, 2
      %v2260 = vmul.f32 %v2252, %v2258
      %v2261 = vmul.f32 %v2252, %v2259
      %v2262 = vadd.f32 %v2248, %v2260
      %v2263 = vadd.f32 %v2249, %v2261
      %2264 = vset.pattern.permute.xlu0 7
      %2265 = vperm.xlu0 %2264, %v2151
      %v2266 = vpop.permute.xlu0 %2265
      %v2268 = vmul.f32 %v2266, %v2258
      %v2269 = vmul.f32 %v2266, %v2259
      %2272 = vrot.lane.b32.xlu0 %v2268, 127
      %v2273 = vpop.permute.xlu0 %2272
      %2274 = vrot.lane.b32.xlu0 %v2269, 127
      %v2275 = vpop.permute.xlu0 %2274
      %v2276 = vsel %vm1112, %v2273, %v2275
      %v2279 = vadd.f32 %v2262, %v2276
      %v2280 = vadd.f32 %v2263, %v2275
      %2281 = vset.pattern.permute.xlu0 8
      %2282 = vperm.xlu0 %2281, %v2151
      %v2283 = vpop.permute.xlu0 %2282
      %v2285 = vmul.f32 %v2283, %v2258
      %v2286 = vmul.f32 %v2283, %v2259
      %2289 = vrot.lane.b32.xlu0 %v2285, 126
      %v2290 = vpop.permute.xlu0 %2289
      %2291 = vrot.lane.b32.xlu0 %v2286, 126
      %v2292 = vpop.permute.xlu0 %2291
      %v2293 = vsel %vm1130, %v2290, %v2292
      %v2296 = vadd.f32 %v2279, %v2293
      %v2297 = vadd.f32 %v2280, %v2292
      %2298 = vset.pattern.permute.xlu0 9
      %2299 = vperm.xlu0 %2298, %v2151
      %v2300 = vpop.permute.xlu0 %2299
      %v2302 = vperm.slane %v2143, 3
      %v2303 = vperm.slane %v2143, 7
      %v2306 = vperm.slane %v2302, 3
      %v2307 = vperm.slane %v2303, 3
      %v2308 = vmul.f32 %v2300, %v2306
      %v2309 = vmul.f32 %v2300, %v2307
      %v2310 = vadd.f32 %v2296, %v2308
      %v2311 = vadd.f32 %v2297, %v2309
      %2312 = vset.pattern.permute.xlu0 10
      %2313 = vperm.xlu0 %2312, %v2151
      %v2314 = vpop.permute.xlu0 %2313
      %v2316 = vmul.f32 %v2314, %v2306
      %v2317 = vmul.f32 %v2314, %v2307
      %2320 = vrot.lane.b32.xlu0 %v2316, 127
      %v2321 = vpop.permute.xlu0 %2320
      %2322 = vrot.lane.b32.xlu0 %v2317, 127
      %v2323 = vpop.permute.xlu0 %2322
      %v2324 = vsel %vm1112, %v2321, %v2323
      %v2327 = vadd.f32 %v2310, %v2324
      %v2328 = vadd.f32 %v2311, %v2323
      %2329 = vset.pattern.permute.xlu0 11
      %2330 = vperm.xlu0 %2329, %v2151
      %v2331 = vpop.permute.xlu0 %2330
      %v2333 = vmul.f32 %v2331, %v2306
      %v2334 = vmul.f32 %v2331, %v2307
      %2337 = vrot.lane.b32.xlu0 %v2333, 126
      %v2338 = vpop.permute.xlu0 %2337
      %2339 = vrot.lane.b32.xlu0 %v2334, 126
      %v2340 = vpop.permute.xlu0 %2339
      %v2341 = vsel %vm1130, %v2338, %v2340
      %v2344 = vadd.f32 %v2327, %v2341
      %v2345 = vadd.f32 %v2328, %v2340
      %v2346 = vmax.f32 %v2344, 0.0
      %v2347 = vmax.f32 %v2345, 0.0
      %2350 = vrot.lane.b32.xlu0 %v2346, 127
      %v2351 = vpop.permute.xlu0 %2350
      %2352 = vrot.lane.b32.xlu0 %v2347, 127
      %v2353 = vpop.permute.xlu0 %2352
      %v2354 = vsel %vm1112, %v2351, %v2353
      %2356 = vst [vmem:[%s815 + $0x4] sm:$0xf] %v2354
      %v2357 = vld [vmem:[%s22] sm:$0xf]
      %2359 = vset.pattern.permute.xlu0 0
      %2360 = vperm.xlu0 %2359, %v2357
      %v2361 = vpop.permute.xlu0 %2360
      %v2363 = vadd.f32 %v2361, 0.0
      %v2364 = vld [vmem:[%s21] sm:$0xf]
      %2366 = vset.pattern.permute.xlu0 0
      %2367 = vperm.xlu0 %2366, %v2364
      %v2368 = vpop.permute.xlu0 %2367
      %v2370 = vmul.f32 %v2368, %v1831
      %v2371 = vmul.f32 %v2368, %v1832
      %v2372 = vadd.f32 %v2363, %v2370
      %v2373 = vadd.f32 %v2363, %v2371
      %2374 = vset.pattern.permute.xlu0 1
      %2375 = vperm.xlu0 %2374, %v2364
      %v2376 = vpop.permute.xlu0 %2375
      %v2378 = vmul.f32 %v2376, %v1841
      %v2379 = vmul.f32 %v2376, %v1842
      %v2380 = vadd.f32 %v2372, %v2378
      %v2381 = vadd.f32 %v2373, %v2379
      %2382 = vset.pattern.permute.xlu0 2
      %2383 = vperm.xlu0 %2382, %v2364
      %v2384 = vpop.permute.xlu0 %2383
      %v2386 = vmul.f32 %v2384, %v1851
      %v2387 = vmul.f32 %v2384, %v1852
      %v2388 = vadd.f32 %v2380, %v2386
      %v2389 = vadd.f32 %v2381, %v2387
      %2390 = vset.pattern.permute.xlu0 3
      %2391 = vperm.xlu0 %2390, %v2364
      %v2392 = vpop.permute.xlu0 %2391
      %v2394 = vmul.f32 %v2392, %v1861
      %v2395 = vmul.f32 %v2392, %v1862
      %v2396 = vadd.f32 %v2388, %v2394
      %v2397 = vadd.f32 %v2389, %v2395
      %2398 = vset.pattern.permute.xlu0 4
      %2399 = vperm.xlu0 %2398, %v2364
      %v2400 = vpop.permute.xlu0 %2399
      %v2402 = vmul.f32 %v2400, %v1871
      %v2403 = vmul.f32 %v2400, %v1872
      %v2404 = vadd.f32 %v2396, %v2402
      %v2405 = vadd.f32 %v2397, %v2403
      %2406 = vset.pattern.permute.xlu0 5
      %2407 = vperm.xlu0 %2406, %v2364
      %v2408 = vpop.permute.xlu0 %2407
      %v2410 = vmul.f32 %v2408, %v1881
      %v2411 = vmul.f32 %v2408, %v1882
      %v2412 = vadd.f32 %v2404, %v2410
      %v2413 = vadd.f32 %v2405, %v2411
      %2414 = vset.pattern.permute.xlu0 6
      %2415 = vperm.xlu0 %2414, %v2364
      %v2416 = vpop.permute.xlu0 %2415
      %v2418 = vmul.f32 %v2416, %v1891
      %v2419 = vmul.f32 %v2416, %v1892
      %v2420 = vadd.f32 %v2412, %v2418
      %v2421 = vadd.f32 %v2413, %v2419
      %2422 = vset.pattern.permute.xlu0 7
      %2423 = vperm.xlu0 %2422, %v2364
      %v2424 = vpop.permute.xlu0 %2423
      %v2426 = vmul.f32 %v2424, %v1901
      %v2427 = vmul.f32 %v2424, %v1902
      %v2428 = vadd.f32 %v2420, %v2426
      %v2429 = vadd.f32 %v2421, %v2427
      %2430 = vset.pattern.permute.xlu0 8
      %2431 = vperm.xlu0 %2430, %v2364
      %v2432 = vpop.permute.xlu0 %2431
      %v2434 = vmul.f32 %v2432, %v1911
      %v2435 = vmul.f32 %v2432, %v1912
      %v2436 = vadd.f32 %v2428, %v2434
      %v2437 = vadd.f32 %v2429, %v2435
      %2438 = vset.pattern.permute.xlu0 9
      %2439 = vperm.xlu0 %2438, %v2364
      %v2440 = vpop.permute.xlu0 %2439
      %v2442 = vmul.f32 %v2440, %v1921
      %v2443 = vmul.f32 %v2440, %v1922
      %v2444 = vadd.f32 %v2436, %v2442
      %v2445 = vadd.f32 %v2437, %v2443
      %2446 = vset.pattern.permute.xlu0 10
      %2447 = vperm.xlu0 %2446, %v2364
      %v2448 = vpop.permute.xlu0 %2447
      %v2450 = vmul.f32 %v2448, %v1931
      %v2451 = vmul.f32 %v2448, %v1932
      %v2452 = vadd.f32 %v2444, %v2450
      %v2453 = vadd.f32 %v2445, %v2451
      %2454 = vset.pattern.permute.xlu0 11
      %2455 = vperm.xlu0 %2454, %v2364
      %v2456 = vpop.permute.xlu0 %2455
      %v2458 = vmul.f32 %v2456, %v1941
      %v2459 = vmul.f32 %v2456, %v1942
      %v2460 = vadd.f32 %v2452, %v2458
      %v2461 = vadd.f32 %v2453, %v2459
      %2462 = vset.pattern.permute.xlu0 12
      %2463 = vperm.xlu0 %2462, %v2364
      %v2464 = vpop.permute.xlu0 %2463
      %v2466 = vmul.f32 %v2464, %v1951
      %v2467 = vmul.f32 %v2464, %v1952
      %v2468 = vadd.f32 %v2460, %v2466
      %v2469 = vadd.f32 %v2461, %v2467
      %2470 = vset.pattern.permute.xlu0 13
      %2471 = vperm.xlu0 %2470, %v2364
      %v2472 = vpop.permute.xlu0 %2471
      %v2474 = vmul.f32 %v2472, %v1961
      %v2475 = vmul.f32 %v2472, %v1962
      %v2476 = vadd.f32 %v2468, %v2474
      %v2477 = vadd.f32 %v2469, %v2475
      %2478 = vset.pattern.permute.xlu0 14
      %2479 = vperm.xlu0 %2478, %v2364
      %v2480 = vpop.permute.xlu0 %2479
      %v2482 = vmul.f32 %v2480, %v1971
      %v2483 = vmul.f32 %v2480, %v1972
      %v2484 = vadd.f32 %v2476, %v2482
      %v2485 = vadd.f32 %v2477, %v2483
      %2486 = vset.pattern.permute.xlu0 15
      %2487 = vperm.xlu0 %2486, %v2364
      %v2488 = vpop.permute.xlu0 %2487
      %v2490 = vmul.f32 %v2488, %v1981
      %v2491 = vmul.f32 %v2488, %v1982
      %v2492 = vadd.f32 %v2484, %v2490
      %v2493 = vadd.f32 %v2485, %v2491
      %v2494 = vmax.f32 %v2492, 0.0
      %v2495 = vmax.f32 %v2493, 0.0
      %v2498 = vrot.slane %v2495, 4
      %v2499 = vsel %vm823, %v2494, %v2498
      %2501 = vst.msk [vmem:[#allocation4] sm:$0xff] %vm1073, %v2499
      %v2502 = vld [vmem:[#allocation4] sm:$0xff]
      %v2503 = vld [vmem:[%s24] sm:$0xf]
      %2505 = vset.pattern.permute.xlu0 0
      %2506 = vperm.xlu0 %2505, %v2503
      %v2507 = vpop.permute.xlu0 %2506
      %v2509 = vadd.f32 %v2507, 0.0
      %v2510 = vld [vmem:[%s23] sm:$0xf]
      %2512 = vset.pattern.permute.xlu0 0
      %2513 = vperm.xlu0 %2512, %v2510
      %v2514 = vpop.permute.xlu0 %2513
      %v2516 = vperm.slane %v2502, 0
      %v2517 = vmul.f32 %v2514, %v2516
      %v2518 = vadd.f32 %v2509, %v2517
      %2519 = vset.pattern.permute.xlu0 1
      %2520 = vperm.xlu0 %2519, %v2510
      %v2521 = vpop.permute.xlu0 %2520
      %v2524 = vperm.slane %v2502, 0
      %v2525 = vperm.slane %v2502, 4
      %v2528 = vperm.slane %v2524, 0
      %v2529 = vperm.slane %v2525, 0
      %v2530 = vmul.f32 %v2521, %v2528
      %v2531 = vmul.f32 %v2521, %v2529
      %2534 = vrot.lane.b32.xlu0 %v2530, 127
      %v2535 = vpop.permute.xlu0 %2534
      %2536 = vrot.lane.b32.xlu0 %v2531, 127
      %v2537 = vpop.permute.xlu0 %2536
      %v2538 = vsel %vm1112, %v2535, %v2537
      %v2540 = vadd.f32 %v2518, %v2538
      %2541 = vset.pattern.permute.xlu0 2
      %2542 = vperm.xlu0 %2541, %v2510
      %v2543 = vpop.permute.xlu0 %2542
      %v2545 = vmul.f32 %v2543, %v2528
      %v2546 = vmul.f32 %v2543, %v2529
      %2549 = vrot.lane.b32.xlu0 %v2545, 126
      %v2550 = vpop.permute.xlu0 %2549
      %2551 = vrot.lane.b32.xlu0 %v2546, 126
      %v2552 = vpop.permute.xlu0 %2551
      %v2553 = vsel %vm1130, %v2550, %v2552
      %v2555 = vadd.f32 %v2540, %v2553
      %2556 = vset.pattern.permute.xlu0 3
      %2557 = vperm.xlu0 %2556, %v2510
      %v2558 = vpop.permute.xlu0 %2557
      %v2560 = vmul.f32 %v2558, %v2528
      %v2561 = vmul.f32 %v2558, %v2529
      %2564 = vrot.lane.b32.xlu0 %v2560, 125
      %v2565 = vpop.permute.xlu0 %2564
      %2566 = vrot.lane.b32.xlu0 %v2561, 125
      %v2567 = vpop.permute.xlu0 %2566
      %v2568 = vsel %vm1444, %v2565, %v2567
      %v2570 = vadd.f32 %v2555, %v2568
      %2571 = vset.pattern.permute.xlu0 4
      %2572 = vperm.xlu0 %2571, %v2510
      %v2573 = vpop.permute.xlu0 %2572
      %v2575 = vmul.f32 %v2573, %v2528
      %v2576 = vmul.f32 %v2573, %v2529
      %2579 = vrot.lane.b32.xlu0 %v2575, 124
      %v2580 = vpop.permute.xlu0 %2579
      %2581 = vrot.lane.b32.xlu0 %v2576, 124
      %v2582 = vpop.permute.xlu0 %2581
      %v2583 = vsel %vm1460, %v2580, %v2582
      %v2585 = vadd.f32 %v2570, %v2583
      %2586 = vset.pattern.permute.xlu0 5
      %2587 = vperm.xlu0 %2586, %v2510
      %v2588 = vpop.permute.xlu0 %2587
      %v2590 = vperm.slane %v2502, 1
      %v2591 = vmul.f32 %v2588, %v2590
      %v2592 = vadd.f32 %v2585, %v2591
      %2593 = vset.pattern.permute.xlu0 6
      %2594 = vperm.xlu0 %2593, %v2510
      %v2595 = vpop.permute.xlu0 %2594
      %v2597 = vperm.slane %v2502, 1
      %v2598 = vperm.slane %v2502, 5
      %v2601 = vperm.slane %v2597, 1
      %v2602 = vperm.slane %v2598, 1
      %v2603 = vmul.f32 %v2595, %v2601
      %v2604 = vmul.f32 %v2595, %v2602
      %2607 = vrot.lane.b32.xlu0 %v2603, 127
      %v2608 = vpop.permute.xlu0 %2607
      %2609 = vrot.lane.b32.xlu0 %v2604, 127
      %v2610 = vpop.permute.xlu0 %2609
      %v2611 = vsel %vm1112, %v2608, %v2610
      %v2613 = vadd.f32 %v2592, %v2611
      %2614 = vset.pattern.permute.xlu0 7
      %2615 = vperm.xlu0 %2614, %v2510
      %v2616 = vpop.permute.xlu0 %2615
      %v2618 = vmul.f32 %v2616, %v2601
      %v2619 = vmul.f32 %v2616, %v2602
      %2622 = vrot.lane.b32.xlu0 %v2618, 126
      %v2623 = vpop.permute.xlu0 %2622
      %2624 = vrot.lane.b32.xlu0 %v2619, 126
      %v2625 = vpop.permute.xlu0 %2624
      %v2626 = vsel %vm1130, %v2623, %v2625
      %v2628 = vadd.f32 %v2613, %v2626
      %2629 = vset.pattern.permute.xlu0 8
      %2630 = vperm.xlu0 %2629, %v2510
      %v2631 = vpop.permute.xlu0 %2630
      %v2633 = vmul.f32 %v2631, %v2601
      %v2634 = vmul.f32 %v2631, %v2602
      %2637 = vrot.lane.b32.xlu0 %v2633, 125
      %v2638 = vpop.permute.xlu0 %2637
      %2639 = vrot.lane.b32.xlu0 %v2634, 125
      %v2640 = vpop.permute.xlu0 %2639
      %v2641 = vsel %vm1444, %v2638, %v2640
      %v2643 = vadd.f32 %v2628, %v2641
      %2644 = vset.pattern.permute.xlu0 9
      %2645 = vperm.xlu0 %2644, %v2510
      %v2646 = vpop.permute.xlu0 %2645
      %v2648 = vmul.f32 %v2646, %v2601
      %v2649 = vmul.f32 %v2646, %v2602
      %2652 = vrot.lane.b32.xlu0 %v2648, 124
      %v2653 = vpop.permute.xlu0 %2652
      %2654 = vrot.lane.b32.xlu0 %v2649, 124
      %v2655 = vpop.permute.xlu0 %2654
      %v2656 = vsel %vm1460, %v2653, %v2655
      %v2658 = vadd.f32 %v2643, %v2656
      %2659 = vset.pattern.permute.xlu0 10
      %2660 = vperm.xlu0 %2659, %v2510
      %v2661 = vpop.permute.xlu0 %2660
      %v2663 = vperm.slane %v2502, 2
      %v2664 = vmul.f32 %v2661, %v2663
      %v2665 = vadd.f32 %v2658, %v2664
      %2666 = vset.pattern.permute.xlu0 11
      %2667 = vperm.xlu0 %2666, %v2510
      %v2668 = vpop.permute.xlu0 %2667
      %v2670 = vperm.slane %v2502, 2
      %v2671 = vperm.slane %v2502, 6
      %v2674 = vperm.slane %v2670, 2
      %v2675 = vperm.slane %v2671, 2
      %v2676 = vmul.f32 %v2668, %v2674
      %v2677 = vmul.f32 %v2668, %v2675
      %2680 = vrot.lane.b32.xlu0 %v2676, 127
      %v2681 = vpop.permute.xlu0 %2680
      %2682 = vrot.lane.b32.xlu0 %v2677, 127
      %v2683 = vpop.permute.xlu0 %2682
      %v2684 = vsel %vm1112, %v2681, %v2683
      %v2686 = vadd.f32 %v2665, %v2684
      %2687 = vset.pattern.permute.xlu0 12
      %2688 = vperm.xlu0 %2687, %v2510
      %v2689 = vpop.permute.xlu0 %2688
      %v2691 = vmul.f32 %v2689, %v2674
      %v2692 = vmul.f32 %v2689, %v2675
      %2695 = vrot.lane.b32.xlu0 %v2691, 126
      %v2696 = vpop.permute.xlu0 %2695
      %2697 = vrot.lane.b32.xlu0 %v2692, 126
      %v2698 = vpop.permute.xlu0 %2697
      %v2699 = vsel %vm1130, %v2696, %v2698
      %v2701 = vadd.f32 %v2686, %v2699
      %2702 = vset.pattern.permute.xlu0 13
      %2703 = vperm.xlu0 %2702, %v2510
      %v2704 = vpop.permute.xlu0 %2703
      %v2706 = vmul.f32 %v2704, %v2674
      %v2707 = vmul.f32 %v2704, %v2675
      %2710 = vrot.lane.b32.xlu0 %v2706, 125
      %v2711 = vpop.permute.xlu0 %2710
      %2712 = vrot.lane.b32.xlu0 %v2707, 125
      %v2713 = vpop.permute.xlu0 %2712
      %v2714 = vsel %vm1444, %v2711, %v2713
      %v2716 = vadd.f32 %v2701, %v2714
      %2717 = vset.pattern.permute.xlu0 14
      %2718 = vperm.xlu0 %2717, %v2510
      %v2719 = vpop.permute.xlu0 %2718
      %v2721 = vmul.f32 %v2719, %v2674
      %v2722 = vmul.f32 %v2719, %v2675
      %2725 = vrot.lane.b32.xlu0 %v2721, 124
      %v2726 = vpop.permute.xlu0 %2725
      %2727 = vrot.lane.b32.xlu0 %v2722, 124
      %v2728 = vpop.permute.xlu0 %2727
      %v2729 = vsel %vm1460, %v2726, %v2728
      %v2731 = vadd.f32 %v2716, %v2729
      %2732 = vset.pattern.permute.xlu0 15
      %2733 = vperm.xlu0 %2732, %v2510
      %v2734 = vpop.permute.xlu0 %2733
      %v2736 = vperm.slane %v2502, 3
      %v2737 = vmul.f32 %v2734, %v2736
      %v2738 = vadd.f32 %v2731, %v2737
      %2739 = vset.pattern.permute.xlu0 16
      %2740 = vperm.xlu0 %2739, %v2510
      %v2741 = vpop.permute.xlu0 %2740
      %v2743 = vperm.slane %v2502, 3
      %v2744 = vperm.slane %v2502, 7
      %v2747 = vperm.slane %v2743, 3
      %v2748 = vperm.slane %v2744, 3
      %v2749 = vmul.f32 %v2741, %v2747
      %v2750 = vmul.f32 %v2741, %v2748
      %2753 = vrot.lane.b32.xlu0 %v2749, 127
      %v2754 = vpop.permute.xlu0 %2753
      %2755 = vrot.lane.b32.xlu0 %v2750, 127
      %v2756 = vpop.permute.xlu0 %2755
      %v2757 = vsel %vm1112, %v2754, %v2756
      %v2759 = vadd.f32 %v2738, %v2757
      %2760 = vset.pattern.permute.xlu0 17
      %2761 = vperm.xlu0 %2760, %v2510
      %v2762 = vpop.permute.xlu0 %2761
      %v2764 = vmul.f32 %v2762, %v2747
      %v2765 = vmul.f32 %v2762, %v2748
      %2768 = vrot.lane.b32.xlu0 %v2764, 126
      %v2769 = vpop.permute.xlu0 %2768
      %2770 = vrot.lane.b32.xlu0 %v2765, 126
      %v2771 = vpop.permute.xlu0 %2770
      %v2772 = vsel %vm1130, %v2769, %v2771
      %v2774 = vadd.f32 %v2759, %v2772
      %2775 = vset.pattern.permute.xlu0 18
      %2776 = vperm.xlu0 %2775, %v2510
      %v2777 = vpop.permute.xlu0 %2776
      %v2779 = vmul.f32 %v2777, %v2747
      %v2780 = vmul.f32 %v2777, %v2748
      %2783 = vrot.lane.b32.xlu0 %v2779, 125
      %v2784 = vpop.permute.xlu0 %2783
      %2785 = vrot.lane.b32.xlu0 %v2780, 125
      %v2786 = vpop.permute.xlu0 %2785
      %v2787 = vsel %vm1444, %v2784, %v2786
      %v2789 = vadd.f32 %v2774, %v2787
      %2790 = vset.pattern.permute.xlu0 19
      %2791 = vperm.xlu0 %2790, %v2510
      %v2792 = vpop.permute.xlu0 %2791
      %v2794 = vmul.f32 %v2792, %v2747
      %v2795 = vmul.f32 %v2792, %v2748
      %2798 = vrot.lane.b32.xlu0 %v2794, 124
      %v2799 = vpop.permute.xlu0 %2798
      %2800 = vrot.lane.b32.xlu0 %v2795, 124
      %v2801 = vpop.permute.xlu0 %2800
      %v2802 = vsel %vm1460, %v2799, %v2801
      %v2804 = vadd.f32 %v2789, %v2802
      %v2805 = vmax.f32 %v2804, 0.0
      %2806 = vst [vmem:[%s815 + $0x8] sm:$0xf] %v2805
      %2811 = vrot.lane.b32.xlu0 %v1814, 127
      %v2812 = vpop.permute.xlu0 %2811
      %2813 = vrot.lane.b32.xlu0 %v1815, 127
      %v2814 = vpop.permute.xlu0 %2813
      %2815 = vrot.lane.b32.xlu0 %v1816, 127
      %v2816 = vpop.permute.xlu0 %2815
      %2817 = vrot.lane.b32.xlu0 %v1817, 127
      %v2818 = vpop.permute.xlu0 %2817
      %v2819 = vsel %vm1112, %v2812, %v2814
      %v2820 = vsel %vm1112, %v2816, %v2818
      %v2825 = vadd.f32 %v1814, %v2819
      %v2826 = vadd.f32 %v1815, %v2814
      %v2827 = vadd.f32 %v1816, %v2820
      %v2828 = vadd.f32 %v1817, %v2818
      %2829 = vrot.lane.b32.xlu0 %v1814, 126
      %v2830 = vpop.permute.xlu0 %2829
      %2831 = vrot.lane.b32.xlu0 %v1815, 126
      %v2832 = vpop.permute.xlu0 %2831
      %2833 = vrot.lane.b32.xlu0 %v1816, 126
      %v2834 = vpop.permute.xlu0 %2833
      %2835 = vrot.lane.b32.xlu0 %v1817, 126
      %v2836 = vpop.permute.xlu0 %2835
      %v2837 = vsel %vm1130, %v2830, %v2832
      %v2838 = vsel %vm1130, %v2834, %v2836
      %v2843 = vadd.f32 %v2825, %v2837
      %v2844 = vadd.f32 %v2826, %v2832
      %v2845 = vadd.f32 %v2827, %v2838
      %v2846 = vadd.f32 %v2828, %v2836
      %v2847 = vld [vmem:[%s26] sm:$0xf]
      %2849 = vset.pattern.permute.xlu0 0
      %2850 = vperm.xlu0 %2849, %v2847
      %v2851 = vpop.permute.xlu0 %2850
      %v2853 = vadd.f32 %v2851, 0.0
      %v2854 = vld [vmem:[%s25] sm:$0xf]
      %2856 = vset.pattern.permute.xlu0 0
      %2857 = vperm.xlu0 %2856, %v2854
      %v2858 = vpop.permute.xlu0 %2857
      %v2860 = vperm.slane %v2843, 0
      %v2861 = vperm.slane %v2844, 0
      %v2862 = vmul.f32 %v2858, %v2860
      %v2863 = vmul.f32 %v2858, %v2861
      %v2864 = vadd.f32 %v2853, %v2862
      %v2865 = vadd.f32 %v2853, %v2863
      %2866 = vset.pattern.permute.xlu0 1
      %2867 = vperm.xlu0 %2866, %v2854
      %v2868 = vpop.permute.xlu0 %2867
      %v2870 = vperm.slane %v2843, 1
      %v2871 = vperm.slane %v2844, 1
      %v2872 = vmul.f32 %v2868, %v2870
      %v2873 = vmul.f32 %v2868, %v2871
      %v2874 = vadd.f32 %v2864, %v2872
      %v2875 = vadd.f32 %v2865, %v2873
      %2876 = vset.pattern.permute.xlu0 2
      %2877 = vperm.xlu0 %2876, %v2854
      %v2878 = vpop.permute.xlu0 %2877
      %v2880 = vperm.slane %v2843, 2
      %v2881 = vperm.slane %v2844, 2
      %v2882 = vmul.f32 %v2878, %v2880
      %v2883 = vmul.f32 %v2878, %v2881
      %v2884 = vadd.f32 %v2874, %v2882
      %v2885 = vadd.f32 %v2875, %v2883
      %2886 = vset.pattern.permute.xlu0 3
      %2887 = vperm.xlu0 %2886, %v2854
      %v2888 = vpop.permute.xlu0 %2887
      %v2890 = vperm.slane %v2843, 3
      %v2891 = vperm.slane %v2844, 3
      %v2892 = vmul.f32 %v2888, %v2890
      %v2893 = vmul.f32 %v2888, %v2891
      %v2894 = vadd.f32 %v2884, %v2892
      %v2895 = vadd.f32 %v2885, %v2893
      %2896 = vset.pattern.permute.xlu0 4
      %2897 = vperm.xlu0 %2896, %v2854
      %v2898 = vpop.permute.xlu0 %2897
      %v2900 = vperm.slane %v2843, 4
      %v2901 = vperm.slane %v2844, 4
      %v2902 = vmul.f32 %v2898, %v2900
      %v2903 = vmul.f32 %v2898, %v2901
      %v2904 = vadd.f32 %v2894, %v2902
      %v2905 = vadd.f32 %v2895, %v2903
      %2906 = vset.pattern.permute.xlu0 5
      %2907 = vperm.xlu0 %2906, %v2854
      %v2908 = vpop.permute.xlu0 %2907
      %v2910 = vperm.slane %v2843, 5
      %v2911 = vperm.slane %v2844, 5
      %v2912 = vmul.f32 %v2908, %v2910
      %v2913 = vmul.f32 %v2908, %v2911
      %v2914 = vadd.f32 %v2904, %v2912
      %v2915 = vadd.f32 %v2905, %v2913
      %2916 = vset.pattern.permute.xlu0 6
      %2917 = vperm.xlu0 %2916, %v2854
      %v2918 = vpop.permute.xlu0 %2917
      %v2920 = vperm.slane %v2843, 6
      %v2921 = vperm.slane %v2844, 6
      %v2922 = vmul.f32 %v2918, %v2920
      %v2923 = vmul.f32 %v2918, %v2921
      %v2924 = vadd.f32 %v2914, %v2922
      %v2925 = vadd.f32 %v2915, %v2923
      %2926 = vset.pattern.permute.xlu0 7
      %2927 = vperm.xlu0 %2926, %v2854
      %v2928 = vpop.permute.xlu0 %2927
      %v2930 = vperm.slane %v2843, 7
      %v2931 = vperm.slane %v2844, 7
      %v2932 = vmul.f32 %v2928, %v2930
      %v2933 = vmul.f32 %v2928, %v2931
      %v2934 = vadd.f32 %v2924, %v2932
      %v2935 = vadd.f32 %v2925, %v2933
      %2936 = vset.pattern.permute.xlu0 8
      %2937 = vperm.xlu0 %2936, %v2854
      %v2938 = vpop.permute.xlu0 %2937
      %v2940 = vperm.slane %v2845, 0
      %v2941 = vperm.slane %v2846, 0
      %v2942 = vmul.f32 %v2938, %v2940
      %v2943 = vmul.f32 %v2938, %v2941
      %v2944 = vadd.f32 %v2934, %v2942
      %v2945 = vadd.f32 %v2935, %v2943
      %2946 = vset.pattern.permute.xlu0 9
      %2947 = vperm.xlu0 %2946, %v2854
      %v2948 = vpop.permute.xlu0 %2947
      %v2950 = vperm.slane %v2845, 1
      %v2951 = vperm.slane %v2846, 1
      %v2952 = vmul.f32 %v2948, %v2950
      %v2953 = vmul.f32 %v2948, %v2951
      %v2954 = vadd.f32 %v2944, %v2952
      %v2955 = vadd.f32 %v2945, %v2953
      %2956 = vset.pattern.permute.xlu0 10
      %2957 = vperm.xlu0 %2956, %v2854
      %v2958 = vpop.permute.xlu0 %2957
      %v2960 = vperm.slane %v2845, 2
      %v2961 = vperm.slane %v2846, 2
      %v2962 = vmul.f32 %v2958, %v2960
      %v2963 = vmul.f32 %v2958, %v2961
      %v2964 = vadd.f32 %v2954, %v2962
      %v2965 = vadd.f32 %v2955, %v2963
      %2966 = vset.pattern.permute.xlu0 11
      %2967 = vperm.xlu0 %2966, %v2854
      %v2968 = vpop.permute.xlu0 %2967
      %v2970 = vperm.slane %v2845, 3
      %v2971 = vperm.slane %v2846, 3
      %v2972 = vmul.f32 %v2968, %v2970
      %v2973 = vmul.f32 %v2968, %v2971
      %v2974 = vadd.f32 %v2964, %v2972
      %v2975 = vadd.f32 %v2965, %v2973
      %2976 = vset.pattern.permute.xlu0 12
      %2977 = vperm.xlu0 %2976, %v2854
      %v2978 = vpop.permute.xlu0 %2977
      %v2980 = vperm.slane %v2845, 4
      %v2981 = vperm.slane %v2846, 4
      %v2982 = vmul.f32 %v2978, %v2980
      %v2983 = vmul.f32 %v2978, %v2981
      %v2984 = vadd.f32 %v2974, %v2982
      %v2985 = vadd.f32 %v2975, %v2983
      %2986 = vset.pattern.permute.xlu0 13
      %2987 = vperm.xlu0 %2986, %v2854
      %v2988 = vpop.permute.xlu0 %2987
      %v2990 = vperm.slane %v2845, 5
      %v2991 = vperm.slane %v2846, 5
      %v2992 = vmul.f32 %v2988, %v2990
      %v2993 = vmul.f32 %v2988, %v2991
      %v2994 = vadd.f32 %v2984, %v2992
      %v2995 = vadd.f32 %v2985, %v2993
      %2996 = vset.pattern.permute.xlu0 14
      %2997 = vperm.xlu0 %2996, %v2854
      %v2998 = vpop.permute.xlu0 %2997
      %v3000 = vperm.slane %v2845, 6
      %v3001 = vperm.slane %v2846, 6
      %v3002 = vmul.f32 %v2998, %v3000
      %v3003 = vmul.f32 %v2998, %v3001
      %v3004 = vadd.f32 %v2994, %v3002
      %v3005 = vadd.f32 %v2995, %v3003
      %3006 = vset.pattern.permute.xlu0 15
      %3007 = vperm.xlu0 %3006, %v2854
      %v3008 = vpop.permute.xlu0 %3007
      %v3010 = vperm.slane %v2845, 7
      %v3011 = vperm.slane %v2846, 7
      %v3012 = vmul.f32 %v3008, %v3010
      %v3013 = vmul.f32 %v3008, %v3011
      %v3014 = vadd.f32 %v3004, %v3012
      %v3015 = vadd.f32 %v3005, %v3013
      %v3016 = vmax.f32 %v3014, 0.0
      %v3017 = vmax.f32 %v3015, 0.0
      %3020 = vrot.lane.b32.xlu0 %v3016, 127
      %v3021 = vpop.permute.xlu0 %3020
      %3022 = vrot.lane.b32.xlu0 %v3017, 127
      %v3023 = vpop.permute.xlu0 %3022
      %v3024 = vsel %vm1112, %v3021, %v3023
      %3026 = vst [vmem:[%s815 + $0xc] sm:$0xf] %v3024
      %p3027 = scmp.lt.s32.totalorder %s38, 1
      %s3028 = scalar_select %p3027, %s38, 1
      %s3029 = smul.addr %s3028, 2
      %s3030 = smul.addr %s3029, 8
      %s3031 = scalar_lea.vmem %s27, %s3030
      // Predicated region
      $region129: #{deepspectra_forward.2} parent=127 // pred_check
        %p3032 = pneg %p628
      $region130: #{deepspectra_forward.2} parent=127 // pred_check_branch
        %3034 = sbr.rel (%p3032) target = $region132
      $region131: #{deepspectra_forward.2} parent=127 // pred_region
        _
      $region132: #{deepspectra_forward.2} parent=127 // pred_fallthru
        _
    $region128: #{deepspectra_forward.2} parent=5 // pred_fallthru
      _
    %p3035 = scmp.le.s32.totalorder 2, %s33
    // Predicated region
    $region133: #{deepspectra_forward.2} parent=5 // pred_check
      %p3036 = pneg %p3035
    $region134: #{deepspectra_forward.2} parent=5 // pred_check_branch
      %3038 = sbr.rel (%p3036) target = $region136
    $region135: #{deepspectra_forward.2} parent=5 // pred_region
      %s3039 = ssub.s32 %s33, 2
      // Predicated region
      $region137: #{deepspectra_forward.2} parent=135 // pred_check
        %p3040 = pneg %p634
      $region138: #{deepspectra_forward.2} parent=135 // pred_check_branch
        %3042 = sbr.rel (%p3040) target = $region140
      $region139: #{deepspectra_forward.2} parent=135 // pred_region
        %p3043 = scmp.lt.s32.totalorder %s39, 1
        %s3044 = scalar_select %p3043, %s39, 1
        %s3045 = smul.addr %s3044, 2
        %s3046 = smul.addr %s3045, 8
        %s3047 = scalar_lea.vmem %s27, %s3046
      $region140: #{deepspectra_forward.2} parent=135 // pred_fallthru
        _
    $region136: #{deepspectra_forward.2} parent=5 // pred_fallthru
      _
  $region6: #{deepspectra_forward.2} parent=0 // loop_footer
    %s37 = sadd.s32 1, %s33
  $region7: #{deepspectra_forward.2} parent=0 // loop_footer_branch
    %32 = sbr.rel target = $region3
  $region8: #{deepspectra_forward.2} parent=0 // loop_exit
    _

</llo_original>
